<compile_context>
chip_gen: v5e
topology: v5e:2x2
jax: 0.10.0
libtpu: 0.0.40
codegen_flags: <defaults>
</compile_context>

<pallas_src>
import jax
import jax.numpy as jnp
from jax import lax
from jax.experimental import pallas as pl
from jax.experimental.pallas import tpu as pltpu


def _round_up(x, m):
    return ((x + m - 1) // m) * m


def basic_block_kernel(xpad_ref, w1_ref, w2_ref, s1_ref, b1_ref, s2_ref, b2_ref,
                       wmask_ref, out_ref):
    # xpad_ref : (H+2, Wpp, Cp) bf16  zero-padded input (1px top/bottom/left,
    #                                 right-padded so Wpp % 8 == 0, Wpp >= W+2)
    # w1_ref   : (3, 3*Cp, Pp)  bf16  conv1 weights, layout [dx, dy*Cp + c, p]
    # w2_ref   : (3, 3*Pp, Pp)  bf16  conv2 weights, layout [dx, dy*Pp + c, p]
    # s*/b*    : (1, Pp)        f32   folded BatchNorm scale / bias
    # wmask_ref: (H*Wpp, 1)     f32   1.0 for valid columns (j < W), else 0.0
    # out_ref  : (H, W, Pp)     bf16  lane-dense output block
    Hp, Wpp, Cp = xpad_ref.shape
    H, W, Pp = out_ref.shape
    nf = H * Wpp

    def shifted(v, delta):
        # w[i] = v[(i + delta) mod nf]; wrap-around only lands on don't-care /
        # structurally-zero positions (see boundary analysis in the wrapper).
        if delta == 0:
            return v
        return pltpu.roll(v, shift=(nf - delta) % nf, axis=0)

    def conv3x3(src0, src1, src2, w_ref, first_dx):
        # dy folded into the contraction dim via a lane-aligned concat; dx
        # handled by XLU sublane rolls of the f32 results — no misaligned
        # slices, no W-axis im2col, result written once.
        patch = jnp.concatenate([src0, src1, src2], axis=-1)
        patch = patch.reshape(nf, patch.shape[-1])
        total = None
        for t in range(3):
            r = jnp.dot(patch, w_ref[t], preferred_element_type=jnp.float32)
            r = shifted(r, first_dx + t)
            total = r if total is None else total + r
        return total  # (nf, Pp) f32, valid at columns 0..W-1

    # ---- conv1 (input has a real left-pad column -> dx offsets {0,1,2}) ----
    t1 = conv3x3(xpad_ref[0:H, :, :], xpad_ref[1:H + 1, :, :],
                 xpad_ref[2:H + 2, :, :], w1_ref, 0)

    # ---- bn1 + relu; zero padded columns (j >= W) so they serve as conv2's
    #      right halo and the roll-wrap zero column; cast to bf16 for the MXU.
    y1 = jnp.maximum(t1 * s1_ref[...] + b1_ref[...], 0.0) * wmask_ref[...]
    y1 = y1.reshape(H, Wpp, Pp).astype(jnp.bfloat16)

    # padded intermediate via cheap leading-dim concat (zero top/bottom rows);
    # no left halo column -> interior data stays offset-0 aligned.
    zrow = jnp.zeros((1, Wpp, Pp), jnp.bfloat16)
    mid = jnp.concatenate([zrow, y1, zrow], axis=0)  # (H+2, Wpp, Pp)

    # ---- conv2 (no left-pad column -> dx offsets {-1,0,1}; the -1 roll wraps
    #      into the all-zero column Wpp-1, which is the correct padding value).
    t2 = conv3x3(mid[0:H], mid[1:H + 1], mid[2:H + 2], w2_ref, -1)

    # ---- bn2 + residual + relu (identity rebuilt from the resident input
    #      block: aligned load + one roll, bounded live range).
    ident = shifted(xpad_ref[1:H + 1, :, :].reshape(nf, Cp).astype(jnp.float32), 1)
    out = jnp.maximum(t2 * s2_ref[...] + b2_ref[...] + ident, 0.0)
    out_ref[...] = out.reshape(H, Wpp, Pp)[:, 0:W, :].astype(out_ref.dtype)


def basic_block_pallas(x_nhwc, w1_hwio, w2_hwio, s1, b1, s2, b2, *, lane=128):
    """Inference-mode ResNet BasicBlock (stride=1, downsample=None).

    Returns NHWC bf16 output with channels kept padded to a multiple of 128;
    the padded channels are exactly zero (safe to chain blocks, strip at tail).
    """
    N, H, W, C = x_nhwc.shape
    P = w1_hwio.shape[-1]
    assert C == P, "residual add requires inplanes == planes (downsample=None)"
    assert w2_hwio.shape[-2] == P and w2_hwio.shape[-1] == P

    Cp = _round_up(C, lane)
    Pp = Cp
    Wpp = _round_up(W + 2, 8)

    # Standard 1-px zero halo + extra right columns so Wpp % 8 == 0.
    xpad = jnp.pad(x_nhwc, ((0, 0), (1, 1), (1, Wpp - W - 1), (0, Cp - C))
                   ).astype(jnp.bfloat16)

    def fold_w(w, cin):
        wp = jnp.pad(w, ((0, 0), (0, 0), (0, Cp - cin), (0, Pp - P)))
        # [dy, dx, c, p] -> [dx, dy*Cp + c, p]  (dy folded into contraction dim)
        return jnp.transpose(wp, (1, 0, 2, 3)).reshape(3, 3 * Cp, Pp
                                                       ).astype(jnp.bfloat16)

    w1f = fold_w(w1_hwio, C)
    w2f = fold_w(w2_hwio, P)

    def pad_vec(v):
        return jnp.pad(v.astype(jnp.float32), (0, Pp - P)).reshape(1, Pp)

    s1p, b1p, s2p, b2p = pad_vec(s1), pad_vec(b1), pad_vec(s2), pad_vec(b2)

    wmask = jnp.broadcast_to(
        (jnp.arange(Wpp) < W).astype(jnp.float32)[None, :], (H, Wpp)
    ).reshape(H * Wpp, 1)

    # Scoped-VMEM budget derived from the block footprint (>= compiler default,
    # capped below v7x's 64 MiB physical VMEM).
    bf2, f4 = 2, 4
    est = (2 * (H + 2) * Wpp * Cp * bf2        # double-buffered input block
           + 2 * H * W * Pp * bf2              # double-buffered output block
           + 2 * 2 * 3 * 3 * Cp * Pp * bf2     # conv weights
           + 2 * H * Wpp * 3 * Cp * bf2        # dy-folded patches
           + (H + 2) * Wpp * Pp * bf2          # intermediate activation
           + 8 * H * Wpp * Pp * f4)            # f32 matmul results / temporaries
    vmem_limit = int(min(max(32 * 1024 * 1024, 2 * est), 64 * 1024 * 1024))

    out = pl.pallas_call(
        basic_block_kernel,
        out_shape=jax.ShapeDtypeStruct((N, H, W, Pp), jnp.bfloat16),
        grid_spec=pltpu.PrefetchScalarGridSpec(
            num_scalar_prefetch=0,
            grid=(N,),
            in_specs=[
                pl.BlockSpec((None, H + 2, Wpp, Cp), lambda n: (n, 0, 0, 0)),
                pl.BlockSpec((3, 3 * Cp, Pp), lambda n: (0, 0, 0)),
                pl.BlockSpec((3, 3 * Pp, Pp), lambda n: (0, 0, 0)),
                pl.BlockSpec((1, Pp), lambda n: (0, 0)),
                pl.BlockSpec((1, Pp), lambda n: (0, 0)),
                pl.BlockSpec((1, Pp), lambda n: (0, 0)),
                pl.BlockSpec((1, Pp), lambda n: (0, 0)),
                pl.BlockSpec((H * Wpp, 1), lambda n: (0, 0)),
            ],
            out_specs=pl.BlockSpec((None, H, W, Pp), lambda n: (n, 0, 0, 0)),
        ),
        compiler_params=pltpu.CompilerParams(
            dimension_semantics=("parallel",),
            vmem_limit_bytes=vmem_limit),
    )(xpad, w1f, w2f, s1p, b1p, s2p, b2p, wmask)
    return out


def _fold_bn(gamma, beta, running_mean, running_var, eps=1e-5):
    scale = gamma / jnp.sqrt(running_var + eps)
    bias = beta - running_mean * scale
    return scale, bias


def _reference_jax(x_nhwc, w1_hwio, w2_hwio, s1, b1, s2, b2):
    """Reference mirroring the kernel numerics: bf16 MXU inputs, f32 accum."""
    dn = ('NHWC', 'HWIO', 'NHWC')
    xb = x_nhwc.astype(jnp.bfloat16)
    out = lax.conv_general_dilated(xb, w1_hwio.astype(jnp.bfloat16), (1, 1),
                                   'SAME', dimension_numbers=dn,
                                   preferred_element_type=jnp.float32)
    out = jnp.maximum(out * s1 + b1, 0.0).astype(jnp.bfloat16)
    out = lax.conv_general_dilated(out, w2_hwio.astype(jnp.bfloat16), (1, 1),
                                   'SAME', dimension_numbers=dn,
                                   preferred_element_type=jnp.float32)
    out = out * s2 + b2 + xb.astype(jnp.float32)
    return jnp.maximum(out, 0.0)


if __name__ == "__main__":
    key = jax.random.PRNGKey(0)
    k_x, k_w1, k_w2 = jax.random.split(key, 3)

    N, C, H, W = 2, 4, 16, 16     # inplanes = planes = 4, stride = 1
    P = C

    # PyTorch-convention input (NCHW) and conv weights (OIHW), deterministic.
    x_nchw = jax.random.normal(k_x, (N, C, H, W), jnp.float32)
    w1_oihw = jax.random.normal(k_w1, (P, C, 3, 3), jnp.float32) * 0.1
    w2_oihw = jax.random.normal(k_w2, (P, P, 3, 3), jnp.float32) * 0.1

    # BatchNorm params (deterministic, non-trivial); running stats at init.
    gamma1 = 1.0 + 0.1 * jnp.arange(P, dtype=jnp.float32)
    beta1 = 0.05 * jnp.arange(P, dtype=jnp.float32)
    gamma2 = 1.0 - 0.05 * jnp.arange(P, dtype=jnp.float32)
    beta2 = -0.02 * jnp.arange(P, dtype=jnp.float32)
    rmean = jnp.zeros((P,), jnp.float32)
    rvar = jnp.ones((P,), jnp.float32)

    s1, b1 = _fold_bn(gamma1, beta1, rmean, rvar)
    s2, b2 = _fold_bn(gamma2, beta2, rmean, rvar)

    # Layout glue: NCHW -> NHWC, OIHW -> HWIO.
    x_nhwc = jnp.transpose(x_nchw, (0, 2, 3, 1))
    w1_hwio = jnp.transpose(w1_oihw, (2, 3, 1, 0))
    w2_hwio = jnp.transpose(w2_oihw, (2, 3, 1, 0))

    out = basic_block_pallas(x_nhwc, w1_hwio, w2_hwio, s1, b1, s2, b2)
    out = jax.block_until_ready(out)

    ref = _reference_jax(x_nhwc, w1_hwio, w2_hwio,
                         s1.reshape(1, 1, 1, P), b1.reshape(1, 1, 1, P),
                         s2.reshape(1, 1, 1, P), b2.reshape(1, 1, 1, P))

    Pp = out.shape[-1]
    assert out.shape == (N, H, W, Pp)
    # Padded channels must stay (essentially) zero — invariant for chaining.
    assert float(jnp.max(jnp.abs(out[..., P:].astype(jnp.float32)))) < 1e-6
    got = out[..., :P].astype(jnp.float32)
    assert jnp.allclose(got, ref, atol=5e-2, rtol=5e-2), "mismatch vs JAX reference"

    print("KERNEL_OK")
</pallas_src>

<mosaic_0001>
module attributes {stable_mosaic.version = 11 : i64} {
  func.func @basic_block_kernel(%arg0: i32, %arg1: memref<1x18x24x128xbf16, #tpu.memory_space<vmem>>, %arg2: memref<3x384x128xbf16, #tpu.memory_space<vmem>>, %arg3: memref<3x384x128xbf16, #tpu.memory_space<vmem>>, %arg4: memref<1x128xf32, #tpu.memory_space<vmem>>, %arg5: memref<1x128xf32, #tpu.memory_space<vmem>>, %arg6: memref<1x128xf32, #tpu.memory_space<vmem>>, %arg7: memref<1x128xf32, #tpu.memory_space<vmem>>, %arg8: memref<384x1xf32, #tpu.memory_space<vmem>>, %arg9: memref<1x16x16x128xbf16, #tpu.memory_space<vmem>>) attributes {dimension_semantics = [#tpu.dimension_semantics<parallel>], iteration_bounds = array<i64: 2>, scalar_prefetch = 0 : i64, scratch_operands = 0 : i64, tpu.core_type = #tpu.core_type<tc>, window_params = [{transform_indices = @transform_0, window_bounds = array<i64: 1, 18, 24, 128>}, {pipeline_mode = #tpu.pipeline_mode<synchronous>, transform_indices = @transform_1, window_bounds = array<i64: 3, 384, 128>}, {pipeline_mode = #tpu.pipeline_mode<synchronous>, transform_indices = @transform_2, window_bounds = array<i64: 3, 384, 128>}, {pipeline_mode = #tpu.pipeline_mode<synchronous>, transform_indices = @transform_3, window_bounds = array<i64: 1, 128>}, {pipeline_mode = #tpu.pipeline_mode<synchronous>, transform_indices = @transform_4, window_bounds = array<i64: 1, 128>}, {pipeline_mode = #tpu.pipeline_mode<synchronous>, transform_indices = @transform_5, window_bounds = array<i64: 1, 128>}, {pipeline_mode = #tpu.pipeline_mode<synchronous>, transform_indices = @transform_6, window_bounds = array<i64: 1, 128>}, {pipeline_mode = #tpu.pipeline_mode<synchronous>, transform_indices = @transform_7, window_bounds = array<i64: 384, 1>}, {transform_indices = @transform_8, window_bounds = array<i64: 1, 16, 16, 128>}]} {
    %c0 = arith.constant 0 : index
    %c0_0 = arith.constant 0 : index
    %c0_1 = arith.constant 0 : index
    %c0_2 = arith.constant 0 : index
    %0 = vector.load %arg1[%c0, %c0_0, %c0_1, %c0_2] : memref<1x18x24x128xbf16, #tpu.memory_space<vmem>>, vector<1x16x24x128xbf16>
    %1 = vector.shape_cast %0 : vector<1x16x24x128xbf16> to vector<16x24x128xbf16>
    %c0_3 = arith.constant 0 : index
    %c1 = arith.constant 1 : index
    %c0_4 = arith.constant 0 : index
    %c0_5 = arith.constant 0 : index
    %2 = vector.load %arg1[%c0_3, %c1, %c0_4, %c0_5] : memref<1x18x24x128xbf16, #tpu.memory_space<vmem>>, vector<1x16x24x128xbf16>
    %3 = vector.shape_cast %2 : vector<1x16x24x128xbf16> to vector<16x24x128xbf16>
    %c0_6 = arith.constant 0 : index
    %c2 = arith.constant 2 : index
    %c0_7 = arith.constant 0 : index
    %c0_8 = arith.constant 0 : index
    %4 = vector.load %arg1[%c0_6, %c2, %c0_7, %c0_8] : memref<1x18x24x128xbf16, #tpu.memory_space<vmem>>, vector<1x16x24x128xbf16>
    %5 = vector.shape_cast %4 : vector<1x16x24x128xbf16> to vector<16x24x128xbf16>
    %6 = tpu.concatenate %1, %3, %5 in 2 : vector<16x24x128xbf16>, vector<16x24x128xbf16>, vector<16x24x128xbf16> -> vector<16x24x384xbf16>
    %7 = vector.shape_cast %6 : vector<16x24x384xbf16> to vector<384x384xbf16>
    %c0_9 = arith.constant 0 : index
    %c0_10 = arith.constant 0 : index
    %c0_11 = arith.constant 0 : index
    %8 = vector.load %arg2[%c0_9, %c0_10, %c0_11] : memref<3x384x128xbf16, #tpu.memory_space<vmem>>, vector<1x384x128xbf16>
    %9 = vector.shape_cast %8 : vector<1x384x128xbf16> to vector<384x128xbf16>
    %cst = arith.constant dense<0.000000e+00> : vector<384x128xf32>
    %10 = tpu.matmul %7, %9, %cst {dimension_numbers = #tpu.dot_dimension_numbers<[1], [0], [0], [1], [0, 0, 1, 1], [], []>} : vector<384x384xbf16>, vector<384x128xbf16>, vector<384x128xf32> -> vector<384x128xf32>
    %c1_12 = arith.constant 1 : index
    %c0_13 = arith.constant 0 : index
    %c0_14 = arith.constant 0 : index
    %11 = vector.load %arg2[%c1_12, %c0_13, %c0_14] : memref<3x384x128xbf16, #tpu.memory_space<vmem>>, vector<1x384x128xbf16>
    %12 = vector.shape_cast %11 : vector<1x384x128xbf16> to vector<384x128xbf16>
    %cst_15 = arith.constant dense<0.000000e+00> : vector<384x128xf32>
    %13 = tpu.matmul %7, %12, %cst_15 {dimension_numbers = #tpu.dot_dimension_numbers<[1], [0], [0], [1], [0, 0, 1, 1], [], []>} : vector<384x384xbf16>, vector<384x128xbf16>, vector<384x128xf32> -> vector<384x128xf32>
    %c383_i32 = arith.constant 383 : i32
    %14 = tpu.dynamic_rotate %13 by %c383_i32 dim 0 : vector<384x128xf32>, i32 -> vector<384x128xf32>
    %15 = arith.addf %10, %14 : vector<384x128xf32>
    %c2_16 = arith.constant 2 : index
    %c0_17 = arith.constant 0 : index
    %c0_18 = arith.constant 0 : index
    %16 = vector.load %arg2[%c2_16, %c0_17, %c0_18] : memref<3x384x128xbf16, #tpu.memory_space<vmem>>, vector<1x384x128xbf16>
    %17 = vector.shape_cast %16 : vector<1x384x128xbf16> to vector<384x128xbf16>
    %cst_19 = arith.constant dense<0.000000e+00> : vector<384x128xf32>
    %18 = tpu.matmul %7, %17, %cst_19 {dimension_numbers = #tpu.dot_dimension_numbers<[1], [0], [0], [1], [0, 0, 1, 1], [], []>} : vector<384x384xbf16>, vector<384x128xbf16>, vector<384x128xf32> -> vector<384x128xf32>
    %c382_i32 = arith.constant 382 : i32
    %19 = tpu.dynamic_rotate %18 by %c382_i32 dim 0 : vector<384x128xf32>, i32 -> vector<384x128xf32>
    %20 = arith.addf %15, %19 : vector<384x128xf32>
    %c0_20 = arith.constant 0 : index
    %c0_21 = arith.constant 0 : index
    %21 = vector.load %arg4[%c0_20, %c0_21] : memref<1x128xf32, #tpu.memory_space<vmem>>, vector<1x128xf32>
    %22 = vector.broadcast %21 : vector<1x128xf32> to vector<384x128xf32>
    %23 = arith.mulf %20, %22 : vector<384x128xf32>
    %c0_22 = arith.constant 0 : index
    %c0_23 = arith.constant 0 : index
    %24 = vector.load %arg5[%c0_22, %c0_23] : memref<1x128xf32, #tpu.memory_space<vmem>>, vector<1x128xf32>
    %25 = vector.broadcast %24 : vector<1x128xf32> to vector<384x128xf32>
    %26 = arith.addf %23, %25 : vector<384x128xf32>
    %cst_24 = arith.constant 0.000000e+00 : f32
    %27 = vector.broadcast %cst_24 : f32 to vector<384x128xf32>
    %28 = arith.maximumf %26, %27 : vector<384x128xf32>
    %c0_25 = arith.constant 0 : index
    %c0_26 = arith.constant 0 : index
    %29 = vector.load %arg8[%c0_25, %c0_26] : memref<384x1xf32, #tpu.memory_space<vmem>>, vector<384x1xf32>
    %30 = vector.broadcast %29 : vector<384x1xf32> to vector<384x128xf32>
    %31 = arith.mulf %28, %30 : vector<384x128xf32>
    %32 = vector.shape_cast %31 : vector<384x128xf32> to vector<16x24x128xf32>
    %33 = arith.truncf %32 : vector<16x24x128xf32> to vector<16x24x128xbf16>
    %cst_27 = arith.constant 0.000000e+00 : bf16
    %34 = vector.broadcast %cst_27 : bf16 to vector<1x24x128xbf16>
    %35 = tpu.concatenate %34, %33, %34 in 0 : vector<1x24x128xbf16>, vector<16x24x128xbf16>, vector<1x24x128xbf16> -> vector<18x24x128xbf16>
    %36 = vector.extract_strided_slice %35 {offsets = [0, 0, 0], sizes = [16, 24, 128], strides = [1, 1, 1]} : vector<18x24x128xbf16> to vector<16x24x128xbf16>
    %37 = vector.extract_strided_slice %35 {offsets = [1, 0, 0], sizes = [16, 24, 128], strides = [1, 1, 1]} : vector<18x24x128xbf16> to vector<16x24x128xbf16>
    %38 = vector.extract_strided_slice %35 {offsets = [2, 0, 0], sizes = [16, 24, 128], strides = [1, 1, 1]} : vector<18x24x128xbf16> to vector<16x24x128xbf16>
    %39 = tpu.concatenate %36, %37, %38 in 2 : vector<16x24x128xbf16>, vector<16x24x128xbf16>, vector<16x24x128xbf16> -> vector<16x24x384xbf16>
    %40 = vector.shape_cast %39 : vector<16x24x384xbf16> to vector<384x384xbf16>
    %c0_28 = arith.constant 0 : index
    %c0_29 = arith.constant 0 : index
    %c0_30 = arith.constant 0 : index
    %41 = vector.load %arg3[%c0_28, %c0_29, %c0_30] : memref<3x384x128xbf16, #tpu.memory_space<vmem>>, vector<1x384x128xbf16>
    %42 = vector.shape_cast %41 : vector<1x384x128xbf16> to vector<384x128xbf16>
    %cst_31 = arith.constant dense<0.000000e+00> : vector<384x128xf32>
    %43 = tpu.matmul %40, %42, %cst_31 {dimension_numbers = #tpu.dot_dimension_numbers<[1], [0], [0], [1], [0, 0, 1, 1], [], []>} : vector<384x384xbf16>, vector<384x128xbf16>, vector<384x128xf32> -> vector<384x128xf32>
    %c1_i32 = arith.constant 1 : i32
    %44 = tpu.dynamic_rotate %43 by %c1_i32 dim 0 : vector<384x128xf32>, i32 -> vector<384x128xf32>
    %c1_32 = arith.constant 1 : index
    %c0_33 = arith.constant 0 : index
    %c0_34 = arith.constant 0 : index
    %45 = vector.load %arg3[%c1_32, %c0_33, %c0_34] : memref<3x384x128xbf16, #tpu.memory_space<vmem>>, vector<1x384x128xbf16>
    %46 = vector.shape_cast %45 : vector<1x384x128xbf16> to vector<384x128xbf16>
    %cst_35 = arith.constant dense<0.000000e+00> : vector<384x128xf32>
    %47 = tpu.matmul %40, %46, %cst_35 {dimension_numbers = #tpu.dot_dimension_numbers<[1], [0], [0], [1], [0, 0, 1, 1], [], []>} : vector<384x384xbf16>, vector<384x128xbf16>, vector<384x128xf32> -> vector<384x128xf32>
    %48 = arith.addf %44, %47 : vector<384x128xf32>
    %c2_36 = arith.constant 2 : index
    %c0_37 = arith.constant 0 : index
    %c0_38 = arith.constant 0 : index
    %49 = vector.load %arg3[%c2_36, %c0_37, %c0_38] : memref<3x384x128xbf16, #tpu.memory_space<vmem>>, vector<1x384x128xbf16>
    %50 = vector.shape_cast %49 : vector<1x384x128xbf16> to vector<384x128xbf16>
    %cst_39 = arith.constant dense<0.000000e+00> : vector<384x128xf32>
    %51 = tpu.matmul %40, %50, %cst_39 {dimension_numbers = #tpu.dot_dimension_numbers<[1], [0], [0], [1], [0, 0, 1, 1], [], []>} : vector<384x384xbf16>, vector<384x128xbf16>, vector<384x128xf32> -> vector<384x128xf32>
    %c383_i32_40 = arith.constant 383 : i32
    %52 = tpu.dynamic_rotate %51 by %c383_i32_40 dim 0 : vector<384x128xf32>, i32 -> vector<384x128xf32>
    %53 = arith.addf %48, %52 : vector<384x128xf32>
    %c0_41 = arith.constant 0 : index
    %c1_42 = arith.constant 1 : index
    %c0_43 = arith.constant 0 : index
    %c0_44 = arith.constant 0 : index
    %54 = vector.load %arg1[%c0_41, %c1_42, %c0_43, %c0_44] : memref<1x18x24x128xbf16, #tpu.memory_space<vmem>>, vector<1x16x24x128xbf16>
    %55 = vector.shape_cast %54 : vector<1x16x24x128xbf16> to vector<16x24x128xbf16>
    %56 = vector.shape_cast %55 : vector<16x24x128xbf16> to vector<384x128xbf16>
    %57 = arith.extf %56 : vector<384x128xbf16> to vector<384x128xf32>
    %c383_i32_45 = arith.constant 383 : i32
    %58 = tpu.dynamic_rotate %57 by %c383_i32_45 dim 0 : vector<384x128xf32>, i32 -> vector<384x128xf32>
    %c0_46 = arith.constant 0 : index
    %c0_47 = arith.constant 0 : index
    %59 = vector.load %arg6[%c0_46, %c0_47] : memref<1x128xf32, #tpu.memory_space<vmem>>, vector<1x128xf32>
    %60 = vector.broadcast %59 : vector<1x128xf32> to vector<384x128xf32>
    %61 = arith.mulf %53, %60 : vector<384x128xf32>
    %c0_48 = arith.constant 0 : index
    %c0_49 = arith.constant 0 : index
    %62 = vector.load %arg7[%c0_48, %c0_49] : memref<1x128xf32, #tpu.memory_space<vmem>>, vector<1x128xf32>
    %63 = vector.broadcast %62 : vector<1x128xf32> to vector<384x128xf32>
    %64 = arith.addf %61, %63 : vector<384x128xf32>
    %65 = arith.addf %64, %58 : vector<384x128xf32>
    %cst_50 = arith.constant 0.000000e+00 : f32
    %66 = vector.broadcast %cst_50 : f32 to vector<384x128xf32>
    %67 = arith.maximumf %65, %66 : vector<384x128xf32>
    %68 = vector.shape_cast %67 : vector<384x128xf32> to vector<16x24x128xf32>
    %69 = vector.extract_strided_slice %68 {offsets = [0, 0, 0], sizes = [16, 16, 128], strides = [1, 1, 1]} : vector<16x24x128xf32> to vector<16x16x128xf32>
    %70 = arith.truncf %69 : vector<16x16x128xf32> to vector<16x16x128xbf16>
    %c0_51 = arith.constant 0 : index
    %c0_52 = arith.constant 0 : index
    %c0_53 = arith.constant 0 : index
    %c0_54 = arith.constant 0 : index
    %71 = vector.load %arg9[%c0_51, %c0_52, %c0_53, %c0_54] : memref<1x16x16x128xbf16, #tpu.memory_space<vmem>>, vector<1x16x16x128xbf16>
    %72 = vector.shape_cast %71 : vector<1x16x16x128xbf16> to vector<16x16x128xbf16>
    %73 = vector.shape_cast %70 : vector<16x16x128xbf16> to vector<1x16x16x128xbf16>
    tpu.vector_store %arg9[%c0_51, %c0_52, %c0_53, %c0_54], %73 {strides = array<i32>} : memref<1x16x16x128xbf16, #tpu.memory_space<vmem>>, vector<1x16x16x128xbf16>,
    return
  }
  func.func @transform_0(%arg0: i32) -> (i32, i32, i32, i32) {
    %c0_i32 = arith.constant 0 : i32
    %c0_i32_0 = arith.constant 0 : i32
    %c0_i32_1 = arith.constant 0 : i32
    %c0_i32_2 = arith.constant 0 : i32
    return %arg0, %c0_i32, %c0_i32_0, %c0_i32_1 : i32, i32, i32, i32
  }
  func.func @transform_1(%arg0: i32) -> (i32, i32, i32) {
    %c0_i32 = arith.constant 0 : i32
    %c0_i32_0 = arith.constant 0 : i32
    %c0_i32_1 = arith.constant 0 : i32
    %c0_i32_2 = arith.constant 0 : i32
    return %c0_i32, %c0_i32_0, %c0_i32_1 : i32, i32, i32
  }
  func.func @transform_2(%arg0: i32) -> (i32, i32, i32) {
    %c0_i32 = arith.constant 0 : i32
    %c0_i32_0 = arith.constant 0 : i32
    %c0_i32_1 = arith.constant 0 : i32
    %c0_i32_2 = arith.constant 0 : i32
    return %c0_i32, %c0_i32_0, %c0_i32_1 : i32, i32, i32
  }
  func.func @transform_3(%arg0: i32) -> (i32, i32) {
    %c0_i32 = arith.constant 0 : i32
    %c0_i32_0 = arith.constant 0 : i32
    %c0_i32_1 = arith.constant 0 : i32
    return %c0_i32, %c0_i32_0 : i32, i32
  }
  func.func @transform_4(%arg0: i32) -> (i32, i32) {
    %c0_i32 = arith.constant 0 : i32
    %c0_i32_0 = arith.constant 0 : i32
    %c0_i32_1 = arith.constant 0 : i32
    return %c0_i32, %c0_i32_0 : i32, i32
  }
  func.func @transform_5(%arg0: i32) -> (i32, i32) {
    %c0_i32 = arith.constant 0 : i32
    %c0_i32_0 = arith.constant 0 : i32
    %c0_i32_1 = arith.constant 0 : i32
    return %c0_i32, %c0_i32_0 : i32, i32
  }
  func.func @transform_6(%arg0: i32) -> (i32, i32) {
    %c0_i32 = arith.constant 0 : i32
    %c0_i32_0 = arith.constant 0 : i32
    %c0_i32_1 = arith.constant 0 : i32
    return %c0_i32, %c0_i32_0 : i32, i32
  }
  func.func @transform_7(%arg0: i32) -> (i32, i32) {
    %c0_i32 = arith.constant 0 : i32
    %c0_i32_0 = arith.constant 0 : i32
    %c0_i32_1 = arith.constant 0 : i32
    return %c0_i32, %c0_i32_0 : i32, i32
  }
  func.func @transform_8(%arg0: i32) -> (i32, i32, i32, i32) {
    %c0_i32 = arith.constant 0 : i32
    %c0_i32_0 = arith.constant 0 : i32
    %c0_i32_1 = arith.constant 0 : i32
    %c0_i32_2 = arith.constant 0 : i32
    return %arg0, %c0_i32, %c0_i32_0, %c0_i32_1 : i32, i32, i32, i32
  }
}

</mosaic_0001>

<llo_original>
// kernel: tpu_custom_call.1
$region0: #{tpu_custom_call.1}
  #allocation0 [shape = 'u32[]', space=smem, size = 0x4, offset = 0x4, fixed_abs, tag = 'smem constant byte address 0x4 - core index']
  #allocation1 [shape = 'u32[72,128]{1,0:T(1,128)}', space=vmem, size = 0x9000, scoped, tag = 'internal scratch']
  %s0 = inlined_call_operand.hbm [shape: bf16[2,18,24,128], index: 0, kind: input, shape index: {}]
  %s1 = inlined_call_operand.hbm [shape: bf16[3,384,128], index: 1, kind: input, shape index: {}]
  %s2 = inlined_call_operand.hbm [shape: bf16[3,384,128], index: 2, kind: input, shape index: {}]
  %s3 = inlined_call_operand.vmem [shape: f32[1,128], index: 3, kind: input, shape index: {}]
  %s4 = inlined_call_operand.vmem [shape: f32[1,128], index: 4, kind: input, shape index: {}]
  %s5 = inlined_call_operand.vmem [shape: f32[1,128], index: 5, kind: input, shape index: {}]
  %s6 = inlined_call_operand.vmem [shape: f32[1,128], index: 6, kind: input, shape index: {}]
  %s7 = inlined_call_operand.vmem [shape: f32[384,1], index: 7, kind: input, shape index: {}]
  %s8 = inlined_call_operand.hbm [shape: bf16[2,16,16,128], index: 8, kind: output, shape index: {}]
  %s9 = sld [smem:[#allocation0]]
  $region77: #{tpu_custom_call.1} parent=0
    _
  %s11 = ssub.s32 1, %s9
  %s12 = scalar_select 0, %s11, %s9
  $region1: #{tpu_custom_call.1} parent=0
    #allocation2 [shape = 'u8[221184]{0}', space=vmem, size = 0x36000, scoped, tag = 'input window, operand 0']
    #allocation3 [shape = 's32[2]{0}', space=sflag, size = 0x8, scoped, tag = 'scoped memory for tpu_custom_call.1']
    #allocation4 [shape = 's32[2]{0}', space=sflag, size = 0x8, scoped, tag = 'scoped memory for tpu_custom_call.1']
    #allocation5 [shape = 'u8[294912]{0}', space=vmem, size = 0x48000, scoped, tag = 'input window, operand 1, single buffered']
    #allocation6 [shape = 's32[1]{0}', space=sflag, size = 0x4, scoped, tag = 'scoped memory for tpu_custom_call.1']
    #allocation7 [shape = 'u8[294912]{0}', space=vmem, size = 0x48000, scoped, tag = 'input window, operand 2, single buffered']
    #allocation8 [shape = 'u8[131072]{0}', space=vmem, size = 0x20000, scoped, tag = 'output window, operand 0']
    %13 = vsyncpa [#allocation3], 0
    %s14 = scalar_lea.sflag [#allocation3], 1
    %15 = vsyncpa %s14, 0
    %16 = vsyncpa [#allocation6], 0
    %17 = vsyncpa [#allocation4], 0
    %s18 = scalar_lea.sflag [#allocation4], 1
    %19 = vsyncpa %s18, 0
    loop: start=0, step=1, limit=4
    $region2: #{tpu_custom_call.1} parent=1 // loop_pre_header
      _
    $region3: #{tpu_custom_call.1} parent=1 // loop_header
      %s21 = sphi 0, %s25
      %p22 = scmp.ge.s32.totalorder %s21, 4
      %s31 = sphi 0, %s33
      %s34 = sphi 0, %s31
      %s35 = sphi 0, %s34
      %s51 = sphi 0, %s35
      %s55 = sphi 0, %s55
      %s57 = sphi 0, %s55
      %s58 = sphi 0, %s57
      %s72 = sphi 0, %s58
      %s76 = sphi 0, %s76
      %s78 = sphi 0, %s76
      %s79 = sphi 0, %s78
      %s93 = sphi 0, %s79
      %s97 = sphi 0, %s97
      %s99 = sphi 0, %s97
      %s100 = sphi 0, %s99
      %s114 = sphi 0, %s100
      %s118 = sphi 0, %s118
      %s120 = sphi 0, %s118
      %s121 = sphi 0, %s120
      %s135 = sphi 0, %s121
      %s139 = sphi 0, %s139
      %s141 = sphi 0, %s139
      %s142 = sphi 0, %s141
      %s156 = sphi 0, %s142
      %s160 = sphi 0, %s160
      %s162 = sphi 0, %s160
      %s163 = sphi 0, %s162
      %s177 = sphi 0, %s163
      %s181 = sphi 0, %s181
      %s183 = sphi 0, %s181
      %s184 = sphi 0, %s183
      %s198 = sphi 0, %s184
      %s204 = sphi 0, %s206
      %s207 = sphi 0, %s204
      %s208 = sphi 0, %s207
      %s224 = sphi 0, %s208
    $region4: #{tpu_custom_call.1} parent=1 // loop_header_branch
      %24 = sbr.rel (%p22) target = $region8
    $region5: #{tpu_custom_call.1} parent=1 // loop_body
      %s26 = ssub.s32 %s21, 1
      %s27 = ssub.s32 %s21, 2
      %s28 = sadd.s32 %s21, 1
      %s29 = ssub.s32 %s21, %s28
      %p30 = scmp.eq.s32.totalorder %s29, 0
      %s32 = sadd.s32 %s31, 1
      %s33 = scalar_select %p30, %s31, %s32
      %p36 = pneg %p30
      %p37 = scmp.eq.s32.totalorder %s21, 1
      %p38 = por %p36, %p37
      %p39 = scmp.ne.s32.totalorder %s31, %s34
      %p40 = scmp.eq.s32.totalorder %s21, 0
      %p41 = por %p39, %p40
      %p42 = scmp.ne.s32.totalorder %s31, %s34
      %p43 = scmp.eq.s32.totalorder %s26, 1
      %p44 = por %p42, %p43
      %p45 = scmp.ne.s32.totalorder %s34, %s35
      %p46 = scmp.eq.s32.totalorder %s26, 0
      %p47 = por %p45, %p46
      %p48 = scmp.ne.s32.totalorder %s34, %s35
      %p49 = scmp.eq.s32.totalorder %s27, 1
      %p50 = por %p48, %p49
      %p52 = scmp.ne.s32.totalorder %s35, %s51
      %p53 = scmp.eq.s32.totalorder %s27, 0
      %p54 = por %p52, %p53
      %s56 = sadd.s32 %s55, 1
      %p59 = scmp.eq.s32.totalorder %s21, 1
      %p60 = scmp.ne.s32.totalorder %s55, %s57
      %p61 = scmp.eq.s32.totalorder %s21, 0
      %p62 = por %p60, %p61
      %p63 = scmp.ne.s32.totalorder %s55, %s57
      %p64 = scmp.eq.s32.totalorder %s26, 1
      %p65 = por %p63, %p64
      %p66 = scmp.ne.s32.totalorder %s57, %s58
      %p67 = scmp.eq.s32.totalorder %s26, 0
      %p68 = por %p66, %p67
      %p69 = scmp.ne.s32.totalorder %s57, %s58
      %p70 = scmp.eq.s32.totalorder %s27, 1
      %p71 = por %p69, %p70
      %p73 = scmp.ne.s32.totalorder %s58, %s72
      %p74 = scmp.eq.s32.totalorder %s27, 0
      %p75 = por %p73, %p74
      %s77 = sadd.s32 %s76, 1
      %p80 = scmp.eq.s32.totalorder %s21, 1
      %p81 = scmp.ne.s32.totalorder %s76, %s78
      %p82 = scmp.eq.s32.totalorder %s21, 0
      %p83 = por %p81, %p82
      %p84 = scmp.ne.s32.totalorder %s76, %s78
      %p85 = scmp.eq.s32.totalorder %s26, 1
      %p86 = por %p84, %p85
      %p87 = scmp.ne.s32.totalorder %s78, %s79
      %p88 = scmp.eq.s32.totalorder %s26, 0
      %p89 = por %p87, %p88
      %p90 = scmp.ne.s32.totalorder %s78, %s79
      %p91 = scmp.eq.s32.totalorder %s27, 1
      %p92 = por %p90, %p91
      %p94 = scmp.ne.s32.totalorder %s79, %s93
      %p95 = scmp.eq.s32.totalorder %s27, 0
      %p96 = por %p94, %p95
      %s98 = sadd.s32 %s97, 1
      %p101 = scmp.eq.s32.totalorder %s21, 1
      %p102 = scmp.ne.s32.totalorder %s97, %s99
      %p103 = scmp.eq.s32.totalorder %s21, 0
      %p104 = por %p102, %p103
      %p105 = scmp.ne.s32.totalorder %s97, %s99
      %p106 = scmp.eq.s32.totalorder %s26, 1
      %p107 = por %p105, %p106
      %p108 = scmp.ne.s32.totalorder %s99, %s100
      %p109 = scmp.eq.s32.totalorder %s26, 0
      %p110 = por %p108, %p109
      %p111 = scmp.ne.s32.totalorder %s99, %s100
      %p112 = scmp.eq.s32.totalorder %s27, 1
      %p113 = por %p111, %p112
      %p115 = scmp.ne.s32.totalorder %s100, %s114
      %p116 = scmp.eq.s32.totalorder %s27, 0
      %p117 = por %p115, %p116
      %s119 = sadd.s32 %s118, 1
      %p122 = scmp.eq.s32.totalorder %s21, 1
      %p123 = scmp.ne.s32.totalorder %s118, %s120
      %p124 = scmp.eq.s32.totalorder %s21, 0
      %p125 = por %p123, %p124
      %p126 = scmp.ne.s32.totalorder %s118, %s120
      %p127 = scmp.eq.s32.totalorder %s26, 1
      %p128 = por %p126, %p127
      %p129 = scmp.ne.s32.totalorder %s120, %s121
      %p130 = scmp.eq.s32.totalorder %s26, 0
      %p131 = por %p129, %p130
      %p132 = scmp.ne.s32.totalorder %s120, %s121
      %p133 = scmp.eq.s32.totalorder %s27, 1
      %p134 = por %p132, %p133
      %p136 = scmp.ne.s32.totalorder %s121, %s135
      %p137 = scmp.eq.s32.totalorder %s27, 0
      %p138 = por %p136, %p137
      %s140 = sadd.s32 %s139, 1
      %p143 = scmp.eq.s32.totalorder %s21, 1
      %p144 = scmp.ne.s32.totalorder %s139, %s141
      %p145 = scmp.eq.s32.totalorder %s21, 0
      %p146 = por %p144, %p145
      %p147 = scmp.ne.s32.totalorder %s139, %s141
      %p148 = scmp.eq.s32.totalorder %s26, 1
      %p149 = por %p147, %p148
      %p150 = scmp.ne.s32.totalorder %s141, %s142
      %p151 = scmp.eq.s32.totalorder %s26, 0
      %p152 = por %p150, %p151
      %p153 = scmp.ne.s32.totalorder %s141, %s142
      %p154 = scmp.eq.s32.totalorder %s27, 1
      %p155 = por %p153, %p154
      %p157 = scmp.ne.s32.totalorder %s142, %s156
      %p158 = scmp.eq.s32.totalorder %s27, 0
      %p159 = por %p157, %p158
      %s161 = sadd.s32 %s160, 1
      %p164 = scmp.eq.s32.totalorder %s21, 1
      %p165 = scmp.ne.s32.totalorder %s160, %s162
      %p166 = scmp.eq.s32.totalorder %s21, 0
      %p167 = por %p165, %p166
      %p168 = scmp.ne.s32.totalorder %s160, %s162
      %p169 = scmp.eq.s32.totalorder %s26, 1
      %p170 = por %p168, %p169
      %p171 = scmp.ne.s32.totalorder %s162, %s163
      %p172 = scmp.eq.s32.totalorder %s26, 0
      %p173 = por %p171, %p172
      %p174 = scmp.ne.s32.totalorder %s162, %s163
      %p175 = scmp.eq.s32.totalorder %s27, 1
      %p176 = por %p174, %p175
      %p178 = scmp.ne.s32.totalorder %s163, %s177
      %p179 = scmp.eq.s32.totalorder %s27, 0
      %p180 = por %p178, %p179
      %s182 = sadd.s32 %s181, 1
      %p185 = scmp.eq.s32.totalorder %s21, 1
      %p186 = scmp.ne.s32.totalorder %s181, %s183
      %p187 = scmp.eq.s32.totalorder %s21, 0
      %p188 = por %p186, %p187
      %p189 = scmp.ne.s32.totalorder %s181, %s183
      %p190 = scmp.eq.s32.totalorder %s26, 1
      %p191 = por %p189, %p190
      %p192 = scmp.ne.s32.totalorder %s183, %s184
      %p193 = scmp.eq.s32.totalorder %s26, 0
      %p194 = por %p192, %p193
      %p195 = scmp.ne.s32.totalorder %s183, %s184
      %p196 = scmp.eq.s32.totalorder %s27, 1
      %p197 = por %p195, %p196
      %p199 = scmp.ne.s32.totalorder %s184, %s198
      %p200 = scmp.eq.s32.totalorder %s27, 0
      %p201 = por %p199, %p200
      %s202 = ssub.s32 %s21, %s28
      %p203 = scmp.eq.s32.totalorder %s202, 0
      %s205 = sadd.s32 %s204, 1
      %s206 = scalar_select %p203, %s204, %s205
      %p209 = pneg %p203
      %p210 = scmp.eq.s32.totalorder %s21, 1
      %p211 = por %p209, %p210
      %p212 = scmp.ne.s32.totalorder %s204, %s207
      %p213 = scmp.eq.s32.totalorder %s21, 0
      %p214 = por %p212, %p213
      %p215 = scmp.ne.s32.totalorder %s204, %s207
      %p216 = scmp.eq.s32.totalorder %s26, 1
      %p217 = por %p215, %p216
      %p218 = scmp.ne.s32.totalorder %s207, %s208
      %p219 = scmp.eq.s32.totalorder %s26, 0
      %p220 = por %p218, %p219
      %p221 = scmp.ne.s32.totalorder %s207, %s208
      %p222 = scmp.eq.s32.totalorder %s27, 1
      %p223 = por %p221, %p222
      %p225 = scmp.ne.s32.totalorder %s208, %s224
      %p226 = scmp.eq.s32.totalorder %s27, 0
      %p227 = por %p225, %p226
      %p228 = scmp.le.s32.totalorder 1, %s21
      %p229 = scmp.lt.s32.totalorder %s21, 3
      %p230 = pnand %p228, %p229
      %p231 = pneg %p230
      // Predicated region
      $region9: #{tpu_custom_call.1} parent=5 // pred_check
        _
      $region10: #{tpu_custom_call.1} parent=5 // pred_check_branch
        %233 = sbr.rel (%p230) target = $region12
      $region11: #{tpu_custom_call.1} parent=5 // pred_region
        %s234 = ssub.s32 %s21, 1
        // Predicated region
        $region13: #{tpu_custom_call.1} parent=11 // pred_check
          %p235 = pneg %p68
        $region14: #{tpu_custom_call.1} parent=11 // pred_check_branch
          %237 = sbr.rel (%p235) target = $region16
        $region15: #{tpu_custom_call.1} parent=11 // pred_region
          %239 = vsyncadd [#allocation6], 0
          %s240 = sshll.u32 %s1, 4
          %s241 = int_to_ptr.hbm [resolvable:$true] %s240
          %s242 = sshll.u32 [#allocation5], 4
          %s243 = int_to_ptr.vmem [resolvable:$true] %s242
          %248 = dma.hbm_to_vmem [thread:$0]  %s241, 9216, %s243, [#allocation6], 64, 64, 4
        $region16: #{tpu_custom_call.1} parent=11 // pred_fallthru
          _
        // Predicated region
        $region17: #{tpu_custom_call.1} parent=11 // pred_check
          %p249 = pneg %p89
        $region18: #{tpu_custom_call.1} parent=11 // pred_check_branch
          %251 = sbr.rel (%p249) target = $region20
        $region19: #{tpu_custom_call.1} parent=11 // pred_region
          %253 = vsyncadd [#allocation6], 0
          %s254 = sshll.u32 %s2, 4
          %s255 = int_to_ptr.hbm [resolvable:$true] %s254
          %s256 = sshll.u32 [#allocation7], 4
          %s257 = int_to_ptr.vmem [resolvable:$true] %s256
          %262 = dma.hbm_to_vmem [thread:$0]  %s255, 9216, %s257, [#allocation6], 64, 64, 4
        $region20: #{tpu_custom_call.1} parent=11 // pred_fallthru
          _
        // Predicated region
        $region21: #{tpu_custom_call.1} parent=11 // pred_check
          %p263 = pneg %p110
        $region22: #{tpu_custom_call.1} parent=11 // pred_check_branch
          %265 = sbr.rel (%p263) target = $region24
        $region23: #{tpu_custom_call.1} parent=11 // pred_region
          _
        $region24: #{tpu_custom_call.1} parent=11 // pred_fallthru
          _
        // Predicated region
        $region25: #{tpu_custom_call.1} parent=11 // pred_check
          %p266 = pneg %p131
        $region26: #{tpu_custom_call.1} parent=11 // pred_check_branch
          %268 = sbr.rel (%p266) target = $region28
        $region27: #{tpu_custom_call.1} parent=11 // pred_region
          _
        $region28: #{tpu_custom_call.1} parent=11 // pred_fallthru
          _
        // Predicated region
        $region29: #{tpu_custom_call.1} parent=11 // pred_check
          %p269 = pneg %p152
        $region30: #{tpu_custom_call.1} parent=11 // pred_check_branch
          %271 = sbr.rel (%p269) target = $region32
        $region31: #{tpu_custom_call.1} parent=11 // pred_region
          _
        $region32: #{tpu_custom_call.1} parent=11 // pred_fallthru
          _
        // Predicated region
        $region33: #{tpu_custom_call.1} parent=11 // pred_check
          %p272 = pneg %p173
        $region34: #{tpu_custom_call.1} parent=11 // pred_check_branch
          %274 = sbr.rel (%p272) target = $region36
        $region35: #{tpu_custom_call.1} parent=11 // pred_region
          _
        $region36: #{tpu_custom_call.1} parent=11 // pred_fallthru
          _
        // Predicated region
        $region37: #{tpu_custom_call.1} parent=11 // pred_check
          %p275 = pneg %p194
        $region38: #{tpu_custom_call.1} parent=11 // pred_check_branch
          %277 = sbr.rel (%p275) target = $region40
        $region39: #{tpu_custom_call.1} parent=11 // pred_region
          _
        $region40: #{tpu_custom_call.1} parent=11 // pred_fallthru
          _
      $region12: #{tpu_custom_call.1} parent=5 // pred_fallthru
        _
      %p278 = scmp.lt.s32.totalorder %s21, 2
      // Predicated region
      $region41: #{tpu_custom_call.1} parent=5 // pred_check
        %p279 = pneg %p278
      $region42: #{tpu_custom_call.1} parent=5 // pred_check_branch
        %281 = sbr.rel (%p279) target = $region44
      $region43: #{tpu_custom_call.1} parent=5 // pred_region
        // Predicated region
        $region45: #{tpu_custom_call.1} parent=43 // pred_check
          %p282 = pneg %p41
        $region46: #{tpu_custom_call.1} parent=43 // pred_check_branch
          %284 = sbr.rel (%p282) target = $region48
        $region47: #{tpu_custom_call.1} parent=43 // pred_region
          %s285 = sand.u32 %s31, 1
          %s286 = scalar_lea.sflag [#allocation3], %s285
          %s287 = sand.u32 %s31, 1
          %s288 = smul.addr %s287, 216
          %s289 = scalar_lea.vmem [#allocation2], %s288
          %291 = vsyncadd %s286, 0
          %s292 = smul.addr %s21, 54
          %s293 = smul.addr %s292, 4
          %s294 = scalar_lea.hbm %s0, %s293
          %s295 = sshll.u32 %s294, 4
          %s296 = int_to_ptr.hbm [resolvable:$true] %s295
          %s297 = sshll.u32 %s289, 4
          %s298 = int_to_ptr.vmem [resolvable:$true] %s297
          %303 = dma.hbm_to_vmem [thread:$0]  %s296, 3456, %s298, %s286, 64, 64, 4
        $region48: #{tpu_custom_call.1} parent=43 // pred_fallthru
          _
      $region44: #{tpu_custom_call.1} parent=5 // pred_fallthru
        _
      %p304 = scmp.le.s32.totalorder 1, %s21
      %p305 = scmp.lt.s32.totalorder %s21, 3
      %p306 = pnand %p304, %p305
      %p307 = pneg %p306
      // Predicated region
      $region49: #{tpu_custom_call.1} parent=5 // pred_check
        _
      $region50: #{tpu_custom_call.1} parent=5 // pred_check_branch
        %309 = sbr.rel (%p306) target = $region52
      $region51: #{tpu_custom_call.1} parent=5 // pred_region
        %s310 = ssub.s32 %s21, 1
        %s311 = sand.u32 %s34, 1
        %s312 = scalar_lea.sflag [#allocation3], %s311
        %s313 = sand.u32 %s34, 1
        %s314 = smul.addr %s313, 216
        %s315 = scalar_lea.vmem [#allocation2], %s314
        // Predicated region
        $region53: #{tpu_custom_call.1} parent=51 // pred_check
          %p316 = pneg %p47
        $region54: #{tpu_custom_call.1} parent=51 // pred_check_branch
          %318 = sbr.rel (%p316) target = $region56
        $region55: #{tpu_custom_call.1} parent=51 // pred_region
          %320 = dma.done %s312, 3456
        $region56: #{tpu_custom_call.1} parent=51 // pred_fallthru
          _
        // Predicated region
        $region57: #{tpu_custom_call.1} parent=51 // pred_check
          %p321 = pneg %p68
        $region58: #{tpu_custom_call.1} parent=51 // pred_check_branch
          %323 = sbr.rel (%p321) target = $region60
        $region59: #{tpu_custom_call.1} parent=51 // pred_region
          %325 = dma.done [#allocation6], 9216
        $region60: #{tpu_custom_call.1} parent=51 // pred_fallthru
          _
        // Predicated region
        $region61: #{tpu_custom_call.1} parent=51 // pred_check
          %p326 = pneg %p89
        $region62: #{tpu_custom_call.1} parent=51 // pred_check_branch
          %328 = sbr.rel (%p326) target = $region64
        $region63: #{tpu_custom_call.1} parent=51 // pred_region
          %330 = dma.done [#allocation6], 9216
        $region64: #{tpu_custom_call.1} parent=51 // pred_fallthru
          _
        %s331 = sand.u32 %s34, 1
        %s332 = scalar_lea.sflag [#allocation3], %s331
        %s333 = sand.u32 %s34, 1
        %s334 = smul.addr %s333, 216
        %s335 = scalar_lea.vmem [#allocation2], %s334
        %p336 = pneg %p47
        %p337 = pneg %p44
        %p338 = pneg %p68
        %p339 = pneg %p65
        %p340 = pneg %p89
        %p341 = pneg %p86
        %p342 = pneg %p110
        %p343 = pneg %p107
        %p344 = pneg %p131
        %p345 = pneg %p128
        %p346 = pneg %p152
        %p347 = pneg %p149
        %p348 = pneg %p173
        %p349 = pneg %p170
        %p350 = pneg %p194
        %p351 = pneg %p191
        %p352 = pneg %p220
        %p353 = pneg %p217
        %s354 = sand.u32 %s207, 1
        %s355 = scalar_lea.sflag [#allocation4], %s354
        %s356 = sand.u32 %s207, 1
        %s357 = smul.addr %s356, 128
        %s358 = scalar_lea.vmem [#allocation8], %s357
        %v360 = vld [vmem:[%s315] sm:$0xf]
        %v361 = vld [vmem:[%s315 + $0x4] sm:$0xf]
        %v362 = vld [vmem:[%s315 + $0x8] sm:$0xf]
        %v363 = vld [vmem:[%s315 + $0xc] sm:$0xf]
        %v364 = vld [vmem:[%s315 + $0x10] sm:$0xf]
        %v365 = vld [vmem:[%s315 + $0x14] sm:$0xf]
        %v366 = vld [vmem:[%s315 + $0x18] sm:$0xf]
        %v367 = vld [vmem:[%s315 + $0x1c] sm:$0xf]
        %v368 = vld [vmem:[%s315 + $0x20] sm:$0xf]
        %v369 = vld [vmem:[%s315 + $0x24] sm:$0xf]
        %v370 = vld [vmem:[%s315 + $0x28] sm:$0xf]
        %v371 = vld [vmem:[%s315 + $0x2c] sm:$0xf]
        %v372 = vld [vmem:[%s315 + $0x30] sm:$0xf]
        %v373 = vld [vmem:[%s315 + $0x34] sm:$0xf]
        %v374 = vld [vmem:[%s315 + $0x38] sm:$0xf]
        %v375 = vld [vmem:[%s315 + $0x3c] sm:$0xf]
        %v376 = vld [vmem:[%s315 + $0x40] sm:$0xf]
        %v377 = vld [vmem:[%s315 + $0x44] sm:$0xf]
        %v378 = vld [vmem:[%s315 + $0x48] sm:$0xf]
        %v379 = vld [vmem:[%s315 + $0x4c] sm:$0xf]
        %v380 = vld [vmem:[%s315 + $0x50] sm:$0xf]
        %v381 = vld [vmem:[%s315 + $0x54] sm:$0xf]
        %v382 = vld [vmem:[%s315 + $0x58] sm:$0xf]
        %v383 = vld [vmem:[%s315 + $0x5c] sm:$0xf]
        %v384 = vld [vmem:[%s315 + $0x60] sm:$0xf]
        %v385 = vld [vmem:[%s315 + $0x64] sm:$0xf]
        %v386 = vld [vmem:[%s315 + $0x68] sm:$0xf]
        %v387 = vld [vmem:[%s315 + $0x6c] sm:$0xf]
        %v388 = vld [vmem:[%s315 + $0x70] sm:$0xf]
        %v389 = vld [vmem:[%s315 + $0x74] sm:$0xf]
        %v390 = vld [vmem:[%s315 + $0x78] sm:$0xf]
        %v391 = vld [vmem:[%s315 + $0x7c] sm:$0xf]
        %v392 = vld [vmem:[%s315 + $0x80] sm:$0xf]
        %v393 = vld [vmem:[%s315 + $0x84] sm:$0xf]
        %v394 = vld [vmem:[%s315 + $0x88] sm:$0xf]
        %v395 = vld [vmem:[%s315 + $0x8c] sm:$0xf]
        %v396 = vld [vmem:[%s315 + $0x90] sm:$0xf]
        %v397 = vld [vmem:[%s315 + $0x94] sm:$0xf]
        %v398 = vld [vmem:[%s315 + $0x98] sm:$0xf]
        %v399 = vld [vmem:[%s315 + $0x9c] sm:$0xf]
        %v400 = vld [vmem:[%s315 + $0xa0] sm:$0xf]
        %v401 = vld [vmem:[%s315 + $0xa4] sm:$0xf]
        %v402 = vld [vmem:[%s315 + $0xa8] sm:$0xf]
        %v403 = vld [vmem:[%s315 + $0xac] sm:$0xf]
        %v404 = vld [vmem:[%s315 + $0xb0] sm:$0xf]
        %v405 = vld [vmem:[%s315 + $0xb4] sm:$0xf]
        %v406 = vld [vmem:[%s315 + $0xb8] sm:$0xf]
        %v407 = vld [vmem:[%s315 + $0xbc] sm:$0xf]
        %s408 = scalar_lea.vmem %s315, 12 [#allocation2]
        %v409 = vld [vmem:[%s408] sm:$0xf]
        %v410 = vld [vmem:[%s408 + $0x4] sm:$0xf]
        %v411 = vld [vmem:[%s408 + $0x8] sm:$0xf]
        %v412 = vld [vmem:[%s408 + $0xc] sm:$0xf]
        %v413 = vld [vmem:[%s408 + $0x10] sm:$0xf]
        %v414 = vld [vmem:[%s408 + $0x14] sm:$0xf]
        %v415 = vld [vmem:[%s408 + $0x18] sm:$0xf]
        %v416 = vld [vmem:[%s408 + $0x1c] sm:$0xf]
        %v417 = vld [vmem:[%s408 + $0x20] sm:$0xf]
        %v418 = vld [vmem:[%s408 + $0x24] sm:$0xf]
        %v419 = vld [vmem:[%s408 + $0x28] sm:$0xf]
        %v420 = vld [vmem:[%s408 + $0x2c] sm:$0xf]
        %v421 = vld [vmem:[%s408 + $0x30] sm:$0xf]
        %v422 = vld [vmem:[%s408 + $0x34] sm:$0xf]
        %v423 = vld [vmem:[%s408 + $0x38] sm:$0xf]
        %v424 = vld [vmem:[%s408 + $0x3c] sm:$0xf]
        %v425 = vld [vmem:[%s408 + $0x40] sm:$0xf]
        %v426 = vld [vmem:[%s408 + $0x44] sm:$0xf]
        %v427 = vld [vmem:[%s408 + $0x48] sm:$0xf]
        %v428 = vld [vmem:[%s408 + $0x4c] sm:$0xf]
        %v429 = vld [vmem:[%s408 + $0x50] sm:$0xf]
        %v430 = vld [vmem:[%s408 + $0x54] sm:$0xf]
        %v431 = vld [vmem:[%s408 + $0x58] sm:$0xf]
        %v432 = vld [vmem:[%s408 + $0x5c] sm:$0xf]
        %v433 = vld [vmem:[%s408 + $0x60] sm:$0xf]
        %v434 = vld [vmem:[%s408 + $0x64] sm:$0xf]
        %v435 = vld [vmem:[%s408 + $0x68] sm:$0xf]
        %v436 = vld [vmem:[%s408 + $0x6c] sm:$0xf]
        %v437 = vld [vmem:[%s408 + $0x70] sm:$0xf]
        %v438 = vld [vmem:[%s408 + $0x74] sm:$0xf]
        %v439 = vld [vmem:[%s408 + $0x78] sm:$0xf]
        %v440 = vld [vmem:[%s408 + $0x7c] sm:$0xf]
        %v441 = vld [vmem:[%s408 + $0x80] sm:$0xf]
        %v442 = vld [vmem:[%s408 + $0x84] sm:$0xf]
        %v443 = vld [vmem:[%s408 + $0x88] sm:$0xf]
        %v444 = vld [vmem:[%s408 + $0x8c] sm:$0xf]
        %v445 = vld [vmem:[%s408 + $0x90] sm:$0xf]
        %v446 = vld [vmem:[%s408 + $0x94] sm:$0xf]
        %v447 = vld [vmem:[%s408 + $0x98] sm:$0xf]
        %v448 = vld [vmem:[%s408 + $0x9c] sm:$0xf]
        %v449 = vld [vmem:[%s408 + $0xa0] sm:$0xf]
        %v450 = vld [vmem:[%s408 + $0xa4] sm:$0xf]
        %v451 = vld [vmem:[%s408 + $0xa8] sm:$0xf]
        %v452 = vld [vmem:[%s408 + $0xac] sm:$0xf]
        %v453 = vld [vmem:[%s408 + $0xb0] sm:$0xf]
        %v454 = vld [vmem:[%s408 + $0xb4] sm:$0xf]
        %v455 = vld [vmem:[%s408 + $0xb8] sm:$0xf]
        %v456 = vld [vmem:[%s408 + $0xbc] sm:$0xf]
        %s457 = scalar_lea.vmem %s315, 24 [#allocation2]
        %v458 = vld [vmem:[%s457] sm:$0xf]
        %v459 = vld [vmem:[%s457 + $0x4] sm:$0xf]
        %v460 = vld [vmem:[%s457 + $0x8] sm:$0xf]
        %v461 = vld [vmem:[%s457 + $0xc] sm:$0xf]
        %v462 = vld [vmem:[%s457 + $0x10] sm:$0xf]
        %v463 = vld [vmem:[%s457 + $0x14] sm:$0xf]
        %v464 = vld [vmem:[%s457 + $0x18] sm:$0xf]
        %v465 = vld [vmem:[%s457 + $0x1c] sm:$0xf]
        %v466 = vld [vmem:[%s457 + $0x20] sm:$0xf]
        %v467 = vld [vmem:[%s457 + $0x24] sm:$0xf]
        %v468 = vld [vmem:[%s457 + $0x28] sm:$0xf]
        %v469 = vld [vmem:[%s457 + $0x2c] sm:$0xf]
        %v470 = vld [vmem:[%s457 + $0x30] sm:$0xf]
        %v471 = vld [vmem:[%s457 + $0x34] sm:$0xf]
        %v472 = vld [vmem:[%s457 + $0x38] sm:$0xf]
        %v473 = vld [vmem:[%s457 + $0x3c] sm:$0xf]
        %v474 = vld [vmem:[%s457 + $0x40] sm:$0xf]
        %v475 = vld [vmem:[%s457 + $0x44] sm:$0xf]
        %v476 = vld [vmem:[%s457 + $0x48] sm:$0xf]
        %v477 = vld [vmem:[%s457 + $0x4c] sm:$0xf]
        %v478 = vld [vmem:[%s457 + $0x50] sm:$0xf]
        %v479 = vld [vmem:[%s457 + $0x54] sm:$0xf]
        %v480 = vld [vmem:[%s457 + $0x58] sm:$0xf]
        %v481 = vld [vmem:[%s457 + $0x5c] sm:$0xf]
        %v482 = vld [vmem:[%s457 + $0x60] sm:$0xf]
        %v483 = vld [vmem:[%s457 + $0x64] sm:$0xf]
        %v484 = vld [vmem:[%s457 + $0x68] sm:$0xf]
        %v485 = vld [vmem:[%s457 + $0x6c] sm:$0xf]
        %v486 = vld [vmem:[%s457 + $0x70] sm:$0xf]
        %v487 = vld [vmem:[%s457 + $0x74] sm:$0xf]
        %v488 = vld [vmem:[%s457 + $0x78] sm:$0xf]
        %v489 = vld [vmem:[%s457 + $0x7c] sm:$0xf]
        %v490 = vld [vmem:[%s457 + $0x80] sm:$0xf]
        %v491 = vld [vmem:[%s457 + $0x84] sm:$0xf]
        %v492 = vld [vmem:[%s457 + $0x88] sm:$0xf]
        %v493 = vld [vmem:[%s457 + $0x8c] sm:$0xf]
        %v494 = vld [vmem:[%s457 + $0x90] sm:$0xf]
        %v495 = vld [vmem:[%s457 + $0x94] sm:$0xf]
        %v496 = vld [vmem:[%s457 + $0x98] sm:$0xf]
        %v497 = vld [vmem:[%s457 + $0x9c] sm:$0xf]
        %v498 = vld [vmem:[%s457 + $0xa0] sm:$0xf]
        %v499 = vld [vmem:[%s457 + $0xa4] sm:$0xf]
        %v500 = vld [vmem:[%s457 + $0xa8] sm:$0xf]
        %v501 = vld [vmem:[%s457 + $0xac] sm:$0xf]
        %v502 = vld [vmem:[%s457 + $0xb0] sm:$0xf]
        %v503 = vld [vmem:[%s457 + $0xb4] sm:$0xf]
        %v504 = vld [vmem:[%s457 + $0xb8] sm:$0xf]
        %v505 = vld [vmem:[%s457 + $0xbc] sm:$0xf]
        %v554 = vunpack.c.l.b16 %v360
        %v555 = vunpack.c.l.b16 %v361
        %v556 = vunpack.c.l.b16 %v362
        %v557 = vunpack.c.l.b16 %v363
        %v558 = vunpack.c.l.b16 %v364
        %v559 = vunpack.c.l.b16 %v365
        %v560 = vunpack.c.l.b16 %v366
        %v561 = vunpack.c.l.b16 %v367
        %v562 = vunpack.c.l.b16 %v368
        %v563 = vunpack.c.l.b16 %v369
        %v564 = vunpack.c.l.b16 %v370
        %v565 = vunpack.c.l.b16 %v371
        %v566 = vunpack.c.l.b16 %v372
        %v567 = vunpack.c.l.b16 %v373
        %v568 = vunpack.c.l.b16 %v374
        %v569 = vunpack.c.l.b16 %v375
        %v570 = vunpack.c.l.b16 %v376
        %v571 = vunpack.c.l.b16 %v377
        %v572 = vunpack.c.l.b16 %v378
        %v573 = vunpack.c.l.b16 %v379
        %v574 = vunpack.c.l.b16 %v380
        %v575 = vunpack.c.l.b16 %v381
        %v576 = vunpack.c.l.b16 %v382
        %v577 = vunpack.c.l.b16 %v383
        %v578 = vunpack.c.l.b16 %v384
        %v579 = vunpack.c.l.b16 %v385
        %v580 = vunpack.c.l.b16 %v386
        %v581 = vunpack.c.l.b16 %v387
        %v582 = vunpack.c.l.b16 %v388
        %v583 = vunpack.c.l.b16 %v389
        %v584 = vunpack.c.l.b16 %v390
        %v585 = vunpack.c.l.b16 %v391
        %v586 = vunpack.c.l.b16 %v392
        %v587 = vunpack.c.l.b16 %v393
        %v588 = vunpack.c.l.b16 %v394
        %v589 = vunpack.c.l.b16 %v395
        %v590 = vunpack.c.l.b16 %v396
        %v591 = vunpack.c.l.b16 %v397
        %v592 = vunpack.c.l.b16 %v398
        %v593 = vunpack.c.l.b16 %v399
        %v594 = vunpack.c.l.b16 %v400
        %v595 = vunpack.c.l.b16 %v401
        %v596 = vunpack.c.l.b16 %v402
        %v597 = vunpack.c.l.b16 %v403
        %v598 = vunpack.c.l.b16 %v404
        %v599 = vunpack.c.l.b16 %v405
        %v600 = vunpack.c.l.b16 %v406
        %v601 = vunpack.c.l.b16 %v407
        %v650 = vunpack.c.l.b16 %v409
        %v651 = vunpack.c.l.b16 %v410
        %v652 = vunpack.c.l.b16 %v411
        %v653 = vunpack.c.l.b16 %v412
        %v654 = vunpack.c.l.b16 %v413
        %v655 = vunpack.c.l.b16 %v414
        %v656 = vunpack.c.l.b16 %v415
        %v657 = vunpack.c.l.b16 %v416
        %v658 = vunpack.c.l.b16 %v417
        %v659 = vunpack.c.l.b16 %v418
        %v660 = vunpack.c.l.b16 %v419
        %v661 = vunpack.c.l.b16 %v420
        %v662 = vunpack.c.l.b16 %v421
        %v663 = vunpack.c.l.b16 %v422
        %v664 = vunpack.c.l.b16 %v423
        %v665 = vunpack.c.l.b16 %v424
        %v666 = vunpack.c.l.b16 %v425
        %v667 = vunpack.c.l.b16 %v426
        %v668 = vunpack.c.l.b16 %v427
        %v669 = vunpack.c.l.b16 %v428
        %v670 = vunpack.c.l.b16 %v429
        %v671 = vunpack.c.l.b16 %v430
        %v672 = vunpack.c.l.b16 %v431
        %v673 = vunpack.c.l.b16 %v432
        %v674 = vunpack.c.l.b16 %v433
        %v675 = vunpack.c.l.b16 %v434
        %v676 = vunpack.c.l.b16 %v435
        %v677 = vunpack.c.l.b16 %v436
        %v678 = vunpack.c.l.b16 %v437
        %v679 = vunpack.c.l.b16 %v438
        %v680 = vunpack.c.l.b16 %v439
        %v681 = vunpack.c.l.b16 %v440
        %v682 = vunpack.c.l.b16 %v441
        %v683 = vunpack.c.l.b16 %v442
        %v684 = vunpack.c.l.b16 %v443
        %v685 = vunpack.c.l.b16 %v444
        %v686 = vunpack.c.l.b16 %v445
        %v687 = vunpack.c.l.b16 %v446
        %v688 = vunpack.c.l.b16 %v447
        %v689 = vunpack.c.l.b16 %v448
        %v690 = vunpack.c.l.b16 %v449
        %v691 = vunpack.c.l.b16 %v450
        %v692 = vunpack.c.l.b16 %v451
        %v693 = vunpack.c.l.b16 %v452
        %v694 = vunpack.c.l.b16 %v453
        %v695 = vunpack.c.l.b16 %v454
        %v696 = vunpack.c.l.b16 %v455
        %v697 = vunpack.c.l.b16 %v456
        %v746 = vunpack.c.l.b16 %v458
        %v747 = vunpack.c.l.b16 %v459
        %v748 = vunpack.c.l.b16 %v460
        %v749 = vunpack.c.l.b16 %v461
        %v750 = vunpack.c.l.b16 %v462
        %v751 = vunpack.c.l.b16 %v463
        %v752 = vunpack.c.l.b16 %v464
        %v753 = vunpack.c.l.b16 %v465
        %v754 = vunpack.c.l.b16 %v466
        %v755 = vunpack.c.l.b16 %v467
        %v756 = vunpack.c.l.b16 %v468
        %v757 = vunpack.c.l.b16 %v469
        %v758 = vunpack.c.l.b16 %v470
        %v759 = vunpack.c.l.b16 %v471
        %v760 = vunpack.c.l.b16 %v472
        %v761 = vunpack.c.l.b16 %v473
        %v762 = vunpack.c.l.b16 %v474
        %v763 = vunpack.c.l.b16 %v475
        %v764 = vunpack.c.l.b16 %v476
        %v765 = vunpack.c.l.b16 %v477
        %v766 = vunpack.c.l.b16 %v478
        %v767 = vunpack.c.l.b16 %v479
        %v768 = vunpack.c.l.b16 %v480
        %v769 = vunpack.c.l.b16 %v481
        %v770 = vunpack.c.l.b16 %v482
        %v771 = vunpack.c.l.b16 %v483
        %v772 = vunpack.c.l.b16 %v484
        %v773 = vunpack.c.l.b16 %v485
        %v774 = vunpack.c.l.b16 %v486
        %v775 = vunpack.c.l.b16 %v487
        %v776 = vunpack.c.l.b16 %v488
        %v777 = vunpack.c.l.b16 %v489
        %v778 = vunpack.c.l.b16 %v490
        %v779 = vunpack.c.l.b16 %v491
        %v780 = vunpack.c.l.b16 %v492
        %v781 = vunpack.c.l.b16 %v493
        %v782 = vunpack.c.l.b16 %v494
        %v783 = vunpack.c.l.b16 %v495
        %v784 = vunpack.c.l.b16 %v496
        %v785 = vunpack.c.l.b16 %v497
        %v786 = vunpack.c.l.b16 %v498
        %v787 = vunpack.c.l.b16 %v499
        %v788 = vunpack.c.l.b16 %v500
        %v789 = vunpack.c.l.b16 %v501
        %v790 = vunpack.c.l.b16 %v502
        %v791 = vunpack.c.l.b16 %v503
        %v792 = vunpack.c.l.b16 %v504
        %v793 = vunpack.c.l.b16 %v505
        %v794 = vld [vmem:[#allocation5] sm:$0xf]
        %v795 = vld [vmem:[#allocation5 + $0x4] sm:$0xf]
        %v796 = vld [vmem:[#allocation5 + $0x8] sm:$0xf]
        %v797 = vld [vmem:[#allocation5 + $0xc] sm:$0xf]
        %v798 = vld [vmem:[#allocation5 + $0x10] sm:$0xf]
        %v799 = vld [vmem:[#allocation5 + $0x14] sm:$0xf]
        %v800 = vld [vmem:[#allocation5 + $0x18] sm:$0xf]
        %v801 = vld [vmem:[#allocation5 + $0x1c] sm:$0xf]
        %v802 = vld [vmem:[#allocation5 + $0x20] sm:$0xf]
        %v803 = vld [vmem:[#allocation5 + $0x24] sm:$0xf]
        %v804 = vld [vmem:[#allocation5 + $0x28] sm:$0xf]
        %v805 = vld [vmem:[#allocation5 + $0x2c] sm:$0xf]
        %v806 = vld [vmem:[#allocation5 + $0x30] sm:$0xf]
        %v807 = vld [vmem:[#allocation5 + $0x34] sm:$0xf]
        %v808 = vld [vmem:[#allocation5 + $0x38] sm:$0xf]
        %v809 = vld [vmem:[#allocation5 + $0x3c] sm:$0xf]
        %v810 = vld [vmem:[#allocation5 + $0x40] sm:$0xf]
        %v811 = vld [vmem:[#allocation5 + $0x44] sm:$0xf]
        %v812 = vld [vmem:[#allocation5 + $0x48] sm:$0xf]
        %v813 = vld [vmem:[#allocation5 + $0x4c] sm:$0xf]
        %v814 = vld [vmem:[#allocation5 + $0x50] sm:$0xf]
        %v815 = vld [vmem:[#allocation5 + $0x54] sm:$0xf]
        %v816 = vld [vmem:[#allocation5 + $0x58] sm:$0xf]
        %v817 = vld [vmem:[#allocation5 + $0x5c] sm:$0xf]
        %v818 = vld [vmem:[#allocation5 + $0x60] sm:$0xf]
        %v819 = vld [vmem:[#allocation5 + $0x64] sm:$0xf]
        %v820 = vld [vmem:[#allocation5 + $0x68] sm:$0xf]
        %v821 = vld [vmem:[#allocation5 + $0x6c] sm:$0xf]
        %v822 = vld [vmem:[#allocation5 + $0x70] sm:$0xf]
        %v823 = vld [vmem:[#allocation5 + $0x74] sm:$0xf]
        %v824 = vld [vmem:[#allocation5 + $0x78] sm:$0xf]
        %v825 = vld [vmem:[#allocation5 + $0x7c] sm:$0xf]
        %v826 = vld [vmem:[#allocation5 + $0x80] sm:$0xf]
        %v827 = vld [vmem:[#allocation5 + $0x84] sm:$0xf]
        %v828 = vld [vmem:[#allocation5 + $0x88] sm:$0xf]
        %v829 = vld [vmem:[#allocation5 + $0x8c] sm:$0xf]
        %v830 = vld [vmem:[#allocation5 + $0x90] sm:$0xf]
        %v831 = vld [vmem:[#allocation5 + $0x94] sm:$0xf]
        %v832 = vld [vmem:[#allocation5 + $0x98] sm:$0xf]
        %v833 = vld [vmem:[#allocation5 + $0x9c] sm:$0xf]
        %v834 = vld [vmem:[#allocation5 + $0xa0] sm:$0xf]
        %v835 = vld [vmem:[#allocation5 + $0xa4] sm:$0xf]
        %v836 = vld [vmem:[#allocation5 + $0xa8] sm:$0xf]
        %v837 = vld [vmem:[#allocation5 + $0xac] sm:$0xf]
        %v838 = vld [vmem:[#allocation5 + $0xb0] sm:$0xf]
        %v839 = vld [vmem:[#allocation5 + $0xb4] sm:$0xf]
        %v840 = vld [vmem:[#allocation5 + $0xb8] sm:$0xf]
        %v841 = vld [vmem:[#allocation5 + $0xbc] sm:$0xf]
        %s842 = scalar_lea.vmem [#allocation5], 192
        %v843 = vld [vmem:[%s842] sm:$0xf]
        %v844 = vld [vmem:[%s842 + $0x4] sm:$0xf]
        %v845 = vld [vmem:[%s842 + $0x8] sm:$0xf]
        %v846 = vld [vmem:[%s842 + $0xc] sm:$0xf]
        %v847 = vld [vmem:[%s842 + $0x10] sm:$0xf]
        %v848 = vld [vmem:[%s842 + $0x14] sm:$0xf]
        %v849 = vld [vmem:[%s842 + $0x18] sm:$0xf]
        %v850 = vld [vmem:[%s842 + $0x1c] sm:$0xf]
        %v851 = vld [vmem:[%s842 + $0x20] sm:$0xf]
        %v852 = vld [vmem:[%s842 + $0x24] sm:$0xf]
        %v853 = vld [vmem:[%s842 + $0x28] sm:$0xf]
        %v854 = vld [vmem:[%s842 + $0x2c] sm:$0xf]
        %v855 = vld [vmem:[%s842 + $0x30] sm:$0xf]
        %v856 = vld [vmem:[%s842 + $0x34] sm:$0xf]
        %v857 = vld [vmem:[%s842 + $0x38] sm:$0xf]
        %v858 = vld [vmem:[%s842 + $0x3c] sm:$0xf]
        %v859 = vld [vmem:[%s842 + $0x40] sm:$0xf]
        %v860 = vld [vmem:[%s842 + $0x44] sm:$0xf]
        %v861 = vld [vmem:[%s842 + $0x48] sm:$0xf]
        %v862 = vld [vmem:[%s842 + $0x4c] sm:$0xf]
        %v863 = vld [vmem:[%s842 + $0x50] sm:$0xf]
        %v864 = vld [vmem:[%s842 + $0x54] sm:$0xf]
        %v865 = vld [vmem:[%s842 + $0x58] sm:$0xf]
        %v866 = vld [vmem:[%s842 + $0x5c] sm:$0xf]
        %v867 = vld [vmem:[%s842 + $0x60] sm:$0xf]
        %v868 = vld [vmem:[%s842 + $0x64] sm:$0xf]
        %v869 = vld [vmem:[%s842 + $0x68] sm:$0xf]
        %v870 = vld [vmem:[%s842 + $0x6c] sm:$0xf]
        %v871 = vld [vmem:[%s842 + $0x70] sm:$0xf]
        %v872 = vld [vmem:[%s842 + $0x74] sm:$0xf]
        %v873 = vld [vmem:[%s842 + $0x78] sm:$0xf]
        %v874 = vld [vmem:[%s842 + $0x7c] sm:$0xf]
        %v875 = vld [vmem:[%s842 + $0x80] sm:$0xf]
        %v876 = vld [vmem:[%s842 + $0x84] sm:$0xf]
        %v877 = vld [vmem:[%s842 + $0x88] sm:$0xf]
        %v878 = vld [vmem:[%s842 + $0x8c] sm:$0xf]
        %v879 = vld [vmem:[%s842 + $0x90] sm:$0xf]
        %v880 = vld [vmem:[%s842 + $0x94] sm:$0xf]
        %v881 = vld [vmem:[%s842 + $0x98] sm:$0xf]
        %v882 = vld [vmem:[%s842 + $0x9c] sm:$0xf]
        %v883 = vld [vmem:[%s842 + $0xa0] sm:$0xf]
        %v884 = vld [vmem:[%s842 + $0xa4] sm:$0xf]
        %v885 = vld [vmem:[%s842 + $0xa8] sm:$0xf]
        %v886 = vld [vmem:[%s842 + $0xac] sm:$0xf]
        %v887 = vld [vmem:[%s842 + $0xb0] sm:$0xf]
        %v888 = vld [vmem:[%s842 + $0xb4] sm:$0xf]
        %v889 = vld [vmem:[%s842 + $0xb8] sm:$0xf]
        %v890 = vld [vmem:[%s842 + $0xbc] sm:$0xf]
        %v891 = vpack.c.b16 %v555, %v554
        %v892 = vpack.c.b16 %v651, %v650
        %v893 = vpack.c.b16 %v747, %v746
        %v894 = vpack.c.b16 %v557, %v556
        %v895 = vpack.c.b16 %v653, %v652
        %v896 = vpack.c.b16 %v749, %v748
        %v897 = vpack.c.b16 %v559, %v558
        %v898 = vpack.c.b16 %v655, %v654
        %v899 = vpack.c.b16 %v751, %v750
        %v900 = vpack.c.b16 %v561, %v560
        %v901 = vpack.c.b16 %v657, %v656
        %v902 = vpack.c.b16 %v753, %v752
        %v903 = vpack.c.b16 %v563, %v562
        %v904 = vpack.c.b16 %v659, %v658
        %v905 = vpack.c.b16 %v755, %v754
        %v906 = vpack.c.b16 %v565, %v564
        %v907 = vpack.c.b16 %v661, %v660
        %v908 = vpack.c.b16 %v757, %v756
        %v909 = vpack.c.b16 %v567, %v566
        %v910 = vpack.c.b16 %v663, %v662
        %v911 = vpack.c.b16 %v759, %v758
        %v912 = vpack.c.b16 %v569, %v568
        %v913 = vpack.c.b16 %v665, %v664
        %v914 = vpack.c.b16 %v761, %v760
        %v915 = vpack.c.b16 %v571, %v570
        %v916 = vpack.c.b16 %v667, %v666
        %v917 = vpack.c.b16 %v763, %v762
        %v918 = vpack.c.b16 %v573, %v572
        %v919 = vpack.c.b16 %v669, %v668
        %v920 = vpack.c.b16 %v765, %v764
        %v921 = vpack.c.b16 %v575, %v574
        %v922 = vpack.c.b16 %v671, %v670
        %v923 = vpack.c.b16 %v767, %v766
        %v924 = vpack.c.b16 %v577, %v576
        %v925 = vpack.c.b16 %v673, %v672
        %v926 = vpack.c.b16 %v769, %v768
        %v927 = vpack.c.b16 %v579, %v578
        %v928 = vpack.c.b16 %v675, %v674
        %v929 = vpack.c.b16 %v771, %v770
        %v930 = vpack.c.b16 %v581, %v580
        %v931 = vpack.c.b16 %v677, %v676
        %v932 = vpack.c.b16 %v773, %v772
        %v933 = vpack.c.b16 %v583, %v582
        %v934 = vpack.c.b16 %v679, %v678
        %v935 = vpack.c.b16 %v775, %v774
        %v936 = vpack.c.b16 %v585, %v584
        %v937 = vpack.c.b16 %v681, %v680
        %v938 = vpack.c.b16 %v777, %v776
        %v939 = vpack.c.b16 %v587, %v586
        %v940 = vpack.c.b16 %v683, %v682
        %v941 = vpack.c.b16 %v779, %v778
        %v942 = vpack.c.b16 %v589, %v588
        %v943 = vpack.c.b16 %v685, %v684
        %v944 = vpack.c.b16 %v781, %v780
        %v945 = vpack.c.b16 %v591, %v590
        %v946 = vpack.c.b16 %v687, %v686
        %v947 = vpack.c.b16 %v783, %v782
        %v948 = vpack.c.b16 %v593, %v592
        %v949 = vpack.c.b16 %v689, %v688
        %v950 = vpack.c.b16 %v785, %v784
        %v951 = vpack.c.b16 %v595, %v594
        %v952 = vpack.c.b16 %v691, %v690
        %v953 = vpack.c.b16 %v787, %v786
        %v954 = vpack.c.b16 %v597, %v596
        %v955 = vpack.c.b16 %v693, %v692
        %v956 = vpack.c.b16 %v789, %v788
        %v957 = vpack.c.b16 %v599, %v598
        %v958 = vpack.c.b16 %v695, %v694
        %v959 = vpack.c.b16 %v791, %v790
        %v960 = vpack.c.b16 %v601, %v600
        %v961 = vpack.c.b16 %v697, %v696
        %v962 = vpack.c.b16 %v793, %v792
        %v1083 = vunpack.c.l.b16 %v843
        %v1084 = vunpack.c.l.b16 %v844
        %v1085 = vunpack.c.l.b16 %v845
        %v1086 = vunpack.c.l.b16 %v846
        %v1087 = vunpack.c.l.b16 %v847
        %v1088 = vunpack.c.l.b16 %v848
        %v1089 = vunpack.c.l.b16 %v849
        %v1090 = vunpack.c.l.b16 %v850
        %v1091 = vunpack.c.l.b16 %v851
        %v1092 = vunpack.c.l.b16 %v852
        %v1093 = vunpack.c.l.b16 %v853
        %v1094 = vunpack.c.l.b16 %v854
        %v1095 = vunpack.c.l.b16 %v855
        %v1096 = vunpack.c.l.b16 %v856
        %v1097 = vunpack.c.l.b16 %v857
        %v1098 = vunpack.c.l.b16 %v858
        %v1099 = vunpack.c.l.b16 %v859
        %v1100 = vunpack.c.l.b16 %v860
        %v1101 = vunpack.c.l.b16 %v861
        %v1102 = vunpack.c.l.b16 %v862
        %v1103 = vunpack.c.l.b16 %v863
        %v1104 = vunpack.c.l.b16 %v864
        %v1105 = vunpack.c.l.b16 %v865
        %v1106 = vunpack.c.l.b16 %v866
        %v1107 = vunpack.c.l.b16 %v867
        %v1108 = vunpack.c.l.b16 %v868
        %v1109 = vunpack.c.l.b16 %v869
        %v1110 = vunpack.c.l.b16 %v870
        %v1111 = vunpack.c.l.b16 %v871
        %v1112 = vunpack.c.l.b16 %v872
        %v1113 = vunpack.c.l.b16 %v873
        %v1114 = vunpack.c.l.b16 %v874
        %v1115 = vunpack.c.l.b16 %v875
        %v1116 = vunpack.c.l.b16 %v876
        %v1117 = vunpack.c.l.b16 %v877
        %v1118 = vunpack.c.l.b16 %v878
        %v1119 = vunpack.c.l.b16 %v879
        %v1120 = vunpack.c.l.b16 %v880
        %v1121 = vunpack.c.l.b16 %v881
        %v1122 = vunpack.c.l.b16 %v882
        %v1123 = vunpack.c.l.b16 %v883
        %v1124 = vunpack.c.l.b16 %v884
        %v1125 = vunpack.c.l.b16 %v885
        %v1126 = vunpack.c.l.b16 %v886
        %v1127 = vunpack.c.l.b16 %v887
        %v1128 = vunpack.c.l.b16 %v888
        %v1129 = vunpack.c.l.b16 %v889
        %v1130 = vunpack.c.l.b16 %v890
        %v1131 = vpack.c.b16 %v1084, %v1083
        %v1132 = vpack.c.b16 %v1086, %v1085
        %v1133 = vpack.c.b16 %v1088, %v1087
        %v1134 = vpack.c.b16 %v1090, %v1089
        %v1135 = vpack.c.b16 %v1092, %v1091
        %v1136 = vpack.c.b16 %v1094, %v1093
        %v1137 = vpack.c.b16 %v1096, %v1095
        %v1138 = vpack.c.b16 %v1098, %v1097
        %v1139 = vpack.c.b16 %v1100, %v1099
        %v1140 = vpack.c.b16 %v1102, %v1101
        %v1141 = vpack.c.b16 %v1104, %v1103
        %v1142 = vpack.c.b16 %v1106, %v1105
        %v1143 = vpack.c.b16 %v1108, %v1107
        %v1144 = vpack.c.b16 %v1110, %v1109
        %v1145 = vpack.c.b16 %v1112, %v1111
        %v1146 = vpack.c.b16 %v1114, %v1113
        %v1147 = vpack.c.b16 %v1116, %v1115
        %v1148 = vpack.c.b16 %v1118, %v1117
        %v1149 = vpack.c.b16 %v1120, %v1119
        %v1150 = vpack.c.b16 %v1122, %v1121
        %v1151 = vpack.c.b16 %v1124, %v1123
        %v1152 = vpack.c.b16 %v1126, %v1125
        %v1153 = vpack.c.b16 %v1128, %v1127
        %v1154 = vpack.c.b16 %v1130, %v1129
        %1179 = vmatpush.bf16.msra.mxu0 %v1138
        %1180 = vmatpush.bf16.msra.mxu0 %v1137
        %1181 = vmatpush.bf16.msra.mxu0 %v1136
        %1182 = vmatpush.bf16.msra.mxu0 %v1135
        %1183 = vmatpush.bf16.msra.mxu0 %v1134
        %1184 = vmatpush.bf16.msra.mxu0 %v1133
        %1185 = vmatpush.bf16.msra.mxu0 %v1132
        %1186 = vmatpush.bf16.msra.mxu0 %v1131
        %1187 = vmatmul.bf16.gmra.mxu0 %v891
        %v1188 = vpop.f32.mrf.mxu0
        %v1189 = vadd.f32 0.0, %v1188
        %v1190 = vpop.f32.mrf.mxu0
        %v1191 = vadd.f32 0.0, %v1190
        %1192 = vmatmul.bf16.gmra.mxu0 %v894
        %v1193 = vpop.f32.mrf.mxu0
        %v1194 = vadd.f32 0.0, %v1193
        %v1195 = vpop.f32.mrf.mxu0
        %v1196 = vadd.f32 0.0, %v1195
        %1197 = vmatmul.bf16.gmra.mxu0 %v897
        %v1198 = vpop.f32.mrf.mxu0
        %v1199 = vadd.f32 0.0, %v1198
        %v1200 = vpop.f32.mrf.mxu0
        %v1201 = vadd.f32 0.0, %v1200
        %1202 = vmatmul.bf16.gmra.mxu0 %v900
        %v1203 = vpop.f32.mrf.mxu0
        %v1204 = vadd.f32 0.0, %v1203
        %v1205 = vpop.f32.mrf.mxu0
        %v1206 = vadd.f32 0.0, %v1205
        %1207 = vmatmul.bf16.gmra.mxu0 %v903
        %v1208 = vpop.f32.mrf.mxu0
        %v1209 = vadd.f32 0.0, %v1208
        %v1210 = vpop.f32.mrf.mxu0
        %v1211 = vadd.f32 0.0, %v1210
        %1212 = vmatmul.bf16.gmra.mxu0 %v906
        %v1213 = vpop.f32.mrf.mxu0
        %v1214 = vadd.f32 0.0, %v1213
        %v1215 = vpop.f32.mrf.mxu0
        %v1216 = vadd.f32 0.0, %v1215
        %1217 = vmatmul.bf16.gmra.mxu0 %v909
        %v1218 = vpop.f32.mrf.mxu0
        %v1219 = vadd.f32 0.0, %v1218
        %v1220 = vpop.f32.mrf.mxu0
        %v1221 = vadd.f32 0.0, %v1220
        %1222 = vmatmul.bf16.gmra.mxu0 %v912
        %v1223 = vpop.f32.mrf.mxu0
        %v1224 = vadd.f32 0.0, %v1223
        %v1225 = vpop.f32.mrf.mxu0
        %v1226 = vadd.f32 0.0, %v1225
        %1227 = vmatmul.bf16.gmra.mxu0 %v915
        %v1228 = vpop.f32.mrf.mxu0
        %v1229 = vadd.f32 0.0, %v1228
        %v1230 = vpop.f32.mrf.mxu0
        %v1231 = vadd.f32 0.0, %v1230
        %1232 = vmatmul.bf16.gmra.mxu0 %v918
        %v1233 = vpop.f32.mrf.mxu0
        %v1234 = vadd.f32 0.0, %v1233
        %v1235 = vpop.f32.mrf.mxu0
        %v1236 = vadd.f32 0.0, %v1235
        %1237 = vmatmul.bf16.gmra.mxu0 %v921
        %v1238 = vpop.f32.mrf.mxu0
        %v1239 = vadd.f32 0.0, %v1238
        %v1240 = vpop.f32.mrf.mxu0
        %v1241 = vadd.f32 0.0, %v1240
        %1242 = vmatmul.bf16.gmra.mxu0 %v924
        %v1243 = vpop.f32.mrf.mxu0
        %v1244 = vadd.f32 0.0, %v1243
        %v1245 = vpop.f32.mrf.mxu0
        %v1246 = vadd.f32 0.0, %v1245
        %1247 = vmatmul.bf16.gmra.mxu0 %v927
        %v1248 = vpop.f32.mrf.mxu0
        %v1249 = vadd.f32 0.0, %v1248
        %v1250 = vpop.f32.mrf.mxu0
        %v1251 = vadd.f32 0.0, %v1250
        %1252 = vmatmul.bf16.gmra.mxu0 %v930
        %v1253 = vpop.f32.mrf.mxu0
        %v1254 = vadd.f32 0.0, %v1253
        %v1255 = vpop.f32.mrf.mxu0
        %v1256 = vadd.f32 0.0, %v1255
        %1257 = vmatmul.bf16.gmra.mxu0 %v933
        %v1258 = vpop.f32.mrf.mxu0
        %v1259 = vadd.f32 0.0, %v1258
        %v1260 = vpop.f32.mrf.mxu0
        %v1261 = vadd.f32 0.0, %v1260
        %1262 = vmatmul.bf16.gmra.mxu0 %v936
        %v1263 = vpop.f32.mrf.mxu0
        %v1264 = vadd.f32 0.0, %v1263
        %v1265 = vpop.f32.mrf.mxu0
        %v1266 = vadd.f32 0.0, %v1265
        %1267 = vmatmul.bf16.gmra.mxu0 %v939
        %v1268 = vpop.f32.mrf.mxu0
        %v1269 = vadd.f32 0.0, %v1268
        %v1270 = vpop.f32.mrf.mxu0
        %v1271 = vadd.f32 0.0, %v1270
        %1272 = vmatmul.bf16.gmra.mxu0 %v942
        %v1273 = vpop.f32.mrf.mxu0
        %v1274 = vadd.f32 0.0, %v1273
        %v1275 = vpop.f32.mrf.mxu0
        %v1276 = vadd.f32 0.0, %v1275
        %1277 = vmatmul.bf16.gmra.mxu0 %v945
        %v1278 = vpop.f32.mrf.mxu0
        %v1279 = vadd.f32 0.0, %v1278
        %v1280 = vpop.f32.mrf.mxu0
        %v1281 = vadd.f32 0.0, %v1280
        %1282 = vmatmul.bf16.gmra.mxu0 %v948
        %v1283 = vpop.f32.mrf.mxu0
        %v1284 = vadd.f32 0.0, %v1283
        %v1285 = vpop.f32.mrf.mxu0
        %v1286 = vadd.f32 0.0, %v1285
        %1287 = vmatmul.bf16.gmra.mxu0 %v951
        %v1288 = vpop.f32.mrf.mxu0
        %v1289 = vadd.f32 0.0, %v1288
        %v1290 = vpop.f32.mrf.mxu0
        %v1291 = vadd.f32 0.0, %v1290
        %1292 = vmatmul.bf16.gmra.mxu0 %v954
        %v1293 = vpop.f32.mrf.mxu0
        %v1294 = vadd.f32 0.0, %v1293
        %v1295 = vpop.f32.mrf.mxu0
        %v1296 = vadd.f32 0.0, %v1295
        %1297 = vmatmul.bf16.gmra.mxu0 %v957
        %v1298 = vpop.f32.mrf.mxu0
        %v1299 = vadd.f32 0.0, %v1298
        %v1300 = vpop.f32.mrf.mxu0
        %v1301 = vadd.f32 0.0, %v1300
        %1302 = vmatmul.bf16.gmra.mxu0 %v960
        %v1303 = vpop.f32.mrf.mxu0
        %v1304 = vadd.f32 0.0, %v1303
        %v1305 = vpop.f32.mrf.mxu0
        %v1306 = vadd.f32 0.0, %v1305
        %1307 = vdwg.mxu0
        %1308 = vmatpush.bf16.msra.mxu0 %v1146
        %1309 = vmatpush.bf16.msra.mxu0 %v1145
        %1310 = vmatpush.bf16.msra.mxu0 %v1144
        %1311 = vmatpush.bf16.msra.mxu0 %v1143
        %1312 = vmatpush.bf16.msra.mxu0 %v1142
        %1313 = vmatpush.bf16.msra.mxu0 %v1141
        %1314 = vmatpush.bf16.msra.mxu0 %v1140
        %1315 = vmatpush.bf16.msra.mxu0 %v1139
        %1316 = vmatmul.bf16.gmra.mxu0 %v892
        %v1317 = vpop.f32.mrf.mxu0
        %v1318 = vadd.f32 %v1189, %v1317
        %v1319 = vpop.f32.mrf.mxu0
        %v1320 = vadd.f32 %v1191, %v1319
        %1321 = vmatmul.bf16.gmra.mxu0 %v895
        %v1322 = vpop.f32.mrf.mxu0
        %v1323 = vadd.f32 %v1194, %v1322
        %v1324 = vpop.f32.mrf.mxu0
        %v1325 = vadd.f32 %v1196, %v1324
        %1326 = vmatmul.bf16.gmra.mxu0 %v898
        %v1327 = vpop.f32.mrf.mxu0
        %v1328 = vadd.f32 %v1199, %v1327
        %v1329 = vpop.f32.mrf.mxu0
        %v1330 = vadd.f32 %v1201, %v1329
        %1331 = vmatmul.bf16.gmra.mxu0 %v901
        %v1332 = vpop.f32.mrf.mxu0
        %v1333 = vadd.f32 %v1204, %v1332
        %v1334 = vpop.f32.mrf.mxu0
        %v1335 = vadd.f32 %v1206, %v1334
        %1336 = vmatmul.bf16.gmra.mxu0 %v904
        %v1337 = vpop.f32.mrf.mxu0
        %v1338 = vadd.f32 %v1209, %v1337
        %v1339 = vpop.f32.mrf.mxu0
        %v1340 = vadd.f32 %v1211, %v1339
        %1341 = vmatmul.bf16.gmra.mxu0 %v907
        %v1342 = vpop.f32.mrf.mxu0
        %v1343 = vadd.f32 %v1214, %v1342
        %v1344 = vpop.f32.mrf.mxu0
        %v1345 = vadd.f32 %v1216, %v1344
        %1346 = vmatmul.bf16.gmra.mxu0 %v910
        %v1347 = vpop.f32.mrf.mxu0
        %v1348 = vadd.f32 %v1219, %v1347
        %v1349 = vpop.f32.mrf.mxu0
        %v1350 = vadd.f32 %v1221, %v1349
        %1351 = vmatmul.bf16.gmra.mxu0 %v913
        %v1352 = vpop.f32.mrf.mxu0
        %v1353 = vadd.f32 %v1224, %v1352
        %v1354 = vpop.f32.mrf.mxu0
        %v1355 = vadd.f32 %v1226, %v1354
        %1356 = vmatmul.bf16.gmra.mxu0 %v916
        %v1357 = vpop.f32.mrf.mxu0
        %v1358 = vadd.f32 %v1229, %v1357
        %v1359 = vpop.f32.mrf.mxu0
        %v1360 = vadd.f32 %v1231, %v1359
        %1361 = vmatmul.bf16.gmra.mxu0 %v919
        %v1362 = vpop.f32.mrf.mxu0
        %v1363 = vadd.f32 %v1234, %v1362
        %v1364 = vpop.f32.mrf.mxu0
        %v1365 = vadd.f32 %v1236, %v1364
        %1366 = vmatmul.bf16.gmra.mxu0 %v922
        %v1367 = vpop.f32.mrf.mxu0
        %v1368 = vadd.f32 %v1239, %v1367
        %v1369 = vpop.f32.mrf.mxu0
        %v1370 = vadd.f32 %v1241, %v1369
        %1371 = vmatmul.bf16.gmra.mxu0 %v925
        %v1372 = vpop.f32.mrf.mxu0
        %v1373 = vadd.f32 %v1244, %v1372
        %v1374 = vpop.f32.mrf.mxu0
        %v1375 = vadd.f32 %v1246, %v1374
        %1376 = vmatmul.bf16.gmra.mxu0 %v928
        %v1377 = vpop.f32.mrf.mxu0
        %v1378 = vadd.f32 %v1249, %v1377
        %v1379 = vpop.f32.mrf.mxu0
        %v1380 = vadd.f32 %v1251, %v1379
        %1381 = vmatmul.bf16.gmra.mxu0 %v931
        %v1382 = vpop.f32.mrf.mxu0
        %v1383 = vadd.f32 %v1254, %v1382
        %v1384 = vpop.f32.mrf.mxu0
        %v1385 = vadd.f32 %v1256, %v1384
        %1386 = vmatmul.bf16.gmra.mxu0 %v934
        %v1387 = vpop.f32.mrf.mxu0
        %v1388 = vadd.f32 %v1259, %v1387
        %v1389 = vpop.f32.mrf.mxu0
        %v1390 = vadd.f32 %v1261, %v1389
        %1391 = vmatmul.bf16.gmra.mxu0 %v937
        %v1392 = vpop.f32.mrf.mxu0
        %v1393 = vadd.f32 %v1264, %v1392
        %v1394 = vpop.f32.mrf.mxu0
        %v1395 = vadd.f32 %v1266, %v1394
        %1396 = vmatmul.bf16.gmra.mxu0 %v940
        %v1397 = vpop.f32.mrf.mxu0
        %v1398 = vadd.f32 %v1269, %v1397
        %v1399 = vpop.f32.mrf.mxu0
        %v1400 = vadd.f32 %v1271, %v1399
        %1401 = vmatmul.bf16.gmra.mxu0 %v943
        %v1402 = vpop.f32.mrf.mxu0
        %v1403 = vadd.f32 %v1274, %v1402
        %v1404 = vpop.f32.mrf.mxu0
        %v1405 = vadd.f32 %v1276, %v1404
        %1406 = vmatmul.bf16.gmra.mxu0 %v946
        %v1407 = vpop.f32.mrf.mxu0
        %v1408 = vadd.f32 %v1279, %v1407
        %v1409 = vpop.f32.mrf.mxu0
        %v1410 = vadd.f32 %v1281, %v1409
        %1411 = vmatmul.bf16.gmra.mxu0 %v949
        %v1412 = vpop.f32.mrf.mxu0
        %v1413 = vadd.f32 %v1284, %v1412
        %v1414 = vpop.f32.mrf.mxu0
        %v1415 = vadd.f32 %v1286, %v1414
        %1416 = vmatmul.bf16.gmra.mxu0 %v952
        %v1417 = vpop.f32.mrf.mxu0
        %v1418 = vadd.f32 %v1289, %v1417
        %v1419 = vpop.f32.mrf.mxu0
        %v1420 = vadd.f32 %v1291, %v1419
        %1421 = vmatmul.bf16.gmra.mxu0 %v955
        %v1422 = vpop.f32.mrf.mxu0
        %v1423 = vadd.f32 %v1294, %v1422
        %v1424 = vpop.f32.mrf.mxu0
        %v1425 = vadd.f32 %v1296, %v1424
        %1426 = vmatmul.bf16.gmra.mxu0 %v958
        %v1427 = vpop.f32.mrf.mxu0
        %v1428 = vadd.f32 %v1299, %v1427
        %v1429 = vpop.f32.mrf.mxu0
        %v1430 = vadd.f32 %v1301, %v1429
        %1431 = vmatmul.bf16.gmra.mxu0 %v961
        %v1432 = vpop.f32.mrf.mxu0
        %v1433 = vadd.f32 %v1304, %v1432
        %v1434 = vpop.f32.mrf.mxu0
        %v1435 = vadd.f32 %v1306, %v1434
        %1436 = vdwg.mxu0
        %1437 = vmatpush.bf16.msra.mxu0 %v1154
        %1438 = vmatpush.bf16.msra.mxu0 %v1153
        %1439 = vmatpush.bf16.msra.mxu0 %v1152
        %1440 = vmatpush.bf16.msra.mxu0 %v1151
        %1441 = vmatpush.bf16.msra.mxu0 %v1150
        %1442 = vmatpush.bf16.msra.mxu0 %v1149
        %1443 = vmatpush.bf16.msra.mxu0 %v1148
        %1444 = vmatpush.bf16.msra.mxu0 %v1147
        %1445 = vmatmul.bf16.gmra.mxu0 %v893
        %v1446 = vpop.f32.mrf.mxu0
        %v1447 = vadd.f32 %v1318, %v1446
        %v1448 = vpop.f32.mrf.mxu0
        %v1449 = vadd.f32 %v1320, %v1448
        %1450 = vmatmul.bf16.gmra.mxu0 %v896
        %v1451 = vpop.f32.mrf.mxu0
        %v1452 = vadd.f32 %v1323, %v1451
        %v1453 = vpop.f32.mrf.mxu0
        %v1454 = vadd.f32 %v1325, %v1453
        %1455 = vmatmul.bf16.gmra.mxu0 %v899
        %v1456 = vpop.f32.mrf.mxu0
        %v1457 = vadd.f32 %v1328, %v1456
        %v1458 = vpop.f32.mrf.mxu0
        %v1459 = vadd.f32 %v1330, %v1458
        %1460 = vmatmul.bf16.gmra.mxu0 %v902
        %v1461 = vpop.f32.mrf.mxu0
        %v1462 = vadd.f32 %v1333, %v1461
        %v1463 = vpop.f32.mrf.mxu0
        %v1464 = vadd.f32 %v1335, %v1463
        %1465 = vmatmul.bf16.gmra.mxu0 %v905
        %v1466 = vpop.f32.mrf.mxu0
        %v1467 = vadd.f32 %v1338, %v1466
        %v1468 = vpop.f32.mrf.mxu0
        %v1469 = vadd.f32 %v1340, %v1468
        %1470 = vmatmul.bf16.gmra.mxu0 %v908
        %v1471 = vpop.f32.mrf.mxu0
        %v1472 = vadd.f32 %v1343, %v1471
        %v1473 = vpop.f32.mrf.mxu0
        %v1474 = vadd.f32 %v1345, %v1473
        %1475 = vmatmul.bf16.gmra.mxu0 %v911
        %v1476 = vpop.f32.mrf.mxu0
        %v1477 = vadd.f32 %v1348, %v1476
        %v1478 = vpop.f32.mrf.mxu0
        %v1479 = vadd.f32 %v1350, %v1478
        %1480 = vmatmul.bf16.gmra.mxu0 %v914
        %v1481 = vpop.f32.mrf.mxu0
        %v1482 = vadd.f32 %v1353, %v1481
        %v1483 = vpop.f32.mrf.mxu0
        %v1484 = vadd.f32 %v1355, %v1483
        %1485 = vmatmul.bf16.gmra.mxu0 %v917
        %v1486 = vpop.f32.mrf.mxu0
        %v1487 = vadd.f32 %v1358, %v1486
        %v1488 = vpop.f32.mrf.mxu0
        %v1489 = vadd.f32 %v1360, %v1488
        %1490 = vmatmul.bf16.gmra.mxu0 %v920
        %v1491 = vpop.f32.mrf.mxu0
        %v1492 = vadd.f32 %v1363, %v1491
        %v1493 = vpop.f32.mrf.mxu0
        %v1494 = vadd.f32 %v1365, %v1493
        %1495 = vmatmul.bf16.gmra.mxu0 %v923
        %v1496 = vpop.f32.mrf.mxu0
        %v1497 = vadd.f32 %v1368, %v1496
        %v1498 = vpop.f32.mrf.mxu0
        %v1499 = vadd.f32 %v1370, %v1498
        %1500 = vmatmul.bf16.gmra.mxu0 %v926
        %v1501 = vpop.f32.mrf.mxu0
        %v1502 = vadd.f32 %v1373, %v1501
        %v1503 = vpop.f32.mrf.mxu0
        %v1504 = vadd.f32 %v1375, %v1503
        %1505 = vmatmul.bf16.gmra.mxu0 %v929
        %v1506 = vpop.f32.mrf.mxu0
        %v1507 = vadd.f32 %v1378, %v1506
        %v1508 = vpop.f32.mrf.mxu0
        %v1509 = vadd.f32 %v1380, %v1508
        %1510 = vmatmul.bf16.gmra.mxu0 %v932
        %v1511 = vpop.f32.mrf.mxu0
        %v1512 = vadd.f32 %v1383, %v1511
        %v1513 = vpop.f32.mrf.mxu0
        %v1514 = vadd.f32 %v1385, %v1513
        %1515 = vmatmul.bf16.gmra.mxu0 %v935
        %v1516 = vpop.f32.mrf.mxu0
        %v1517 = vadd.f32 %v1388, %v1516
        %v1518 = vpop.f32.mrf.mxu0
        %v1519 = vadd.f32 %v1390, %v1518
        %1520 = vmatmul.bf16.gmra.mxu0 %v938
        %v1521 = vpop.f32.mrf.mxu0
        %v1522 = vadd.f32 %v1393, %v1521
        %v1523 = vpop.f32.mrf.mxu0
        %v1524 = vadd.f32 %v1395, %v1523
        %1525 = vmatmul.bf16.gmra.mxu0 %v941
        %v1526 = vpop.f32.mrf.mxu0
        %v1527 = vadd.f32 %v1398, %v1526
        %v1528 = vpop.f32.mrf.mxu0
        %v1529 = vadd.f32 %v1400, %v1528
        %1530 = vmatmul.bf16.gmra.mxu0 %v944
        %v1531 = vpop.f32.mrf.mxu0
        %v1532 = vadd.f32 %v1403, %v1531
        %v1533 = vpop.f32.mrf.mxu0
        %v1534 = vadd.f32 %v1405, %v1533
        %1535 = vmatmul.bf16.gmra.mxu0 %v947
        %v1536 = vpop.f32.mrf.mxu0
        %v1537 = vadd.f32 %v1408, %v1536
        %v1538 = vpop.f32.mrf.mxu0
        %v1539 = vadd.f32 %v1410, %v1538
        %1540 = vmatmul.bf16.gmra.mxu0 %v950
        %v1541 = vpop.f32.mrf.mxu0
        %v1542 = vadd.f32 %v1413, %v1541
        %v1543 = vpop.f32.mrf.mxu0
        %v1544 = vadd.f32 %v1415, %v1543
        %1545 = vmatmul.bf16.gmra.mxu0 %v953
        %v1546 = vpop.f32.mrf.mxu0
        %v1547 = vadd.f32 %v1418, %v1546
        %v1548 = vpop.f32.mrf.mxu0
        %v1549 = vadd.f32 %v1420, %v1548
        %1550 = vmatmul.bf16.gmra.mxu0 %v956
        %v1551 = vpop.f32.mrf.mxu0
        %v1552 = vadd.f32 %v1423, %v1551
        %v1553 = vpop.f32.mrf.mxu0
        %v1554 = vadd.f32 %v1425, %v1553
        %1555 = vmatmul.bf16.gmra.mxu0 %v959
        %v1556 = vpop.f32.mrf.mxu0
        %v1557 = vadd.f32 %v1428, %v1556
        %v1558 = vpop.f32.mrf.mxu0
        %v1559 = vadd.f32 %v1430, %v1558
        %1560 = vmatmul.bf16.gmra.mxu0 %v962
        %v1561 = vpop.f32.mrf.mxu0
        %v1562 = vadd.f32 %v1433, %v1561
        %v1563 = vpop.f32.mrf.mxu0
        %v1564 = vadd.f32 %v1435, %v1563
        %1565 = vdwg.mxu0
        %v1566 = vrot.slane %v1447, 1
        %v1567 = vrot.slane %v1449, 1
        %v1568 = vrot.slane %v1452, 1
        %v1569 = vrot.slane %v1454, 1
        %v1570 = vrot.slane %v1457, 1
        %v1571 = vrot.slane %v1459, 1
        %v1572 = vrot.slane %v1462, 1
        %v1573 = vrot.slane %v1464, 1
        %v1574 = vrot.slane %v1467, 1
        %v1575 = vrot.slane %v1469, 1
        %v1576 = vrot.slane %v1472, 1
        %v1577 = vrot.slane %v1474, 1
        %v1578 = vrot.slane %v1477, 1
        %v1579 = vrot.slane %v1479, 1
        %v1580 = vrot.slane %v1482, 1
        %v1581 = vrot.slane %v1484, 1
        %v1582 = vrot.slane %v1487, 1
        %v1583 = vrot.slane %v1489, 1
        %v1584 = vrot.slane %v1492, 1
        %v1585 = vrot.slane %v1494, 1
        %v1586 = vrot.slane %v1497, 1
        %v1587 = vrot.slane %v1499, 1
        %v1588 = vrot.slane %v1502, 1
        %v1589 = vrot.slane %v1504, 1
        %v1590 = vrot.slane %v1507, 1
        %v1591 = vrot.slane %v1509, 1
        %v1592 = vrot.slane %v1512, 1
        %v1593 = vrot.slane %v1514, 1
        %v1594 = vrot.slane %v1517, 1
        %v1595 = vrot.slane %v1519, 1
        %v1596 = vrot.slane %v1522, 1
        %v1597 = vrot.slane %v1524, 1
        %v1598 = vrot.slane %v1527, 1
        %v1599 = vrot.slane %v1529, 1
        %v1600 = vrot.slane %v1532, 1
        %v1601 = vrot.slane %v1534, 1
        %v1602 = vrot.slane %v1537, 1
        %v1603 = vrot.slane %v1539, 1
        %v1604 = vrot.slane %v1542, 1
        %v1605 = vrot.slane %v1544, 1
        %v1606 = vrot.slane %v1547, 1
        %v1607 = vrot.slane %v1549, 1
        %v1608 = vrot.slane %v1552, 1
        %v1609 = vrot.slane %v1554, 1
        %v1610 = vrot.slane %v1557, 1
        %v1611 = vrot.slane %v1559, 1
        %v1612 = vrot.slane %v1562, 1
        %v1613 = vrot.slane %v1564, 1
        %v1614 = vlaneseq
        %v1615 = vshrl.u32 %v1614, 7
        %vm1616 = vcmp.lt.s32.totalorder %v1615, 7
        %v1617 = vsel %vm1616, %v1612, %v1613
        %v1618 = vsel %vm1616, %v1611, %v1612
        %v1619 = vsel %vm1616, %v1610, %v1611
        %v1620 = vsel %vm1616, %v1609, %v1610
        %v1621 = vsel %vm1616, %v1608, %v1609
        %v1622 = vsel %vm1616, %v1607, %v1608
        %v1623 = vsel %vm1616, %v1606, %v1607
        %v1624 = vsel %vm1616, %v1605, %v1606
        %v1625 = vsel %vm1616, %v1604, %v1605
        %v1626 = vsel %vm1616, %v1603, %v1604
        %v1627 = vsel %vm1616, %v1602, %v1603
        %v1628 = vsel %vm1616, %v1601, %v1602
        %v1629 = vsel %vm1616, %v1600, %v1601
        %v1630 = vsel %vm1616, %v1599, %v1600
        %v1631 = vsel %vm1616, %v1598, %v1599
        %v1632 = vsel %vm1616, %v1597, %v1598
        %v1633 = vsel %vm1616, %v1596, %v1597
        %v1634 = vsel %vm1616, %v1595, %v1596
        %v1635 = vsel %vm1616, %v1594, %v1595
        %v1636 = vsel %vm1616, %v1593, %v1594
        %v1637 = vsel %vm1616, %v1592, %v1593
        %v1638 = vsel %vm1616, %v1591, %v1592
        %v1639 = vsel %vm1616, %v1590, %v1591
        %v1640 = vsel %vm1616, %v1589, %v1590
        %v1641 = vsel %vm1616, %v1588, %v1589
        %v1642 = vsel %vm1616, %v1587, %v1588
        %v1643 = vsel %vm1616, %v1586, %v1587
        %v1644 = vsel %vm1616, %v1585, %v1586
        %v1645 = vsel %vm1616, %v1584, %v1585
        %v1646 = vsel %vm1616, %v1583, %v1584
        %v1647 = vsel %vm1616, %v1582, %v1583
        %v1648 = vsel %vm1616, %v1581, %v1582
        %v1649 = vsel %vm1616, %v1580, %v1581
        %v1650 = vsel %vm1616, %v1579, %v1580
        %v1651 = vsel %vm1616, %v1578, %v1579
        %v1652 = vsel %vm1616, %v1577, %v1578
        %v1653 = vsel %vm1616, %v1576, %v1577
        %v1654 = vsel %vm1616, %v1575, %v1576
        %v1655 = vsel %vm1616, %v1574, %v1575
        %v1656 = vsel %vm1616, %v1573, %v1574
        %v1657 = vsel %vm1616, %v1572, %v1573
        %v1658 = vsel %vm1616, %v1571, %v1572
        %v1659 = vsel %vm1616, %v1570, %v1571
        %v1660 = vsel %vm1616, %v1569, %v1570
        %v1661 = vsel %vm1616, %v1568, %v1569
        %v1662 = vsel %vm1616, %v1567, %v1568
        %v1663 = vsel %vm1616, %v1566, %v1567
        %v1664 = vsel %vm1616, %v1613, %v1566
        %v1713 = vunpack.c.l.b16 %v794
        %v1714 = vunpack.c.l.b16 %v795
        %v1715 = vunpack.c.l.b16 %v796
        %v1716 = vunpack.c.l.b16 %v797
        %v1717 = vunpack.c.l.b16 %v798
        %v1718 = vunpack.c.l.b16 %v799
        %v1719 = vunpack.c.l.b16 %v800
        %v1720 = vunpack.c.l.b16 %v801
        %v1721 = vunpack.c.l.b16 %v802
        %v1722 = vunpack.c.l.b16 %v803
        %v1723 = vunpack.c.l.b16 %v804
        %v1724 = vunpack.c.l.b16 %v805
        %v1725 = vunpack.c.l.b16 %v806
        %v1726 = vunpack.c.l.b16 %v807
        %v1727 = vunpack.c.l.b16 %v808
        %v1728 = vunpack.c.l.b16 %v809
        %v1729 = vunpack.c.l.b16 %v810
        %v1730 = vunpack.c.l.b16 %v811
        %v1731 = vunpack.c.l.b16 %v812
        %v1732 = vunpack.c.l.b16 %v813
        %v1733 = vunpack.c.l.b16 %v814
        %v1734 = vunpack.c.l.b16 %v815
        %v1735 = vunpack.c.l.b16 %v816
        %v1736 = vunpack.c.l.b16 %v817
        %v1737 = vunpack.c.l.b16 %v818
        %v1738 = vunpack.c.l.b16 %v819
        %v1739 = vunpack.c.l.b16 %v820
        %v1740 = vunpack.c.l.b16 %v821
        %v1741 = vunpack.c.l.b16 %v822
        %v1742 = vunpack.c.l.b16 %v823
        %v1743 = vunpack.c.l.b16 %v824
        %v1744 = vunpack.c.l.b16 %v825
        %v1745 = vunpack.c.l.b16 %v826
        %v1746 = vunpack.c.l.b16 %v827
        %v1747 = vunpack.c.l.b16 %v828
        %v1748 = vunpack.c.l.b16 %v829
        %v1749 = vunpack.c.l.b16 %v830
        %v1750 = vunpack.c.l.b16 %v831
        %v1751 = vunpack.c.l.b16 %v832
        %v1752 = vunpack.c.l.b16 %v833
        %v1753 = vunpack.c.l.b16 %v834
        %v1754 = vunpack.c.l.b16 %v835
        %v1755 = vunpack.c.l.b16 %v836
        %v1756 = vunpack.c.l.b16 %v837
        %v1757 = vunpack.c.l.b16 %v838
        %v1758 = vunpack.c.l.b16 %v839
        %v1759 = vunpack.c.l.b16 %v840
        %v1760 = vunpack.c.l.b16 %v841
        %v1761 = vpack.c.b16 %v1714, %v1713
        %v1762 = vpack.c.b16 %v1716, %v1715
        %v1763 = vpack.c.b16 %v1718, %v1717
        %v1764 = vpack.c.b16 %v1720, %v1719
        %v1765 = vpack.c.b16 %v1722, %v1721
        %v1766 = vpack.c.b16 %v1724, %v1723
        %v1767 = vpack.c.b16 %v1726, %v1725
        %v1768 = vpack.c.b16 %v1728, %v1727
        %v1769 = vpack.c.b16 %v1730, %v1729
        %v1770 = vpack.c.b16 %v1732, %v1731
        %v1771 = vpack.c.b16 %v1734, %v1733
        %v1772 = vpack.c.b16 %v1736, %v1735
        %v1773 = vpack.c.b16 %v1738, %v1737
        %v1774 = vpack.c.b16 %v1740, %v1739
        %v1775 = vpack.c.b16 %v1742, %v1741
        %v1776 = vpack.c.b16 %v1744, %v1743
        %v1777 = vpack.c.b16 %v1746, %v1745
        %v1778 = vpack.c.b16 %v1748, %v1747
        %v1779 = vpack.c.b16 %v1750, %v1749
        %v1780 = vpack.c.b16 %v1752, %v1751
        %v1781 = vpack.c.b16 %v1754, %v1753
        %v1782 = vpack.c.b16 %v1756, %v1755
        %v1783 = vpack.c.b16 %v1758, %v1757
        %v1784 = vpack.c.b16 %v1760, %v1759
        %1809 = vmatpush.bf16.msra.mxu0 %v1768
        %1810 = vmatpush.bf16.msra.mxu0 %v1767
        %1811 = vmatpush.bf16.msra.mxu0 %v1766
        %1812 = vmatpush.bf16.msra.mxu0 %v1765
        %1813 = vmatpush.bf16.msra.mxu0 %v1764
        %1814 = vmatpush.bf16.msra.mxu0 %v1763
        %1815 = vmatpush.bf16.msra.mxu0 %v1762
        %1816 = vmatpush.bf16.msra.mxu0 %v1761
        %1817 = vmatmul.bf16.gmra.mxu0 %v891
        %v1818 = vpop.f32.mrf.mxu0
        %v1819 = vadd.f32 %v1663, %v1818
        %v1820 = vpop.f32.mrf.mxu0
        %v1821 = vadd.f32 %v1662, %v1820
        %1822 = vmatmul.bf16.gmra.mxu0 %v894
        %v1823 = vpop.f32.mrf.mxu0
        %v1824 = vadd.f32 %v1661, %v1823
        %v1825 = vpop.f32.mrf.mxu0
        %v1826 = vadd.f32 %v1660, %v1825
        %1827 = vmatmul.bf16.gmra.mxu0 %v897
        %v1828 = vpop.f32.mrf.mxu0
        %v1829 = vadd.f32 %v1659, %v1828
        %v1830 = vpop.f32.mrf.mxu0
        %v1831 = vadd.f32 %v1658, %v1830
        %1832 = vmatmul.bf16.gmra.mxu0 %v900
        %v1833 = vpop.f32.mrf.mxu0
        %v1834 = vadd.f32 %v1657, %v1833
        %v1835 = vpop.f32.mrf.mxu0
        %v1836 = vadd.f32 %v1656, %v1835
        %1837 = vmatmul.bf16.gmra.mxu0 %v903
        %v1838 = vpop.f32.mrf.mxu0
        %v1839 = vadd.f32 %v1655, %v1838
        %v1840 = vpop.f32.mrf.mxu0
        %v1841 = vadd.f32 %v1654, %v1840
        %1842 = vmatmul.bf16.gmra.mxu0 %v906
        %v1843 = vpop.f32.mrf.mxu0
        %v1844 = vadd.f32 %v1653, %v1843
        %v1845 = vpop.f32.mrf.mxu0
        %v1846 = vadd.f32 %v1652, %v1845
        %1847 = vmatmul.bf16.gmra.mxu0 %v909
        %v1848 = vpop.f32.mrf.mxu0
        %v1849 = vadd.f32 %v1651, %v1848
        %v1850 = vpop.f32.mrf.mxu0
        %v1851 = vadd.f32 %v1650, %v1850
        %1852 = vmatmul.bf16.gmra.mxu0 %v912
        %v1853 = vpop.f32.mrf.mxu0
        %v1854 = vadd.f32 %v1649, %v1853
        %v1855 = vpop.f32.mrf.mxu0
        %v1856 = vadd.f32 %v1648, %v1855
        %1857 = vmatmul.bf16.gmra.mxu0 %v915
        %v1858 = vpop.f32.mrf.mxu0
        %v1859 = vadd.f32 %v1647, %v1858
        %v1860 = vpop.f32.mrf.mxu0
        %v1861 = vadd.f32 %v1646, %v1860
        %1862 = vmatmul.bf16.gmra.mxu0 %v918
        %v1863 = vpop.f32.mrf.mxu0
        %v1864 = vadd.f32 %v1645, %v1863
        %v1865 = vpop.f32.mrf.mxu0
        %v1866 = vadd.f32 %v1644, %v1865
        %1867 = vmatmul.bf16.gmra.mxu0 %v921
        %v1868 = vpop.f32.mrf.mxu0
        %v1869 = vadd.f32 %v1643, %v1868
        %v1870 = vpop.f32.mrf.mxu0
        %v1871 = vadd.f32 %v1642, %v1870
        %1872 = vmatmul.bf16.gmra.mxu0 %v924
        %v1873 = vpop.f32.mrf.mxu0
        %v1874 = vadd.f32 %v1641, %v1873
        %v1875 = vpop.f32.mrf.mxu0
        %v1876 = vadd.f32 %v1640, %v1875
        %1877 = vmatmul.bf16.gmra.mxu0 %v927
        %v1878 = vpop.f32.mrf.mxu0
        %v1879 = vadd.f32 %v1639, %v1878
        %v1880 = vpop.f32.mrf.mxu0
        %v1881 = vadd.f32 %v1638, %v1880
        %1882 = vmatmul.bf16.gmra.mxu0 %v930
        %v1883 = vpop.f32.mrf.mxu0
        %v1884 = vadd.f32 %v1637, %v1883
        %v1885 = vpop.f32.mrf.mxu0
        %v1886 = vadd.f32 %v1636, %v1885
        %1887 = vmatmul.bf16.gmra.mxu0 %v933
        %v1888 = vpop.f32.mrf.mxu0
        %v1889 = vadd.f32 %v1635, %v1888
        %v1890 = vpop.f32.mrf.mxu0
        %v1891 = vadd.f32 %v1634, %v1890
        %1892 = vmatmul.bf16.gmra.mxu0 %v936
        %v1893 = vpop.f32.mrf.mxu0
        %v1894 = vadd.f32 %v1633, %v1893
        %v1895 = vpop.f32.mrf.mxu0
        %v1896 = vadd.f32 %v1632, %v1895
        %1897 = vmatmul.bf16.gmra.mxu0 %v939
        %v1898 = vpop.f32.mrf.mxu0
        %v1899 = vadd.f32 %v1631, %v1898
        %v1900 = vpop.f32.mrf.mxu0
        %v1901 = vadd.f32 %v1630, %v1900
        %1902 = vmatmul.bf16.gmra.mxu0 %v942
        %v1903 = vpop.f32.mrf.mxu0
        %v1904 = vadd.f32 %v1629, %v1903
        %v1905 = vpop.f32.mrf.mxu0
        %v1906 = vadd.f32 %v1628, %v1905
        %1907 = vmatmul.bf16.gmra.mxu0 %v945
        %v1908 = vpop.f32.mrf.mxu0
        %v1909 = vadd.f32 %v1627, %v1908
        %v1910 = vpop.f32.mrf.mxu0
        %v1911 = vadd.f32 %v1626, %v1910
        %1912 = vmatmul.bf16.gmra.mxu0 %v948
        %v1913 = vpop.f32.mrf.mxu0
        %v1914 = vadd.f32 %v1625, %v1913
        %v1915 = vpop.f32.mrf.mxu0
        %v1916 = vadd.f32 %v1624, %v1915
        %1917 = vmatmul.bf16.gmra.mxu0 %v951
        %v1918 = vpop.f32.mrf.mxu0
        %v1919 = vadd.f32 %v1623, %v1918
        %v1920 = vpop.f32.mrf.mxu0
        %v1921 = vadd.f32 %v1622, %v1920
        %1922 = vmatmul.bf16.gmra.mxu0 %v954
        %v1923 = vpop.f32.mrf.mxu0
        %v1924 = vadd.f32 %v1621, %v1923
        %v1925 = vpop.f32.mrf.mxu0
        %v1926 = vadd.f32 %v1620, %v1925
        %1927 = vmatmul.bf16.gmra.mxu0 %v957
        %v1928 = vpop.f32.mrf.mxu0
        %v1929 = vadd.f32 %v1619, %v1928
        %v1930 = vpop.f32.mrf.mxu0
        %v1931 = vadd.f32 %v1618, %v1930
        %1932 = vmatmul.bf16.gmra.mxu0 %v960
        %v1933 = vpop.f32.mrf.mxu0
        %v1934 = vadd.f32 %v1617, %v1933
        %v1935 = vpop.f32.mrf.mxu0
        %v1936 = vadd.f32 %v1664, %v1935
        %1937 = vdwg.mxu0
        %1938 = vmatpush.bf16.msra.mxu0 %v1776
        %1939 = vmatpush.bf16.msra.mxu0 %v1775
        %1940 = vmatpush.bf16.msra.mxu0 %v1774
        %1941 = vmatpush.bf16.msra.mxu0 %v1773
        %1942 = vmatpush.bf16.msra.mxu0 %v1772
        %1943 = vmatpush.bf16.msra.mxu0 %v1771
        %1944 = vmatpush.bf16.msra.mxu0 %v1770
        %1945 = vmatpush.bf16.msra.mxu0 %v1769
        %1946 = vmatmul.bf16.gmra.mxu0 %v892
        %v1947 = vpop.f32.mrf.mxu0
        %v1948 = vadd.f32 %v1819, %v1947
        %v1949 = vpop.f32.mrf.mxu0
        %v1950 = vadd.f32 %v1821, %v1949
        %1951 = vmatmul.bf16.gmra.mxu0 %v895
        %v1952 = vpop.f32.mrf.mxu0
        %v1953 = vadd.f32 %v1824, %v1952
        %v1954 = vpop.f32.mrf.mxu0
        %v1955 = vadd.f32 %v1826, %v1954
        %1956 = vmatmul.bf16.gmra.mxu0 %v898
        %v1957 = vpop.f32.mrf.mxu0
        %v1958 = vadd.f32 %v1829, %v1957
        %v1959 = vpop.f32.mrf.mxu0
        %v1960 = vadd.f32 %v1831, %v1959
        %1961 = vmatmul.bf16.gmra.mxu0 %v901
        %v1962 = vpop.f32.mrf.mxu0
        %v1963 = vadd.f32 %v1834, %v1962
        %v1964 = vpop.f32.mrf.mxu0
        %v1965 = vadd.f32 %v1836, %v1964
        %1966 = vmatmul.bf16.gmra.mxu0 %v904
        %v1967 = vpop.f32.mrf.mxu0
        %v1968 = vadd.f32 %v1839, %v1967
        %v1969 = vpop.f32.mrf.mxu0
        %v1970 = vadd.f32 %v1841, %v1969
        %1971 = vmatmul.bf16.gmra.mxu0 %v907
        %v1972 = vpop.f32.mrf.mxu0
        %v1973 = vadd.f32 %v1844, %v1972
        %v1974 = vpop.f32.mrf.mxu0
        %v1975 = vadd.f32 %v1846, %v1974
        %1976 = vmatmul.bf16.gmra.mxu0 %v910
        %v1977 = vpop.f32.mrf.mxu0
        %v1978 = vadd.f32 %v1849, %v1977
        %v1979 = vpop.f32.mrf.mxu0
        %v1980 = vadd.f32 %v1851, %v1979
        %1981 = vmatmul.bf16.gmra.mxu0 %v913
        %v1982 = vpop.f32.mrf.mxu0
        %v1983 = vadd.f32 %v1854, %v1982
        %v1984 = vpop.f32.mrf.mxu0
        %v1985 = vadd.f32 %v1856, %v1984
        %1986 = vmatmul.bf16.gmra.mxu0 %v916
        %v1987 = vpop.f32.mrf.mxu0
        %v1988 = vadd.f32 %v1859, %v1987
        %v1989 = vpop.f32.mrf.mxu0
        %v1990 = vadd.f32 %v1861, %v1989
        %1991 = vmatmul.bf16.gmra.mxu0 %v919
        %v1992 = vpop.f32.mrf.mxu0
        %v1993 = vadd.f32 %v1864, %v1992
        %v1994 = vpop.f32.mrf.mxu0
        %v1995 = vadd.f32 %v1866, %v1994
        %1996 = vmatmul.bf16.gmra.mxu0 %v922
        %v1997 = vpop.f32.mrf.mxu0
        %v1998 = vadd.f32 %v1869, %v1997
        %v1999 = vpop.f32.mrf.mxu0
        %v2000 = vadd.f32 %v1871, %v1999
        %2001 = vmatmul.bf16.gmra.mxu0 %v925
        %v2002 = vpop.f32.mrf.mxu0
        %v2003 = vadd.f32 %v1874, %v2002
        %v2004 = vpop.f32.mrf.mxu0
        %v2005 = vadd.f32 %v1876, %v2004
        %2006 = vmatmul.bf16.gmra.mxu0 %v928
        %v2007 = vpop.f32.mrf.mxu0
        %v2008 = vadd.f32 %v1879, %v2007
        %v2009 = vpop.f32.mrf.mxu0
        %v2010 = vadd.f32 %v1881, %v2009
        %2011 = vmatmul.bf16.gmra.mxu0 %v931
        %v2012 = vpop.f32.mrf.mxu0
        %v2013 = vadd.f32 %v1884, %v2012
        %v2014 = vpop.f32.mrf.mxu0
        %v2015 = vadd.f32 %v1886, %v2014
        %2016 = vmatmul.bf16.gmra.mxu0 %v934
        %v2017 = vpop.f32.mrf.mxu0
        %v2018 = vadd.f32 %v1889, %v2017
        %v2019 = vpop.f32.mrf.mxu0
        %v2020 = vadd.f32 %v1891, %v2019
        %2021 = vmatmul.bf16.gmra.mxu0 %v937
        %v2022 = vpop.f32.mrf.mxu0
        %v2023 = vadd.f32 %v1894, %v2022
        %v2024 = vpop.f32.mrf.mxu0
        %v2025 = vadd.f32 %v1896, %v2024
        %2026 = vmatmul.bf16.gmra.mxu0 %v940
        %v2027 = vpop.f32.mrf.mxu0
        %v2028 = vadd.f32 %v1899, %v2027
        %v2029 = vpop.f32.mrf.mxu0
        %v2030 = vadd.f32 %v1901, %v2029
        %2031 = vmatmul.bf16.gmra.mxu0 %v943
        %v2032 = vpop.f32.mrf.mxu0
        %v2033 = vadd.f32 %v1904, %v2032
        %v2034 = vpop.f32.mrf.mxu0
        %v2035 = vadd.f32 %v1906, %v2034
        %2036 = vmatmul.bf16.gmra.mxu0 %v946
        %v2037 = vpop.f32.mrf.mxu0
        %v2038 = vadd.f32 %v1909, %v2037
        %v2039 = vpop.f32.mrf.mxu0
        %v2040 = vadd.f32 %v1911, %v2039
        %2041 = vmatmul.bf16.gmra.mxu0 %v949
        %v2042 = vpop.f32.mrf.mxu0
        %v2043 = vadd.f32 %v1914, %v2042
        %v2044 = vpop.f32.mrf.mxu0
        %v2045 = vadd.f32 %v1916, %v2044
        %2046 = vmatmul.bf16.gmra.mxu0 %v952
        %v2047 = vpop.f32.mrf.mxu0
        %v2048 = vadd.f32 %v1919, %v2047
        %v2049 = vpop.f32.mrf.mxu0
        %v2050 = vadd.f32 %v1921, %v2049
        %2051 = vmatmul.bf16.gmra.mxu0 %v955
        %v2052 = vpop.f32.mrf.mxu0
        %v2053 = vadd.f32 %v1924, %v2052
        %v2054 = vpop.f32.mrf.mxu0
        %v2055 = vadd.f32 %v1926, %v2054
        %2056 = vmatmul.bf16.gmra.mxu0 %v958
        %v2057 = vpop.f32.mrf.mxu0
        %v2058 = vadd.f32 %v1929, %v2057
        %v2059 = vpop.f32.mrf.mxu0
        %v2060 = vadd.f32 %v1931, %v2059
        %2061 = vmatmul.bf16.gmra.mxu0 %v961
        %v2062 = vpop.f32.mrf.mxu0
        %v2063 = vadd.f32 %v1934, %v2062
        %v2064 = vpop.f32.mrf.mxu0
        %v2065 = vadd.f32 %v1936, %v2064
        %2066 = vdwg.mxu0
        %2067 = vmatpush.bf16.msra.mxu0 %v1784
        %2068 = vmatpush.bf16.msra.mxu0 %v1783
        %2069 = vmatpush.bf16.msra.mxu0 %v1782
        %2070 = vmatpush.bf16.msra.mxu0 %v1781
        %2071 = vmatpush.bf16.msra.mxu0 %v1780
        %2072 = vmatpush.bf16.msra.mxu0 %v1779
        %2073 = vmatpush.bf16.msra.mxu0 %v1778
        %2074 = vmatpush.bf16.msra.mxu0 %v1777
        %2075 = vmatmul.bf16.gmra.mxu0 %v893
        %v2076 = vpop.f32.mrf.mxu0
        %v2077 = vadd.f32 %v1948, %v2076
        %v2078 = vpop.f32.mrf.mxu0
        %v2079 = vadd.f32 %v1950, %v2078
        %2080 = vmatmul.bf16.gmra.mxu0 %v896
        %v2081 = vpop.f32.mrf.mxu0
        %v2082 = vadd.f32 %v1953, %v2081
        %v2083 = vpop.f32.mrf.mxu0
        %v2084 = vadd.f32 %v1955, %v2083
        %2085 = vmatmul.bf16.gmra.mxu0 %v899
        %v2086 = vpop.f32.mrf.mxu0
        %v2087 = vadd.f32 %v1958, %v2086
        %v2088 = vpop.f32.mrf.mxu0
        %v2089 = vadd.f32 %v1960, %v2088
        %2090 = vmatmul.bf16.gmra.mxu0 %v902
        %v2091 = vpop.f32.mrf.mxu0
        %v2092 = vadd.f32 %v1963, %v2091
        %v2093 = vpop.f32.mrf.mxu0
        %v2094 = vadd.f32 %v1965, %v2093
        %2095 = vmatmul.bf16.gmra.mxu0 %v905
        %v2096 = vpop.f32.mrf.mxu0
        %v2097 = vadd.f32 %v1968, %v2096
        %v2098 = vpop.f32.mrf.mxu0
        %v2099 = vadd.f32 %v1970, %v2098
        %2100 = vmatmul.bf16.gmra.mxu0 %v908
        %v2101 = vpop.f32.mrf.mxu0
        %v2102 = vadd.f32 %v1973, %v2101
        %v2103 = vpop.f32.mrf.mxu0
        %v2104 = vadd.f32 %v1975, %v2103
        %2105 = vmatmul.bf16.gmra.mxu0 %v911
        %v2106 = vpop.f32.mrf.mxu0
        %v2107 = vadd.f32 %v1978, %v2106
        %v2108 = vpop.f32.mrf.mxu0
        %v2109 = vadd.f32 %v1980, %v2108
        %2110 = vmatmul.bf16.gmra.mxu0 %v914
        %v2111 = vpop.f32.mrf.mxu0
        %v2112 = vadd.f32 %v1983, %v2111
        %v2113 = vpop.f32.mrf.mxu0
        %v2114 = vadd.f32 %v1985, %v2113
        %2115 = vmatmul.bf16.gmra.mxu0 %v917
        %v2116 = vpop.f32.mrf.mxu0
        %v2117 = vadd.f32 %v1988, %v2116
        %v2118 = vpop.f32.mrf.mxu0
        %v2119 = vadd.f32 %v1990, %v2118
        %2120 = vmatmul.bf16.gmra.mxu0 %v920
        %v2121 = vpop.f32.mrf.mxu0
        %v2122 = vadd.f32 %v1993, %v2121
        %v2123 = vpop.f32.mrf.mxu0
        %v2124 = vadd.f32 %v1995, %v2123
        %2125 = vmatmul.bf16.gmra.mxu0 %v923
        %v2126 = vpop.f32.mrf.mxu0
        %v2127 = vadd.f32 %v1998, %v2126
        %v2128 = vpop.f32.mrf.mxu0
        %v2129 = vadd.f32 %v2000, %v2128
        %2130 = vmatmul.bf16.gmra.mxu0 %v926
        %v2131 = vpop.f32.mrf.mxu0
        %v2132 = vadd.f32 %v2003, %v2131
        %v2133 = vpop.f32.mrf.mxu0
        %v2134 = vadd.f32 %v2005, %v2133
        %2135 = vmatmul.bf16.gmra.mxu0 %v929
        %v2136 = vpop.f32.mrf.mxu0
        %v2137 = vadd.f32 %v2008, %v2136
        %v2138 = vpop.f32.mrf.mxu0
        %v2139 = vadd.f32 %v2010, %v2138
        %2140 = vmatmul.bf16.gmra.mxu0 %v932
        %v2141 = vpop.f32.mrf.mxu0
        %v2142 = vadd.f32 %v2013, %v2141
        %v2143 = vpop.f32.mrf.mxu0
        %v2144 = vadd.f32 %v2015, %v2143
        %2145 = vmatmul.bf16.gmra.mxu0 %v935
        %v2146 = vpop.f32.mrf.mxu0
        %v2147 = vadd.f32 %v2018, %v2146
        %v2148 = vpop.f32.mrf.mxu0
        %v2149 = vadd.f32 %v2020, %v2148
        %2150 = vmatmul.bf16.gmra.mxu0 %v938
        %v2151 = vpop.f32.mrf.mxu0
        %v2152 = vadd.f32 %v2023, %v2151
        %v2153 = vpop.f32.mrf.mxu0
        %v2154 = vadd.f32 %v2025, %v2153
        %2155 = vmatmul.bf16.gmra.mxu0 %v941
        %v2156 = vpop.f32.mrf.mxu0
        %v2157 = vadd.f32 %v2028, %v2156
        %v2158 = vpop.f32.mrf.mxu0
        %v2159 = vadd.f32 %v2030, %v2158
        %2160 = vmatmul.bf16.gmra.mxu0 %v944
        %v2161 = vpop.f32.mrf.mxu0
        %v2162 = vadd.f32 %v2033, %v2161
        %v2163 = vpop.f32.mrf.mxu0
        %v2164 = vadd.f32 %v2035, %v2163
        %2165 = vmatmul.bf16.gmra.mxu0 %v947
        %v2166 = vpop.f32.mrf.mxu0
        %v2167 = vadd.f32 %v2038, %v2166
        %v2168 = vpop.f32.mrf.mxu0
        %v2169 = vadd.f32 %v2040, %v2168
        %2170 = vmatmul.bf16.gmra.mxu0 %v950
        %v2171 = vpop.f32.mrf.mxu0
        %v2172 = vadd.f32 %v2043, %v2171
        %v2173 = vpop.f32.mrf.mxu0
        %v2174 = vadd.f32 %v2045, %v2173
        %2175 = vmatmul.bf16.gmra.mxu0 %v953
        %v2176 = vpop.f32.mrf.mxu0
        %v2177 = vadd.f32 %v2048, %v2176
        %v2178 = vpop.f32.mrf.mxu0
        %v2179 = vadd.f32 %v2050, %v2178
        %2180 = vmatmul.bf16.gmra.mxu0 %v956
        %v2181 = vpop.f32.mrf.mxu0
        %v2182 = vadd.f32 %v2053, %v2181
        %v2183 = vpop.f32.mrf.mxu0
        %v2184 = vadd.f32 %v2055, %v2183
        %2185 = vmatmul.bf16.gmra.mxu0 %v959
        %v2186 = vpop.f32.mrf.mxu0
        %v2187 = vadd.f32 %v2058, %v2186
        %v2188 = vpop.f32.mrf.mxu0
        %v2189 = vadd.f32 %v2060, %v2188
        %2190 = vmatmul.bf16.gmra.mxu0 %v962
        %v2191 = vpop.f32.mrf.mxu0
        %v2192 = vadd.f32 %v2063, %v2191
        %v2193 = vpop.f32.mrf.mxu0
        %v2194 = vadd.f32 %v2065, %v2193
        %2195 = vdwg.mxu0
        %s2196 = scalar_lea.vmem [#allocation5], 384
        %v2197 = vld [vmem:[%s2196] sm:$0xf]
        %v2198 = vld [vmem:[%s2196 + $0x4] sm:$0xf]
        %v2199 = vld [vmem:[%s2196 + $0x8] sm:$0xf]
        %v2200 = vld [vmem:[%s2196 + $0xc] sm:$0xf]
        %v2201 = vld [vmem:[%s2196 + $0x10] sm:$0xf]
        %v2202 = vld [vmem:[%s2196 + $0x14] sm:$0xf]
        %v2203 = vld [vmem:[%s2196 + $0x18] sm:$0xf]
        %v2204 = vld [vmem:[%s2196 + $0x1c] sm:$0xf]
        %v2205 = vld [vmem:[%s2196 + $0x20] sm:$0xf]
        %v2206 = vld [vmem:[%s2196 + $0x24] sm:$0xf]
        %v2207 = vld [vmem:[%s2196 + $0x28] sm:$0xf]
        %v2208 = vld [vmem:[%s2196 + $0x2c] sm:$0xf]
        %v2209 = vld [vmem:[%s2196 + $0x30] sm:$0xf]
        %v2210 = vld [vmem:[%s2196 + $0x34] sm:$0xf]
        %v2211 = vld [vmem:[%s2196 + $0x38] sm:$0xf]
        %v2212 = vld [vmem:[%s2196 + $0x3c] sm:$0xf]
        %v2213 = vld [vmem:[%s2196 + $0x40] sm:$0xf]
        %v2214 = vld [vmem:[%s2196 + $0x44] sm:$0xf]
        %v2215 = vld [vmem:[%s2196 + $0x48] sm:$0xf]
        %v2216 = vld [vmem:[%s2196 + $0x4c] sm:$0xf]
        %v2217 = vld [vmem:[%s2196 + $0x50] sm:$0xf]
        %v2218 = vld [vmem:[%s2196 + $0x54] sm:$0xf]
        %v2219 = vld [vmem:[%s2196 + $0x58] sm:$0xf]
        %v2220 = vld [vmem:[%s2196 + $0x5c] sm:$0xf]
        %v2221 = vld [vmem:[%s2196 + $0x60] sm:$0xf]
        %v2222 = vld [vmem:[%s2196 + $0x64] sm:$0xf]
        %v2223 = vld [vmem:[%s2196 + $0x68] sm:$0xf]
        %v2224 = vld [vmem:[%s2196 + $0x6c] sm:$0xf]
        %v2225 = vld [vmem:[%s2196 + $0x70] sm:$0xf]
        %v2226 = vld [vmem:[%s2196 + $0x74] sm:$0xf]
        %v2227 = vld [vmem:[%s2196 + $0x78] sm:$0xf]
        %v2228 = vld [vmem:[%s2196 + $0x7c] sm:$0xf]
        %v2229 = vld [vmem:[%s2196 + $0x80] sm:$0xf]
        %v2230 = vld [vmem:[%s2196 + $0x84] sm:$0xf]
        %v2231 = vld [vmem:[%s2196 + $0x88] sm:$0xf]
        %v2232 = vld [vmem:[%s2196 + $0x8c] sm:$0xf]
        %v2233 = vld [vmem:[%s2196 + $0x90] sm:$0xf]
        %v2234 = vld [vmem:[%s2196 + $0x94] sm:$0xf]
        %v2235 = vld [vmem:[%s2196 + $0x98] sm:$0xf]
        %v2236 = vld [vmem:[%s2196 + $0x9c] sm:$0xf]
        %v2237 = vld [vmem:[%s2196 + $0xa0] sm:$0xf]
        %v2238 = vld [vmem:[%s2196 + $0xa4] sm:$0xf]
        %v2239 = vld [vmem:[%s2196 + $0xa8] sm:$0xf]
        %v2240 = vld [vmem:[%s2196 + $0xac] sm:$0xf]
        %v2241 = vld [vmem:[%s2196 + $0xb0] sm:$0xf]
        %v2242 = vld [vmem:[%s2196 + $0xb4] sm:$0xf]
        %v2243 = vld [vmem:[%s2196 + $0xb8] sm:$0xf]
        %v2244 = vld [vmem:[%s2196 + $0xbc] sm:$0xf]
        %v2293 = vunpack.c.l.b16 %v2197
        %v2294 = vunpack.c.l.b16 %v2198
        %v2295 = vunpack.c.l.b16 %v2199
        %v2296 = vunpack.c.l.b16 %v2200
        %v2297 = vunpack.c.l.b16 %v2201
        %v2298 = vunpack.c.l.b16 %v2202
        %v2299 = vunpack.c.l.b16 %v2203
        %v2300 = vunpack.c.l.b16 %v2204
        %v2301 = vunpack.c.l.b16 %v2205
        %v2302 = vunpack.c.l.b16 %v2206
        %v2303 = vunpack.c.l.b16 %v2207
        %v2304 = vunpack.c.l.b16 %v2208
        %v2305 = vunpack.c.l.b16 %v2209
        %v2306 = vunpack.c.l.b16 %v2210
        %v2307 = vunpack.c.l.b16 %v2211
        %v2308 = vunpack.c.l.b16 %v2212
        %v2309 = vunpack.c.l.b16 %v2213
        %v2310 = vunpack.c.l.b16 %v2214
        %v2311 = vunpack.c.l.b16 %v2215
        %v2312 = vunpack.c.l.b16 %v2216
        %v2313 = vunpack.c.l.b16 %v2217
        %v2314 = vunpack.c.l.b16 %v2218
        %v2315 = vunpack.c.l.b16 %v2219
        %v2316 = vunpack.c.l.b16 %v2220
        %v2317 = vunpack.c.l.b16 %v2221
        %v2318 = vunpack.c.l.b16 %v2222
        %v2319 = vunpack.c.l.b16 %v2223
        %v2320 = vunpack.c.l.b16 %v2224
        %v2321 = vunpack.c.l.b16 %v2225
        %v2322 = vunpack.c.l.b16 %v2226
        %v2323 = vunpack.c.l.b16 %v2227
        %v2324 = vunpack.c.l.b16 %v2228
        %v2325 = vunpack.c.l.b16 %v2229
        %v2326 = vunpack.c.l.b16 %v2230
        %v2327 = vunpack.c.l.b16 %v2231
        %v2328 = vunpack.c.l.b16 %v2232
        %v2329 = vunpack.c.l.b16 %v2233
        %v2330 = vunpack.c.l.b16 %v2234
        %v2331 = vunpack.c.l.b16 %v2235
        %v2332 = vunpack.c.l.b16 %v2236
        %v2333 = vunpack.c.l.b16 %v2237
        %v2334 = vunpack.c.l.b16 %v2238
        %v2335 = vunpack.c.l.b16 %v2239
        %v2336 = vunpack.c.l.b16 %v2240
        %v2337 = vunpack.c.l.b16 %v2241
        %v2338 = vunpack.c.l.b16 %v2242
        %v2339 = vunpack.c.l.b16 %v2243
        %v2340 = vunpack.c.l.b16 %v2244
        %v2341 = vpack.c.b16 %v2294, %v2293
        %v2342 = vpack.c.b16 %v2296, %v2295
        %v2343 = vpack.c.b16 %v2298, %v2297
        %v2344 = vpack.c.b16 %v2300, %v2299
        %v2345 = vpack.c.b16 %v2302, %v2301
        %v2346 = vpack.c.b16 %v2304, %v2303
        %v2347 = vpack.c.b16 %v2306, %v2305
        %v2348 = vpack.c.b16 %v2308, %v2307
        %v2349 = vpack.c.b16 %v2310, %v2309
        %v2350 = vpack.c.b16 %v2312, %v2311
        %v2351 = vpack.c.b16 %v2314, %v2313
        %v2352 = vpack.c.b16 %v2316, %v2315
        %v2353 = vpack.c.b16 %v2318, %v2317
        %v2354 = vpack.c.b16 %v2320, %v2319
        %v2355 = vpack.c.b16 %v2322, %v2321
        %v2356 = vpack.c.b16 %v2324, %v2323
        %v2357 = vpack.c.b16 %v2326, %v2325
        %v2358 = vpack.c.b16 %v2328, %v2327
        %v2359 = vpack.c.b16 %v2330, %v2329
        %v2360 = vpack.c.b16 %v2332, %v2331
        %v2361 = vpack.c.b16 %v2334, %v2333
        %v2362 = vpack.c.b16 %v2336, %v2335
        %v2363 = vpack.c.b16 %v2338, %v2337
        %v2364 = vpack.c.b16 %v2340, %v2339
        %2389 = vmatpush.bf16.msra.mxu0 %v2348
        %2390 = vmatpush.bf16.msra.mxu0 %v2347
        %2391 = vmatpush.bf16.msra.mxu0 %v2346
        %2392 = vmatpush.bf16.msra.mxu0 %v2345
        %2393 = vmatpush.bf16.msra.mxu0 %v2344
        %2394 = vmatpush.bf16.msra.mxu0 %v2343
        %2395 = vmatpush.bf16.msra.mxu0 %v2342
        %2396 = vmatpush.bf16.msra.mxu0 %v2341
        %2397 = vmatmul.bf16.gmra.mxu0 %v891
        %v2398 = vpop.f32.mrf.mxu0
        %v2399 = vadd.f32 0.0, %v2398
        %v2400 = vpop.f32.mrf.mxu0
        %v2401 = vadd.f32 0.0, %v2400
        %2402 = vmatmul.bf16.gmra.mxu0 %v894
        %v2403 = vpop.f32.mrf.mxu0
        %v2404 = vadd.f32 0.0, %v2403
        %v2405 = vpop.f32.mrf.mxu0
        %v2406 = vadd.f32 0.0, %v2405
        %2407 = vmatmul.bf16.gmra.mxu0 %v897
        %v2408 = vpop.f32.mrf.mxu0
        %v2409 = vadd.f32 0.0, %v2408
        %v2410 = vpop.f32.mrf.mxu0
        %v2411 = vadd.f32 0.0, %v2410
        %2412 = vmatmul.bf16.gmra.mxu0 %v900
        %v2413 = vpop.f32.mrf.mxu0
        %v2414 = vadd.f32 0.0, %v2413
        %v2415 = vpop.f32.mrf.mxu0
        %v2416 = vadd.f32 0.0, %v2415
        %2417 = vmatmul.bf16.gmra.mxu0 %v903
        %v2418 = vpop.f32.mrf.mxu0
        %v2419 = vadd.f32 0.0, %v2418
        %v2420 = vpop.f32.mrf.mxu0
        %v2421 = vadd.f32 0.0, %v2420
        %2422 = vmatmul.bf16.gmra.mxu0 %v906
        %v2423 = vpop.f32.mrf.mxu0
        %v2424 = vadd.f32 0.0, %v2423
        %v2425 = vpop.f32.mrf.mxu0
        %v2426 = vadd.f32 0.0, %v2425
        %2427 = vmatmul.bf16.gmra.mxu0 %v909
        %v2428 = vpop.f32.mrf.mxu0
        %v2429 = vadd.f32 0.0, %v2428
        %v2430 = vpop.f32.mrf.mxu0
        %v2431 = vadd.f32 0.0, %v2430
        %2432 = vmatmul.bf16.gmra.mxu0 %v912
        %v2433 = vpop.f32.mrf.mxu0
        %v2434 = vadd.f32 0.0, %v2433
        %v2435 = vpop.f32.mrf.mxu0
        %v2436 = vadd.f32 0.0, %v2435
        %2437 = vmatmul.bf16.gmra.mxu0 %v915
        %v2438 = vpop.f32.mrf.mxu0
        %v2439 = vadd.f32 0.0, %v2438
        %v2440 = vpop.f32.mrf.mxu0
        %v2441 = vadd.f32 0.0, %v2440
        %2442 = vmatmul.bf16.gmra.mxu0 %v918
        %v2443 = vpop.f32.mrf.mxu0
        %v2444 = vadd.f32 0.0, %v2443
        %v2445 = vpop.f32.mrf.mxu0
        %v2446 = vadd.f32 0.0, %v2445
        %2447 = vmatmul.bf16.gmra.mxu0 %v921
        %v2448 = vpop.f32.mrf.mxu0
        %v2449 = vadd.f32 0.0, %v2448
        %v2450 = vpop.f32.mrf.mxu0
        %v2451 = vadd.f32 0.0, %v2450
        %2452 = vmatmul.bf16.gmra.mxu0 %v924
        %v2453 = vpop.f32.mrf.mxu0
        %v2454 = vadd.f32 0.0, %v2453
        %v2455 = vpop.f32.mrf.mxu0
        %v2456 = vadd.f32 0.0, %v2455
        %2457 = vmatmul.bf16.gmra.mxu0 %v927
        %v2458 = vpop.f32.mrf.mxu0
        %v2459 = vadd.f32 0.0, %v2458
        %v2460 = vpop.f32.mrf.mxu0
        %v2461 = vadd.f32 0.0, %v2460
        %2462 = vmatmul.bf16.gmra.mxu0 %v930
        %v2463 = vpop.f32.mrf.mxu0
        %v2464 = vadd.f32 0.0, %v2463
        %v2465 = vpop.f32.mrf.mxu0
        %v2466 = vadd.f32 0.0, %v2465
        %2467 = vmatmul.bf16.gmra.mxu0 %v933
        %v2468 = vpop.f32.mrf.mxu0
        %v2469 = vadd.f32 0.0, %v2468
        %v2470 = vpop.f32.mrf.mxu0
        %v2471 = vadd.f32 0.0, %v2470
        %2472 = vmatmul.bf16.gmra.mxu0 %v936
        %v2473 = vpop.f32.mrf.mxu0
        %v2474 = vadd.f32 0.0, %v2473
        %v2475 = vpop.f32.mrf.mxu0
        %v2476 = vadd.f32 0.0, %v2475
        %2477 = vmatmul.bf16.gmra.mxu0 %v939
        %v2478 = vpop.f32.mrf.mxu0
        %v2479 = vadd.f32 0.0, %v2478
        %v2480 = vpop.f32.mrf.mxu0
        %v2481 = vadd.f32 0.0, %v2480
        %2482 = vmatmul.bf16.gmra.mxu0 %v942
        %v2483 = vpop.f32.mrf.mxu0
        %v2484 = vadd.f32 0.0, %v2483
        %v2485 = vpop.f32.mrf.mxu0
        %v2486 = vadd.f32 0.0, %v2485
        %2487 = vmatmul.bf16.gmra.mxu0 %v945
        %v2488 = vpop.f32.mrf.mxu0
        %v2489 = vadd.f32 0.0, %v2488
        %v2490 = vpop.f32.mrf.mxu0
        %v2491 = vadd.f32 0.0, %v2490
        %2492 = vmatmul.bf16.gmra.mxu0 %v948
        %v2493 = vpop.f32.mrf.mxu0
        %v2494 = vadd.f32 0.0, %v2493
        %v2495 = vpop.f32.mrf.mxu0
        %v2496 = vadd.f32 0.0, %v2495
        %2497 = vmatmul.bf16.gmra.mxu0 %v951
        %v2498 = vpop.f32.mrf.mxu0
        %v2499 = vadd.f32 0.0, %v2498
        %v2500 = vpop.f32.mrf.mxu0
        %v2501 = vadd.f32 0.0, %v2500
        %2502 = vmatmul.bf16.gmra.mxu0 %v954
        %v2503 = vpop.f32.mrf.mxu0
        %v2504 = vadd.f32 0.0, %v2503
        %v2505 = vpop.f32.mrf.mxu0
        %v2506 = vadd.f32 0.0, %v2505
        %2507 = vmatmul.bf16.gmra.mxu0 %v957
        %v2508 = vpop.f32.mrf.mxu0
        %v2509 = vadd.f32 0.0, %v2508
        %v2510 = vpop.f32.mrf.mxu0
        %v2511 = vadd.f32 0.0, %v2510
        %2512 = vmatmul.bf16.gmra.mxu0 %v960
        %v2513 = vpop.f32.mrf.mxu0
        %v2514 = vadd.f32 0.0, %v2513
        %v2515 = vpop.f32.mrf.mxu0
        %v2516 = vadd.f32 0.0, %v2515
        %2517 = vdwg.mxu0
        %2518 = vmatpush.bf16.msra.mxu0 %v2356
        %2519 = vmatpush.bf16.msra.mxu0 %v2355
        %2520 = vmatpush.bf16.msra.mxu0 %v2354
        %2521 = vmatpush.bf16.msra.mxu0 %v2353
        %2522 = vmatpush.bf16.msra.mxu0 %v2352
        %2523 = vmatpush.bf16.msra.mxu0 %v2351
        %2524 = vmatpush.bf16.msra.mxu0 %v2350
        %2525 = vmatpush.bf16.msra.mxu0 %v2349
        %2526 = vmatmul.bf16.gmra.mxu0 %v892
        %v2527 = vpop.f32.mrf.mxu0
        %v2528 = vadd.f32 %v2399, %v2527
        %v2529 = vpop.f32.mrf.mxu0
        %v2530 = vadd.f32 %v2401, %v2529
        %2531 = vmatmul.bf16.gmra.mxu0 %v895
        %v2532 = vpop.f32.mrf.mxu0
        %v2533 = vadd.f32 %v2404, %v2532
        %v2534 = vpop.f32.mrf.mxu0
        %v2535 = vadd.f32 %v2406, %v2534
        %2536 = vmatmul.bf16.gmra.mxu0 %v898
        %v2537 = vpop.f32.mrf.mxu0
        %v2538 = vadd.f32 %v2409, %v2537
        %v2539 = vpop.f32.mrf.mxu0
        %v2540 = vadd.f32 %v2411, %v2539
        %2541 = vmatmul.bf16.gmra.mxu0 %v901
        %v2542 = vpop.f32.mrf.mxu0
        %v2543 = vadd.f32 %v2414, %v2542
        %v2544 = vpop.f32.mrf.mxu0
        %v2545 = vadd.f32 %v2416, %v2544
        %2546 = vmatmul.bf16.gmra.mxu0 %v904
        %v2547 = vpop.f32.mrf.mxu0
        %v2548 = vadd.f32 %v2419, %v2547
        %v2549 = vpop.f32.mrf.mxu0
        %v2550 = vadd.f32 %v2421, %v2549
        %2551 = vmatmul.bf16.gmra.mxu0 %v907
        %v2552 = vpop.f32.mrf.mxu0
        %v2553 = vadd.f32 %v2424, %v2552
        %v2554 = vpop.f32.mrf.mxu0
        %v2555 = vadd.f32 %v2426, %v2554
        %2556 = vmatmul.bf16.gmra.mxu0 %v910
        %v2557 = vpop.f32.mrf.mxu0
        %v2558 = vadd.f32 %v2429, %v2557
        %v2559 = vpop.f32.mrf.mxu0
        %v2560 = vadd.f32 %v2431, %v2559
        %2561 = vmatmul.bf16.gmra.mxu0 %v913
        %v2562 = vpop.f32.mrf.mxu0
        %v2563 = vadd.f32 %v2434, %v2562
        %v2564 = vpop.f32.mrf.mxu0
        %v2565 = vadd.f32 %v2436, %v2564
        %2566 = vmatmul.bf16.gmra.mxu0 %v916
        %v2567 = vpop.f32.mrf.mxu0
        %v2568 = vadd.f32 %v2439, %v2567
        %v2569 = vpop.f32.mrf.mxu0
        %v2570 = vadd.f32 %v2441, %v2569
        %2571 = vmatmul.bf16.gmra.mxu0 %v919
        %v2572 = vpop.f32.mrf.mxu0
        %v2573 = vadd.f32 %v2444, %v2572
        %v2574 = vpop.f32.mrf.mxu0
        %v2575 = vadd.f32 %v2446, %v2574
        %2576 = vmatmul.bf16.gmra.mxu0 %v922
        %v2577 = vpop.f32.mrf.mxu0
        %v2578 = vadd.f32 %v2449, %v2577
        %v2579 = vpop.f32.mrf.mxu0
        %v2580 = vadd.f32 %v2451, %v2579
        %2581 = vmatmul.bf16.gmra.mxu0 %v925
        %v2582 = vpop.f32.mrf.mxu0
        %v2583 = vadd.f32 %v2454, %v2582
        %v2584 = vpop.f32.mrf.mxu0
        %v2585 = vadd.f32 %v2456, %v2584
        %2586 = vmatmul.bf16.gmra.mxu0 %v928
        %v2587 = vpop.f32.mrf.mxu0
        %v2588 = vadd.f32 %v2459, %v2587
        %v2589 = vpop.f32.mrf.mxu0
        %v2590 = vadd.f32 %v2461, %v2589
        %2591 = vmatmul.bf16.gmra.mxu0 %v931
        %v2592 = vpop.f32.mrf.mxu0
        %v2593 = vadd.f32 %v2464, %v2592
        %v2594 = vpop.f32.mrf.mxu0
        %v2595 = vadd.f32 %v2466, %v2594
        %2596 = vmatmul.bf16.gmra.mxu0 %v934
        %v2597 = vpop.f32.mrf.mxu0
        %v2598 = vadd.f32 %v2469, %v2597
        %v2599 = vpop.f32.mrf.mxu0
        %v2600 = vadd.f32 %v2471, %v2599
        %2601 = vmatmul.bf16.gmra.mxu0 %v937
        %v2602 = vpop.f32.mrf.mxu0
        %v2603 = vadd.f32 %v2474, %v2602
        %v2604 = vpop.f32.mrf.mxu0
        %v2605 = vadd.f32 %v2476, %v2604
        %2606 = vmatmul.bf16.gmra.mxu0 %v940
        %v2607 = vpop.f32.mrf.mxu0
        %v2608 = vadd.f32 %v2479, %v2607
        %v2609 = vpop.f32.mrf.mxu0
        %v2610 = vadd.f32 %v2481, %v2609
        %2611 = vmatmul.bf16.gmra.mxu0 %v943
        %v2612 = vpop.f32.mrf.mxu0
        %v2613 = vadd.f32 %v2484, %v2612
        %v2614 = vpop.f32.mrf.mxu0
        %v2615 = vadd.f32 %v2486, %v2614
        %2616 = vmatmul.bf16.gmra.mxu0 %v946
        %v2617 = vpop.f32.mrf.mxu0
        %v2618 = vadd.f32 %v2489, %v2617
        %v2619 = vpop.f32.mrf.mxu0
        %v2620 = vadd.f32 %v2491, %v2619
        %2621 = vmatmul.bf16.gmra.mxu0 %v949
        %v2622 = vpop.f32.mrf.mxu0
        %v2623 = vadd.f32 %v2494, %v2622
        %v2624 = vpop.f32.mrf.mxu0
        %v2625 = vadd.f32 %v2496, %v2624
        %2626 = vmatmul.bf16.gmra.mxu0 %v952
        %v2627 = vpop.f32.mrf.mxu0
        %v2628 = vadd.f32 %v2499, %v2627
        %v2629 = vpop.f32.mrf.mxu0
        %v2630 = vadd.f32 %v2501, %v2629
        %2631 = vmatmul.bf16.gmra.mxu0 %v955
        %v2632 = vpop.f32.mrf.mxu0
        %v2633 = vadd.f32 %v2504, %v2632
        %v2634 = vpop.f32.mrf.mxu0
        %v2635 = vadd.f32 %v2506, %v2634
        %2636 = vmatmul.bf16.gmra.mxu0 %v958
        %v2637 = vpop.f32.mrf.mxu0
        %v2638 = vadd.f32 %v2509, %v2637
        %v2639 = vpop.f32.mrf.mxu0
        %v2640 = vadd.f32 %v2511, %v2639
        %2641 = vmatmul.bf16.gmra.mxu0 %v961
        %v2642 = vpop.f32.mrf.mxu0
        %v2643 = vadd.f32 %v2514, %v2642
        %v2644 = vpop.f32.mrf.mxu0
        %v2645 = vadd.f32 %v2516, %v2644
        %2646 = vdwg.mxu0
        %2647 = vmatpush.bf16.msra.mxu0 %v2364
        %2648 = vmatpush.bf16.msra.mxu0 %v2363
        %2649 = vmatpush.bf16.msra.mxu0 %v2362
        %2650 = vmatpush.bf16.msra.mxu0 %v2361
        %2651 = vmatpush.bf16.msra.mxu0 %v2360
        %2652 = vmatpush.bf16.msra.mxu0 %v2359
        %2653 = vmatpush.bf16.msra.mxu0 %v2358
        %2654 = vmatpush.bf16.msra.mxu0 %v2357
        %2655 = vmatmul.bf16.gmra.mxu0 %v893
        %v2656 = vpop.f32.mrf.mxu0
        %v2657 = vadd.f32 %v2528, %v2656
        %v2658 = vpop.f32.mrf.mxu0
        %v2659 = vadd.f32 %v2530, %v2658
        %2660 = vmatmul.bf16.gmra.mxu0 %v896
        %v2661 = vpop.f32.mrf.mxu0
        %v2662 = vadd.f32 %v2533, %v2661
        %v2663 = vpop.f32.mrf.mxu0
        %v2664 = vadd.f32 %v2535, %v2663
        %2665 = vmatmul.bf16.gmra.mxu0 %v899
        %v2666 = vpop.f32.mrf.mxu0
        %v2667 = vadd.f32 %v2538, %v2666
        %v2668 = vpop.f32.mrf.mxu0
        %v2669 = vadd.f32 %v2540, %v2668
        %2670 = vmatmul.bf16.gmra.mxu0 %v902
        %v2671 = vpop.f32.mrf.mxu0
        %v2672 = vadd.f32 %v2543, %v2671
        %v2673 = vpop.f32.mrf.mxu0
        %v2674 = vadd.f32 %v2545, %v2673
        %2675 = vmatmul.bf16.gmra.mxu0 %v905
        %v2676 = vpop.f32.mrf.mxu0
        %v2677 = vadd.f32 %v2548, %v2676
        %v2678 = vpop.f32.mrf.mxu0
        %v2679 = vadd.f32 %v2550, %v2678
        %2680 = vmatmul.bf16.gmra.mxu0 %v908
        %v2681 = vpop.f32.mrf.mxu0
        %v2682 = vadd.f32 %v2553, %v2681
        %v2683 = vpop.f32.mrf.mxu0
        %v2684 = vadd.f32 %v2555, %v2683
        %2685 = vmatmul.bf16.gmra.mxu0 %v911
        %v2686 = vpop.f32.mrf.mxu0
        %v2687 = vadd.f32 %v2558, %v2686
        %v2688 = vpop.f32.mrf.mxu0
        %v2689 = vadd.f32 %v2560, %v2688
        %2690 = vmatmul.bf16.gmra.mxu0 %v914
        %v2691 = vpop.f32.mrf.mxu0
        %v2692 = vadd.f32 %v2563, %v2691
        %v2693 = vpop.f32.mrf.mxu0
        %v2694 = vadd.f32 %v2565, %v2693
        %2695 = vmatmul.bf16.gmra.mxu0 %v917
        %v2696 = vpop.f32.mrf.mxu0
        %v2697 = vadd.f32 %v2568, %v2696
        %v2698 = vpop.f32.mrf.mxu0
        %v2699 = vadd.f32 %v2570, %v2698
        %2700 = vmatmul.bf16.gmra.mxu0 %v920
        %v2701 = vpop.f32.mrf.mxu0
        %v2702 = vadd.f32 %v2573, %v2701
        %v2703 = vpop.f32.mrf.mxu0
        %v2704 = vadd.f32 %v2575, %v2703
        %2705 = vmatmul.bf16.gmra.mxu0 %v923
        %v2706 = vpop.f32.mrf.mxu0
        %v2707 = vadd.f32 %v2578, %v2706
        %v2708 = vpop.f32.mrf.mxu0
        %v2709 = vadd.f32 %v2580, %v2708
        %2710 = vmatmul.bf16.gmra.mxu0 %v926
        %v2711 = vpop.f32.mrf.mxu0
        %v2712 = vadd.f32 %v2583, %v2711
        %v2713 = vpop.f32.mrf.mxu0
        %v2714 = vadd.f32 %v2585, %v2713
        %2715 = vmatmul.bf16.gmra.mxu0 %v929
        %v2716 = vpop.f32.mrf.mxu0
        %v2717 = vadd.f32 %v2588, %v2716
        %v2718 = vpop.f32.mrf.mxu0
        %v2719 = vadd.f32 %v2590, %v2718
        %2720 = vmatmul.bf16.gmra.mxu0 %v932
        %v2721 = vpop.f32.mrf.mxu0
        %v2722 = vadd.f32 %v2593, %v2721
        %v2723 = vpop.f32.mrf.mxu0
        %v2724 = vadd.f32 %v2595, %v2723
        %2725 = vmatmul.bf16.gmra.mxu0 %v935
        %v2726 = vpop.f32.mrf.mxu0
        %v2727 = vadd.f32 %v2598, %v2726
        %v2728 = vpop.f32.mrf.mxu0
        %v2729 = vadd.f32 %v2600, %v2728
        %2730 = vmatmul.bf16.gmra.mxu0 %v938
        %v2731 = vpop.f32.mrf.mxu0
        %v2732 = vadd.f32 %v2603, %v2731
        %v2733 = vpop.f32.mrf.mxu0
        %v2734 = vadd.f32 %v2605, %v2733
        %2735 = vmatmul.bf16.gmra.mxu0 %v941
        %v2736 = vpop.f32.mrf.mxu0
        %v2737 = vadd.f32 %v2608, %v2736
        %v2738 = vpop.f32.mrf.mxu0
        %v2739 = vadd.f32 %v2610, %v2738
        %2740 = vmatmul.bf16.gmra.mxu0 %v944
        %v2741 = vpop.f32.mrf.mxu0
        %v2742 = vadd.f32 %v2613, %v2741
        %v2743 = vpop.f32.mrf.mxu0
        %v2744 = vadd.f32 %v2615, %v2743
        %2745 = vmatmul.bf16.gmra.mxu0 %v947
        %v2746 = vpop.f32.mrf.mxu0
        %v2747 = vadd.f32 %v2618, %v2746
        %v2748 = vpop.f32.mrf.mxu0
        %v2749 = vadd.f32 %v2620, %v2748
        %2750 = vmatmul.bf16.gmra.mxu0 %v950
        %v2751 = vpop.f32.mrf.mxu0
        %v2752 = vadd.f32 %v2623, %v2751
        %v2753 = vpop.f32.mrf.mxu0
        %v2754 = vadd.f32 %v2625, %v2753
        %2755 = vmatmul.bf16.gmra.mxu0 %v953
        %v2756 = vpop.f32.mrf.mxu0
        %v2757 = vadd.f32 %v2628, %v2756
        %v2758 = vpop.f32.mrf.mxu0
        %v2759 = vadd.f32 %v2630, %v2758
        %2760 = vmatmul.bf16.gmra.mxu0 %v956
        %v2761 = vpop.f32.mrf.mxu0
        %v2762 = vadd.f32 %v2633, %v2761
        %v2763 = vpop.f32.mrf.mxu0
        %v2764 = vadd.f32 %v2635, %v2763
        %2765 = vmatmul.bf16.gmra.mxu0 %v959
        %v2766 = vpop.f32.mrf.mxu0
        %v2767 = vadd.f32 %v2638, %v2766
        %v2768 = vpop.f32.mrf.mxu0
        %v2769 = vadd.f32 %v2640, %v2768
        %2770 = vmatmul.bf16.gmra.mxu0 %v962
        %v2771 = vpop.f32.mrf.mxu0
        %v2772 = vadd.f32 %v2643, %v2771
        %v2773 = vpop.f32.mrf.mxu0
        %v2774 = vadd.f32 %v2645, %v2773
        %2775 = vdwg.mxu0
        %v2776 = vrot.slane %v2657, 2
        %v2777 = vrot.slane %v2659, 2
        %v2778 = vrot.slane %v2662, 2
        %v2779 = vrot.slane %v2664, 2
        %v2780 = vrot.slane %v2667, 2
        %v2781 = vrot.slane %v2669, 2
        %v2782 = vrot.slane %v2672, 2
        %v2783 = vrot.slane %v2674, 2
        %v2784 = vrot.slane %v2677, 2
        %v2785 = vrot.slane %v2679, 2
        %v2786 = vrot.slane %v2682, 2
        %v2787 = vrot.slane %v2684, 2
        %v2788 = vrot.slane %v2687, 2
        %v2789 = vrot.slane %v2689, 2
        %v2790 = vrot.slane %v2692, 2
        %v2791 = vrot.slane %v2694, 2
        %v2792 = vrot.slane %v2697, 2
        %v2793 = vrot.slane %v2699, 2
        %v2794 = vrot.slane %v2702, 2
        %v2795 = vrot.slane %v2704, 2
        %v2796 = vrot.slane %v2707, 2
        %v2797 = vrot.slane %v2709, 2
        %v2798 = vrot.slane %v2712, 2
        %v2799 = vrot.slane %v2714, 2
        %v2800 = vrot.slane %v2717, 2
        %v2801 = vrot.slane %v2719, 2
        %v2802 = vrot.slane %v2722, 2
        %v2803 = vrot.slane %v2724, 2
        %v2804 = vrot.slane %v2727, 2
        %v2805 = vrot.slane %v2729, 2
        %v2806 = vrot.slane %v2732, 2
        %v2807 = vrot.slane %v2734, 2
        %v2808 = vrot.slane %v2737, 2
        %v2809 = vrot.slane %v2739, 2
        %v2810 = vrot.slane %v2742, 2
        %v2811 = vrot.slane %v2744, 2
        %v2812 = vrot.slane %v2747, 2
        %v2813 = vrot.slane %v2749, 2
        %v2814 = vrot.slane %v2752, 2
        %v2815 = vrot.slane %v2754, 2
        %v2816 = vrot.slane %v2757, 2
        %v2817 = vrot.slane %v2759, 2
        %v2818 = vrot.slane %v2762, 2
        %v2819 = vrot.slane %v2764, 2
        %v2820 = vrot.slane %v2767, 2
        %v2821 = vrot.slane %v2769, 2
        %v2822 = vrot.slane %v2772, 2
        %v2823 = vrot.slane %v2774, 2
        %vm2824 = vcmp.lt.s32.totalorder %v1615, 6
        %v2825 = vsel %vm2824, %v2822, %v2823
        %v2826 = vsel %vm2824, %v2821, %v2822
        %v2827 = vsel %vm2824, %v2820, %v2821
        %v2828 = vsel %vm2824, %v2819, %v2820
        %v2829 = vsel %vm2824, %v2818, %v2819
        %v2830 = vsel %vm2824, %v2817, %v2818
        %v2831 = vsel %vm2824, %v2816, %v2817
        %v2832 = vsel %vm2824, %v2815, %v2816
        %v2833 = vsel %vm2824, %v2814, %v2815
        %v2834 = vsel %vm2824, %v2813, %v2814
        %v2835 = vsel %vm2824, %v2812, %v2813
        %v2836 = vsel %vm2824, %v2811, %v2812
        %v2837 = vsel %vm2824, %v2810, %v2811
        %v2838 = vsel %vm2824, %v2809, %v2810
        %v2839 = vsel %vm2824, %v2808, %v2809
        %v2840 = vsel %vm2824, %v2807, %v2808
        %v2841 = vsel %vm2824, %v2806, %v2807
        %v2842 = vsel %vm2824, %v2805, %v2806
        %v2843 = vsel %vm2824, %v2804, %v2805
        %v2844 = vsel %vm2824, %v2803, %v2804
        %v2845 = vsel %vm2824, %v2802, %v2803
        %v2846 = vsel %vm2824, %v2801, %v2802
        %v2847 = vsel %vm2824, %v2800, %v2801
        %v2848 = vsel %vm2824, %v2799, %v2800
        %v2849 = vsel %vm2824, %v2798, %v2799
        %v2850 = vsel %vm2824, %v2797, %v2798
        %v2851 = vsel %vm2824, %v2796, %v2797
        %v2852 = vsel %vm2824, %v2795, %v2796
        %v2853 = vsel %vm2824, %v2794, %v2795
        %v2854 = vsel %vm2824, %v2793, %v2794
        %v2855 = vsel %vm2824, %v2792, %v2793
        %v2856 = vsel %vm2824, %v2791, %v2792
        %v2857 = vsel %vm2824, %v2790, %v2791
        %v2858 = vsel %vm2824, %v2789, %v2790
        %v2859 = vsel %vm2824, %v2788, %v2789
        %v2860 = vsel %vm2824, %v2787, %v2788
        %v2861 = vsel %vm2824, %v2786, %v2787
        %v2862 = vsel %vm2824, %v2785, %v2786
        %v2863 = vsel %vm2824, %v2784, %v2785
        %v2864 = vsel %vm2824, %v2783, %v2784
        %v2865 = vsel %vm2824, %v2782, %v2783
        %v2866 = vsel %vm2824, %v2781, %v2782
        %v2867 = vsel %vm2824, %v2780, %v2781
        %v2868 = vsel %vm2824, %v2779, %v2780
        %v2869 = vsel %vm2824, %v2778, %v2779
        %v2870 = vsel %vm2824, %v2777, %v2778
        %v2871 = vsel %vm2824, %v2776, %v2777
        %v2872 = vsel %vm2824, %v2823, %v2776
        %v2873 = vadd.f32 %v2077, %v2871
        %v2874 = vadd.f32 %v2079, %v2870
        %v2875 = vadd.f32 %v2082, %v2869
        %v2876 = vadd.f32 %v2084, %v2868
        %v2877 = vadd.f32 %v2087, %v2867
        %v2878 = vadd.f32 %v2089, %v2866
        %v2879 = vadd.f32 %v2092, %v2865
        %v2880 = vadd.f32 %v2094, %v2864
        %v2881 = vadd.f32 %v2097, %v2863
        %v2882 = vadd.f32 %v2099, %v2862
        %v2883 = vadd.f32 %v2102, %v2861
        %v2884 = vadd.f32 %v2104, %v2860
        %v2885 = vadd.f32 %v2107, %v2859
        %v2886 = vadd.f32 %v2109, %v2858
        %v2887 = vadd.f32 %v2112, %v2857
        %v2888 = vadd.f32 %v2114, %v2856
        %v2889 = vadd.f32 %v2117, %v2855
        %v2890 = vadd.f32 %v2119, %v2854
        %v2891 = vadd.f32 %v2122, %v2853
        %v2892 = vadd.f32 %v2124, %v2852
        %v2893 = vadd.f32 %v2127, %v2851
        %v2894 = vadd.f32 %v2129, %v2850
        %v2895 = vadd.f32 %v2132, %v2849
        %v2896 = vadd.f32 %v2134, %v2848
        %v2897 = vadd.f32 %v2137, %v2847
        %v2898 = vadd.f32 %v2139, %v2846
        %v2899 = vadd.f32 %v2142, %v2845
        %v2900 = vadd.f32 %v2144, %v2844
        %v2901 = vadd.f32 %v2147, %v2843
        %v2902 = vadd.f32 %v2149, %v2842
        %v2903 = vadd.f32 %v2152, %v2841
        %v2904 = vadd.f32 %v2154, %v2840
        %v2905 = vadd.f32 %v2157, %v2839
        %v2906 = vadd.f32 %v2159, %v2838
        %v2907 = vadd.f32 %v2162, %v2837
        %v2908 = vadd.f32 %v2164, %v2836
        %v2909 = vadd.f32 %v2167, %v2835
        %v2910 = vadd.f32 %v2169, %v2834
        %v2911 = vadd.f32 %v2172, %v2833
        %v2912 = vadd.f32 %v2174, %v2832
        %v2913 = vadd.f32 %v2177, %v2831
        %v2914 = vadd.f32 %v2179, %v2830
        %v2915 = vadd.f32 %v2182, %v2829
        %v2916 = vadd.f32 %v2184, %v2828
        %v2917 = vadd.f32 %v2187, %v2827
        %v2918 = vadd.f32 %v2189, %v2826
        %v2919 = vadd.f32 %v2192, %v2825
        %v2920 = vadd.f32 %v2194, %v2872
        %v2921 = vld [vmem:[%s3] sm:$0x1]
        %v2923 = vperm.slane %v2921, 0
        %v2925 = vmul.f32 %v2873, %v2923
        %v2926 = vmul.f32 %v2874, %v2923
        %v2927 = vmul.f32 %v2875, %v2923
        %v2928 = vmul.f32 %v2876, %v2923
        %v2929 = vmul.f32 %v2877, %v2923
        %v2930 = vmul.f32 %v2878, %v2923
        %v2931 = vmul.f32 %v2879, %v2923
        %v2932 = vmul.f32 %v2880, %v2923
        %v2933 = vmul.f32 %v2881, %v2923
        %v2934 = vmul.f32 %v2882, %v2923
        %v2935 = vmul.f32 %v2883, %v2923
        %v2936 = vmul.f32 %v2884, %v2923
        %v2937 = vmul.f32 %v2885, %v2923
        %v2938 = vmul.f32 %v2886, %v2923
        %v2939 = vmul.f32 %v2887, %v2923
        %v2940 = vmul.f32 %v2888, %v2923
        %v2941 = vmul.f32 %v2889, %v2923
        %v2942 = vmul.f32 %v2890, %v2923
        %v2943 = vmul.f32 %v2891, %v2923
        %v2944 = vmul.f32 %v2892, %v2923
        %v2945 = vmul.f32 %v2893, %v2923
        %v2946 = vmul.f32 %v2894, %v2923
        %v2947 = vmul.f32 %v2895, %v2923
        %v2948 = vmul.f32 %v2896, %v2923
        %v2949 = vmul.f32 %v2897, %v2923
        %v2950 = vmul.f32 %v2898, %v2923
        %v2951 = vmul.f32 %v2899, %v2923
        %v2952 = vmul.f32 %v2900, %v2923
        %v2953 = vmul.f32 %v2901, %v2923
        %v2954 = vmul.f32 %v2902, %v2923
        %v2955 = vmul.f32 %v2903, %v2923
        %v2956 = vmul.f32 %v2904, %v2923
        %v2957 = vmul.f32 %v2905, %v2923
        %v2958 = vmul.f32 %v2906, %v2923
        %v2959 = vmul.f32 %v2907, %v2923
        %v2960 = vmul.f32 %v2908, %v2923
        %v2961 = vmul.f32 %v2909, %v2923
        %v2962 = vmul.f32 %v2910, %v2923
        %v2963 = vmul.f32 %v2911, %v2923
        %v2964 = vmul.f32 %v2912, %v2923
        %v2965 = vmul.f32 %v2913, %v2923
        %v2966 = vmul.f32 %v2914, %v2923
        %v2967 = vmul.f32 %v2915, %v2923
        %v2968 = vmul.f32 %v2916, %v2923
        %v2969 = vmul.f32 %v2917, %v2923
        %v2970 = vmul.f32 %v2918, %v2923
        %v2971 = vmul.f32 %v2919, %v2923
        %v2972 = vmul.f32 %v2920, %v2923
        %v2973 = vld [vmem:[%s4] sm:$0x1]
        %v2975 = vperm.slane %v2973, 0
        %v2977 = vadd.f32 %v2925, %v2975
        %v2978 = vadd.f32 %v2926, %v2975
        %v2979 = vadd.f32 %v2927, %v2975
        %v2980 = vadd.f32 %v2928, %v2975
        %v2981 = vadd.f32 %v2929, %v2975
        %v2982 = vadd.f32 %v2930, %v2975
        %v2983 = vadd.f32 %v2931, %v2975
        %v2984 = vadd.f32 %v2932, %v2975
        %v2985 = vadd.f32 %v2933, %v2975
        %v2986 = vadd.f32 %v2934, %v2975
        %v2987 = vadd.f32 %v2935, %v2975
        %v2988 = vadd.f32 %v2936, %v2975
        %v2989 = vadd.f32 %v2937, %v2975
        %v2990 = vadd.f32 %v2938, %v2975
        %v2991 = vadd.f32 %v2939, %v2975
        %v2992 = vadd.f32 %v2940, %v2975
        %v2993 = vadd.f32 %v2941, %v2975
        %v2994 = vadd.f32 %v2942, %v2975
        %v2995 = vadd.f32 %v2943, %v2975
        %v2996 = vadd.f32 %v2944, %v2975
        %v2997 = vadd.f32 %v2945, %v2975
        %v2998 = vadd.f32 %v2946, %v2975
        %v2999 = vadd.f32 %v2947, %v2975
        %v3000 = vadd.f32 %v2948, %v2975
        %v3001 = vadd.f32 %v2949, %v2975
        %v3002 = vadd.f32 %v2950, %v2975
        %v3003 = vadd.f32 %v2951, %v2975
        %v3004 = vadd.f32 %v2952, %v2975
        %v3005 = vadd.f32 %v2953, %v2975
        %v3006 = vadd.f32 %v2954, %v2975
        %v3007 = vadd.f32 %v2955, %v2975
        %v3008 = vadd.f32 %v2956, %v2975
        %v3009 = vadd.f32 %v2957, %v2975
        %v3010 = vadd.f32 %v2958, %v2975
        %v3011 = vadd.f32 %v2959, %v2975
        %v3012 = vadd.f32 %v2960, %v2975
        %v3013 = vadd.f32 %v2961, %v2975
        %v3014 = vadd.f32 %v2962, %v2975
        %v3015 = vadd.f32 %v2963, %v2975
        %v3016 = vadd.f32 %v2964, %v2975
        %v3017 = vadd.f32 %v2965, %v2975
        %v3018 = vadd.f32 %v2966, %v2975
        %v3019 = vadd.f32 %v2967, %v2975
        %v3020 = vadd.f32 %v2968, %v2975
        %v3021 = vadd.f32 %v2969, %v2975
        %v3022 = vadd.f32 %v2970, %v2975
        %v3023 = vadd.f32 %v2971, %v2975
        %v3024 = vadd.f32 %v2972, %v2975
        %v3025 = vmax.f32 %v2977, 0.0
        %v3026 = vmax.f32 %v2978, 0.0
        %v3027 = vmax.f32 %v2979, 0.0
        %v3028 = vmax.f32 %v2980, 0.0
        %v3029 = vmax.f32 %v2981, 0.0
        %v3030 = vmax.f32 %v2982, 0.0
        %v3031 = vmax.f32 %v2983, 0.0
        %v3032 = vmax.f32 %v2984, 0.0
        %v3033 = vmax.f32 %v2985, 0.0
        %v3034 = vmax.f32 %v2986, 0.0
        %v3035 = vmax.f32 %v2987, 0.0
        %v3036 = vmax.f32 %v2988, 0.0
        %v3037 = vmax.f32 %v2989, 0.0
        %v3038 = vmax.f32 %v2990, 0.0
        %v3039 = vmax.f32 %v2991, 0.0
        %v3040 = vmax.f32 %v2992, 0.0
        %v3041 = vmax.f32 %v2993, 0.0
        %v3042 = vmax.f32 %v2994, 0.0
        %v3043 = vmax.f32 %v2995, 0.0
        %v3044 = vmax.f32 %v2996, 0.0
        %v3045 = vmax.f32 %v2997, 0.0
        %v3046 = vmax.f32 %v2998, 0.0
        %v3047 = vmax.f32 %v2999, 0.0
        %v3048 = vmax.f32 %v3000, 0.0
        %v3049 = vmax.f32 %v3001, 0.0
        %v3050 = vmax.f32 %v3002, 0.0
        %v3051 = vmax.f32 %v3003, 0.0
        %v3052 = vmax.f32 %v3004, 0.0
        %v3053 = vmax.f32 %v3005, 0.0
        %v3054 = vmax.f32 %v3006, 0.0
        %v3055 = vmax.f32 %v3007, 0.0
        %v3056 = vmax.f32 %v3008, 0.0
        %v3057 = vmax.f32 %v3009, 0.0
        %v3058 = vmax.f32 %v3010, 0.0
        %v3059 = vmax.f32 %v3011, 0.0
        %v3060 = vmax.f32 %v3012, 0.0
        %v3061 = vmax.f32 %v3013, 0.0
        %v3062 = vmax.f32 %v3014, 0.0
        %v3063 = vmax.f32 %v3015, 0.0
        %v3064 = vmax.f32 %v3016, 0.0
        %v3065 = vmax.f32 %v3017, 0.0
        %v3066 = vmax.f32 %v3018, 0.0
        %v3067 = vmax.f32 %v3019, 0.0
        %v3068 = vmax.f32 %v3020, 0.0
        %v3069 = vmax.f32 %v3021, 0.0
        %v3070 = vmax.f32 %v3022, 0.0
        %v3071 = vmax.f32 %v3023, 0.0
        %v3072 = vmax.f32 %v3024, 0.0
        %v3073 = vld [vmem:[%s7] sm:$0xff]
        %v3074 = vld [vmem:[%s7 + $0x8] sm:$0xff]
        %v3075 = vld [vmem:[%s7 + $0x10] sm:$0xff]
        %v3076 = vld [vmem:[%s7 + $0x18] sm:$0xff]
        %v3077 = vld [vmem:[%s7 + $0x20] sm:$0xff]
        %v3078 = vld [vmem:[%s7 + $0x28] sm:$0xff]
        %v3079 = vld [vmem:[%s7 + $0x30] sm:$0xff]
        %v3080 = vld [vmem:[%s7 + $0x38] sm:$0xff]
        %v3081 = vld [vmem:[%s7 + $0x40] sm:$0xff]
        %v3082 = vld [vmem:[%s7 + $0x48] sm:$0xff]
        %v3083 = vld [vmem:[%s7 + $0x50] sm:$0xff]
        %v3084 = vld [vmem:[%s7 + $0x58] sm:$0xff]
        %v3085 = vld [vmem:[%s7 + $0x60] sm:$0xff]
        %v3086 = vld [vmem:[%s7 + $0x68] sm:$0xff]
        %v3087 = vld [vmem:[%s7 + $0x70] sm:$0xff]
        %v3088 = vld [vmem:[%s7 + $0x78] sm:$0xff]
        %v3089 = vld [vmem:[%s7 + $0x80] sm:$0xff]
        %v3090 = vld [vmem:[%s7 + $0x88] sm:$0xff]
        %v3091 = vld [vmem:[%s7 + $0x90] sm:$0xff]
        %v3092 = vld [vmem:[%s7 + $0x98] sm:$0xff]
        %v3093 = vld [vmem:[%s7 + $0xa0] sm:$0xff]
        %v3094 = vld [vmem:[%s7 + $0xa8] sm:$0xff]
        %v3095 = vld [vmem:[%s7 + $0xb0] sm:$0xff]
        %v3096 = vld [vmem:[%s7 + $0xb8] sm:$0xff]
        %v3097 = vld [vmem:[%s7 + $0xc0] sm:$0xff]
        %v3098 = vld [vmem:[%s7 + $0xc8] sm:$0xff]
        %v3099 = vld [vmem:[%s7 + $0xd0] sm:$0xff]
        %v3100 = vld [vmem:[%s7 + $0xd8] sm:$0xff]
        %v3101 = vld [vmem:[%s7 + $0xe0] sm:$0xff]
        %v3102 = vld [vmem:[%s7 + $0xe8] sm:$0xff]
        %v3103 = vld [vmem:[%s7 + $0xf0] sm:$0xff]
        %v3104 = vld [vmem:[%s7 + $0xf8] sm:$0xff]
        %v3105 = vld [vmem:[%s7 + $0x100] sm:$0xff]
        %v3106 = vld [vmem:[%s7 + $0x108] sm:$0xff]
        %v3107 = vld [vmem:[%s7 + $0x110] sm:$0xff]
        %v3108 = vld [vmem:[%s7 + $0x118] sm:$0xff]
        %v3109 = vld [vmem:[%s7 + $0x120] sm:$0xff]
        %v3110 = vld [vmem:[%s7 + $0x128] sm:$0xff]
        %v3111 = vld [vmem:[%s7 + $0x130] sm:$0xff]
        %v3112 = vld [vmem:[%s7 + $0x138] sm:$0xff]
        %v3113 = vld [vmem:[%s7 + $0x140] sm:$0xff]
        %v3114 = vld [vmem:[%s7 + $0x148] sm:$0xff]
        %v3115 = vld [vmem:[%s7 + $0x150] sm:$0xff]
        %v3116 = vld [vmem:[%s7 + $0x158] sm:$0xff]
        %v3117 = vld [vmem:[%s7 + $0x160] sm:$0xff]
        %v3118 = vld [vmem:[%s7 + $0x168] sm:$0xff]
        %v3119 = vld [vmem:[%s7 + $0x170] sm:$0xff]
        %v3120 = vld [vmem:[%s7 + $0x178] sm:$0xff]
        %3122 = vset.pattern.permute.xlu0 0
        %3123 = vperm.xlu0 %3122, %v3073
        %v3124 = vpop.permute.xlu0 %3123
        %3127 = vset.pattern.permute.xlu0 0
        %3128 = vperm.xlu0 %3127, %v3074
        %v3129 = vpop.permute.xlu0 %3128
        %3132 = vset.pattern.permute.xlu0 0
        %3133 = vperm.xlu0 %3132, %v3075
        %v3134 = vpop.permute.xlu0 %3133
        %3137 = vset.pattern.permute.xlu0 0
        %3138 = vperm.xlu0 %3137, %v3076
        %v3139 = vpop.permute.xlu0 %3138
        %3142 = vset.pattern.permute.xlu0 0
        %3143 = vperm.xlu0 %3142, %v3077
        %v3144 = vpop.permute.xlu0 %3143
        %3147 = vset.pattern.permute.xlu0 0
        %3148 = vperm.xlu0 %3147, %v3078
        %v3149 = vpop.permute.xlu0 %3148
        %3152 = vset.pattern.permute.xlu0 0
        %3153 = vperm.xlu0 %3152, %v3079
        %v3154 = vpop.permute.xlu0 %3153
        %3157 = vset.pattern.permute.xlu0 0
        %3158 = vperm.xlu0 %3157, %v3080
        %v3159 = vpop.permute.xlu0 %3158
        %3162 = vset.pattern.permute.xlu0 0
        %3163 = vperm.xlu0 %3162, %v3081
        %v3164 = vpop.permute.xlu0 %3163
        %3167 = vset.pattern.permute.xlu0 0
        %3168 = vperm.xlu0 %3167, %v3082
        %v3169 = vpop.permute.xlu0 %3168
        %3172 = vset.pattern.permute.xlu0 0
        %3173 = vperm.xlu0 %3172, %v3083
        %v3174 = vpop.permute.xlu0 %3173
        %3177 = vset.pattern.permute.xlu0 0
        %3178 = vperm.xlu0 %3177, %v3084
        %v3179 = vpop.permute.xlu0 %3178
        %3182 = vset.pattern.permute.xlu0 0
        %3183 = vperm.xlu0 %3182, %v3085
        %v3184 = vpop.permute.xlu0 %3183
        %3187 = vset.pattern.permute.xlu0 0
        %3188 = vperm.xlu0 %3187, %v3086
        %v3189 = vpop.permute.xlu0 %3188
        %3192 = vset.pattern.permute.xlu0 0
        %3193 = vperm.xlu0 %3192, %v3087
        %v3194 = vpop.permute.xlu0 %3193
        %3197 = vset.pattern.permute.xlu0 0
        %3198 = vperm.xlu0 %3197, %v3088
        %v3199 = vpop.permute.xlu0 %3198
        %3202 = vset.pattern.permute.xlu0 0
        %3203 = vperm.xlu0 %3202, %v3089
        %v3204 = vpop.permute.xlu0 %3203
        %3207 = vset.pattern.permute.xlu0 0
        %3208 = vperm.xlu0 %3207, %v3090
        %v3209 = vpop.permute.xlu0 %3208
        %3212 = vset.pattern.permute.xlu0 0
        %3213 = vperm.xlu0 %3212, %v3091
        %v3214 = vpop.permute.xlu0 %3213
        %3217 = vset.pattern.permute.xlu0 0
        %3218 = vperm.xlu0 %3217, %v3092
        %v3219 = vpop.permute.xlu0 %3218
        %3222 = vset.pattern.permute.xlu0 0
        %3223 = vperm.xlu0 %3222, %v3093
        %v3224 = vpop.permute.xlu0 %3223
        %3227 = vset.pattern.permute.xlu0 0
        %3228 = vperm.xlu0 %3227, %v3094
        %v3229 = vpop.permute.xlu0 %3228
        %3232 = vset.pattern.permute.xlu0 0
        %3233 = vperm.xlu0 %3232, %v3095
        %v3234 = vpop.permute.xlu0 %3233
        %3237 = vset.pattern.permute.xlu0 0
        %3238 = vperm.xlu0 %3237, %v3096
        %v3239 = vpop.permute.xlu0 %3238
        %3242 = vset.pattern.permute.xlu0 0
        %3243 = vperm.xlu0 %3242, %v3097
        %v3244 = vpop.permute.xlu0 %3243
        %3247 = vset.pattern.permute.xlu0 0
        %3248 = vperm.xlu0 %3247, %v3098
        %v3249 = vpop.permute.xlu0 %3248
        %3252 = vset.pattern.permute.xlu0 0
        %3253 = vperm.xlu0 %3252, %v3099
        %v3254 = vpop.permute.xlu0 %3253
        %3257 = vset.pattern.permute.xlu0 0
        %3258 = vperm.xlu0 %3257, %v3100
        %v3259 = vpop.permute.xlu0 %3258
        %3262 = vset.pattern.permute.xlu0 0
        %3263 = vperm.xlu0 %3262, %v3101
        %v3264 = vpop.permute.xlu0 %3263
        %3267 = vset.pattern.permute.xlu0 0
        %3268 = vperm.xlu0 %3267, %v3102
        %v3269 = vpop.permute.xlu0 %3268
        %3272 = vset.pattern.permute.xlu0 0
        %3273 = vperm.xlu0 %3272, %v3103
        %v3274 = vpop.permute.xlu0 %3273
        %3277 = vset.pattern.permute.xlu0 0
        %3278 = vperm.xlu0 %3277, %v3104
        %v3279 = vpop.permute.xlu0 %3278
        %3282 = vset.pattern.permute.xlu0 0
        %3283 = vperm.xlu0 %3282, %v3105
        %v3284 = vpop.permute.xlu0 %3283
        %3287 = vset.pattern.permute.xlu0 0
        %3288 = vperm.xlu0 %3287, %v3106
        %v3289 = vpop.permute.xlu0 %3288
        %3292 = vset.pattern.permute.xlu0 0
        %3293 = vperm.xlu0 %3292, %v3107
        %v3294 = vpop.permute.xlu0 %3293
        %3297 = vset.pattern.permute.xlu0 0
        %3298 = vperm.xlu0 %3297, %v3108
        %v3299 = vpop.permute.xlu0 %3298
        %3302 = vset.pattern.permute.xlu0 0
        %3303 = vperm.xlu0 %3302, %v3109
        %v3304 = vpop.permute.xlu0 %3303
        %3307 = vset.pattern.permute.xlu0 0
        %3308 = vperm.xlu0 %3307, %v3110
        %v3309 = vpop.permute.xlu0 %3308
        %3312 = vset.pattern.permute.xlu0 0
        %3313 = vperm.xlu0 %3312, %v3111
        %v3314 = vpop.permute.xlu0 %3313
        %3317 = vset.pattern.permute.xlu0 0
        %3318 = vperm.xlu0 %3317, %v3112
        %v3319 = vpop.permute.xlu0 %3318
        %3322 = vset.pattern.permute.xlu0 0
        %3323 = vperm.xlu0 %3322, %v3113
        %v3324 = vpop.permute.xlu0 %3323
        %3327 = vset.pattern.permute.xlu0 0
        %3328 = vperm.xlu0 %3327, %v3114
        %v3329 = vpop.permute.xlu0 %3328
        %3332 = vset.pattern.permute.xlu0 0
        %3333 = vperm.xlu0 %3332, %v3115
        %v3334 = vpop.permute.xlu0 %3333
        %3337 = vset.pattern.permute.xlu0 0
        %3338 = vperm.xlu0 %3337, %v3116
        %v3339 = vpop.permute.xlu0 %3338
        %3342 = vset.pattern.permute.xlu0 0
        %3343 = vperm.xlu0 %3342, %v3117
        %v3344 = vpop.permute.xlu0 %3343
        %3347 = vset.pattern.permute.xlu0 0
        %3348 = vperm.xlu0 %3347, %v3118
        %v3349 = vpop.permute.xlu0 %3348
        %3352 = vset.pattern.permute.xlu0 0
        %3353 = vperm.xlu0 %3352, %v3119
        %v3354 = vpop.permute.xlu0 %3353
        %3357 = vset.pattern.permute.xlu0 0
        %3358 = vperm.xlu0 %3357, %v3120
        %v3359 = vpop.permute.xlu0 %3358
        %v3361 = vmul.f32 %v3025, %v3124
        %v3362 = vmul.f32 %v3026, %v3129
        %v3363 = vmul.f32 %v3027, %v3134
        %v3364 = vmul.f32 %v3028, %v3139
        %v3365 = vmul.f32 %v3029, %v3144
        %v3366 = vmul.f32 %v3030, %v3149
        %v3367 = vmul.f32 %v3031, %v3154
        %v3368 = vmul.f32 %v3032, %v3159
        %v3369 = vmul.f32 %v3033, %v3164
        %v3370 = vmul.f32 %v3034, %v3169
        %v3371 = vmul.f32 %v3035, %v3174
        %v3372 = vmul.f32 %v3036, %v3179
        %v3373 = vmul.f32 %v3037, %v3184
        %v3374 = vmul.f32 %v3038, %v3189
        %v3375 = vmul.f32 %v3039, %v3194
        %v3376 = vmul.f32 %v3040, %v3199
        %v3377 = vmul.f32 %v3041, %v3204
        %v3378 = vmul.f32 %v3042, %v3209
        %v3379 = vmul.f32 %v3043, %v3214
        %v3380 = vmul.f32 %v3044, %v3219
        %v3381 = vmul.f32 %v3045, %v3224
        %v3382 = vmul.f32 %v3046, %v3229
        %v3383 = vmul.f32 %v3047, %v3234
        %v3384 = vmul.f32 %v3048, %v3239
        %v3385 = vmul.f32 %v3049, %v3244
        %v3386 = vmul.f32 %v3050, %v3249
        %v3387 = vmul.f32 %v3051, %v3254
        %v3388 = vmul.f32 %v3052, %v3259
        %v3389 = vmul.f32 %v3053, %v3264
        %v3390 = vmul.f32 %v3054, %v3269
        %v3391 = vmul.f32 %v3055, %v3274
        %v3392 = vmul.f32 %v3056, %v3279
        %v3393 = vmul.f32 %v3057, %v3284
        %v3394 = vmul.f32 %v3058, %v3289
        %v3395 = vmul.f32 %v3059, %v3294
        %v3396 = vmul.f32 %v3060, %v3299
        %v3397 = vmul.f32 %v3061, %v3304
        %v3398 = vmul.f32 %v3062, %v3309
        %v3399 = vmul.f32 %v3063, %v3314
        %v3400 = vmul.f32 %v3064, %v3319
        %v3401 = vmul.f32 %v3065, %v3324
        %v3402 = vmul.f32 %v3066, %v3329
        %v3403 = vmul.f32 %v3067, %v3334
        %v3404 = vmul.f32 %v3068, %v3339
        %v3405 = vmul.f32 %v3069, %v3344
        %v3406 = vmul.f32 %v3070, %v3349
        %v3407 = vmul.f32 %v3071, %v3354
        %v3408 = vmul.f32 %v3072, %v3359
        %v3409 = vpack.c.bf16 %v3361, %v3361
        %v3410 = vpack.c.bf16 %v3362, %v3362
        %v3411 = vpack.c.bf16 %v3363, %v3363
        %v3412 = vpack.c.bf16 %v3364, %v3364
        %v3413 = vpack.c.bf16 %v3365, %v3365
        %v3414 = vpack.c.bf16 %v3366, %v3366
        %v3415 = vpack.c.bf16 %v3367, %v3367
        %v3416 = vpack.c.bf16 %v3368, %v3368
        %v3417 = vpack.c.bf16 %v3369, %v3369
        %v3418 = vpack.c.bf16 %v3370, %v3370
        %v3419 = vpack.c.bf16 %v3371, %v3371
        %v3420 = vpack.c.bf16 %v3372, %v3372
        %v3421 = vpack.c.bf16 %v3373, %v3373
        %v3422 = vpack.c.bf16 %v3374, %v3374
        %v3423 = vpack.c.bf16 %v3375, %v3375
        %v3424 = vpack.c.bf16 %v3376, %v3376
        %v3425 = vpack.c.bf16 %v3377, %v3377
        %v3426 = vpack.c.bf16 %v3378, %v3378
        %v3427 = vpack.c.bf16 %v3379, %v3379
        %v3428 = vpack.c.bf16 %v3380, %v3380
        %v3429 = vpack.c.bf16 %v3381, %v3381
        %v3430 = vpack.c.bf16 %v3382, %v3382
        %v3431 = vpack.c.bf16 %v3383, %v3383
        %v3432 = vpack.c.bf16 %v3384, %v3384
        %v3433 = vpack.c.bf16 %v3385, %v3385
        %v3434 = vpack.c.bf16 %v3386, %v3386
        %v3435 = vpack.c.bf16 %v3387, %v3387
        %v3436 = vpack.c.bf16 %v3388, %v3388
        %v3437 = vpack.c.bf16 %v3389, %v3389
        %v3438 = vpack.c.bf16 %v3390, %v3390
        %v3439 = vpack.c.bf16 %v3391, %v3391
        %v3440 = vpack.c.bf16 %v3392, %v3392
        %v3441 = vpack.c.bf16 %v3393, %v3393
        %v3442 = vpack.c.bf16 %v3394, %v3394
        %v3443 = vpack.c.bf16 %v3395, %v3395
        %v3444 = vpack.c.bf16 %v3396, %v3396
        %v3445 = vpack.c.bf16 %v3397, %v3397
        %v3446 = vpack.c.bf16 %v3398, %v3398
        %v3447 = vpack.c.bf16 %v3399, %v3399
        %v3448 = vpack.c.bf16 %v3400, %v3400
        %v3449 = vpack.c.bf16 %v3401, %v3401
        %v3450 = vpack.c.bf16 %v3402, %v3402
        %v3451 = vpack.c.bf16 %v3403, %v3403
        %v3452 = vpack.c.bf16 %v3404, %v3404
        %v3453 = vpack.c.bf16 %v3405, %v3405
        %v3454 = vpack.c.bf16 %v3406, %v3406
        %v3455 = vpack.c.bf16 %v3407, %v3407
        %v3456 = vpack.c.bf16 %v3408, %v3408
        %v3505 = vunpack.c.l.b16 %v3409
        %v3506 = vunpack.c.l.b16 %v3410
        %v3507 = vunpack.c.l.b16 %v3411
        %v3508 = vunpack.c.l.b16 %v3412
        %v3509 = vunpack.c.l.b16 %v3413
        %v3510 = vunpack.c.l.b16 %v3414
        %v3511 = vunpack.c.l.b16 %v3415
        %v3512 = vunpack.c.l.b16 %v3416
        %v3513 = vunpack.c.l.b16 %v3417
        %v3514 = vunpack.c.l.b16 %v3418
        %v3515 = vunpack.c.l.b16 %v3419
        %v3516 = vunpack.c.l.b16 %v3420
        %v3517 = vunpack.c.l.b16 %v3421
        %v3518 = vunpack.c.l.b16 %v3422
        %v3519 = vunpack.c.l.b16 %v3423
        %v3520 = vunpack.c.l.b16 %v3424
        %v3521 = vunpack.c.l.b16 %v3425
        %v3522 = vunpack.c.l.b16 %v3426
        %v3523 = vunpack.c.l.b16 %v3427
        %v3524 = vunpack.c.l.b16 %v3428
        %v3525 = vunpack.c.l.b16 %v3429
        %v3526 = vunpack.c.l.b16 %v3430
        %v3527 = vunpack.c.l.b16 %v3431
        %v3528 = vunpack.c.l.b16 %v3432
        %v3529 = vunpack.c.l.b16 %v3433
        %v3530 = vunpack.c.l.b16 %v3434
        %v3531 = vunpack.c.l.b16 %v3435
        %v3532 = vunpack.c.l.b16 %v3436
        %v3533 = vunpack.c.l.b16 %v3437
        %v3534 = vunpack.c.l.b16 %v3438
        %v3535 = vunpack.c.l.b16 %v3439
        %v3536 = vunpack.c.l.b16 %v3440
        %v3537 = vunpack.c.l.b16 %v3441
        %v3538 = vunpack.c.l.b16 %v3442
        %v3539 = vunpack.c.l.b16 %v3443
        %v3540 = vunpack.c.l.b16 %v3444
        %v3541 = vunpack.c.l.b16 %v3445
        %v3542 = vunpack.c.l.b16 %v3446
        %v3543 = vunpack.c.l.b16 %v3447
        %v3544 = vunpack.c.l.b16 %v3448
        %v3545 = vunpack.c.l.b16 %v3449
        %v3546 = vunpack.c.l.b16 %v3450
        %v3547 = vunpack.c.l.b16 %v3451
        %v3548 = vunpack.c.l.b16 %v3452
        %v3549 = vunpack.c.l.b16 %v3453
        %v3550 = vunpack.c.l.b16 %v3454
        %v3551 = vunpack.c.l.b16 %v3455
        %v3552 = vunpack.c.l.b16 %v3456
        %v3554 = vunpack.c.l.b16 0
        %v3555 = vunpack.c.h.b16 0
        %v3556 = vld [vmem:[#allocation7] sm:$0xf]
        %v3557 = vld [vmem:[#allocation7 + $0x4] sm:$0xf]
        %v3558 = vld [vmem:[#allocation7 + $0x8] sm:$0xf]
        %v3559 = vld [vmem:[#allocation7 + $0xc] sm:$0xf]
        %v3560 = vld [vmem:[#allocation7 + $0x10] sm:$0xf]
        %v3561 = vld [vmem:[#allocation7 + $0x14] sm:$0xf]
        %v3562 = vld [vmem:[#allocation7 + $0x18] sm:$0xf]
        %v3563 = vld [vmem:[#allocation7 + $0x1c] sm:$0xf]
        %v3564 = vld [vmem:[#allocation7 + $0x20] sm:$0xf]
        %v3565 = vld [vmem:[#allocation7 + $0x24] sm:$0xf]
        %v3566 = vld [vmem:[#allocation7 + $0x28] sm:$0xf]
        %v3567 = vld [vmem:[#allocation7 + $0x2c] sm:$0xf]
        %v3568 = vld [vmem:[#allocation7 + $0x30] sm:$0xf]
        %v3569 = vld [vmem:[#allocation7 + $0x34] sm:$0xf]
        %v3570 = vld [vmem:[#allocation7 + $0x38] sm:$0xf]
        %v3571 = vld [vmem:[#allocation7 + $0x3c] sm:$0xf]
        %v3572 = vld [vmem:[#allocation7 + $0x40] sm:$0xf]
        %v3573 = vld [vmem:[#allocation7 + $0x44] sm:$0xf]
        %v3574 = vld [vmem:[#allocation7 + $0x48] sm:$0xf]
        %v3575 = vld [vmem:[#allocation7 + $0x4c] sm:$0xf]
        %v3576 = vld [vmem:[#allocation7 + $0x50] sm:$0xf]
        %v3577 = vld [vmem:[#allocation7 + $0x54] sm:$0xf]
        %v3578 = vld [vmem:[#allocation7 + $0x58] sm:$0xf]
        %v3579 = vld [vmem:[#allocation7 + $0x5c] sm:$0xf]
        %v3580 = vld [vmem:[#allocation7 + $0x60] sm:$0xf]
        %v3581 = vld [vmem:[#allocation7 + $0x64] sm:$0xf]
        %v3582 = vld [vmem:[#allocation7 + $0x68] sm:$0xf]
        %v3583 = vld [vmem:[#allocation7 + $0x6c] sm:$0xf]
        %v3584 = vld [vmem:[#allocation7 + $0x70] sm:$0xf]
        %v3585 = vld [vmem:[#allocation7 + $0x74] sm:$0xf]
        %v3586 = vld [vmem:[#allocation7 + $0x78] sm:$0xf]
        %v3587 = vld [vmem:[#allocation7 + $0x7c] sm:$0xf]
        %v3588 = vld [vmem:[#allocation7 + $0x80] sm:$0xf]
        %v3589 = vld [vmem:[#allocation7 + $0x84] sm:$0xf]
        %v3590 = vld [vmem:[#allocation7 + $0x88] sm:$0xf]
        %v3591 = vld [vmem:[#allocation7 + $0x8c] sm:$0xf]
        %v3592 = vld [vmem:[#allocation7 + $0x90] sm:$0xf]
        %v3593 = vld [vmem:[#allocation7 + $0x94] sm:$0xf]
        %v3594 = vld [vmem:[#allocation7 + $0x98] sm:$0xf]
        %v3595 = vld [vmem:[#allocation7 + $0x9c] sm:$0xf]
        %v3596 = vld [vmem:[#allocation7 + $0xa0] sm:$0xf]
        %v3597 = vld [vmem:[#allocation7 + $0xa4] sm:$0xf]
        %v3598 = vld [vmem:[#allocation7 + $0xa8] sm:$0xf]
        %v3599 = vld [vmem:[#allocation7 + $0xac] sm:$0xf]
        %v3600 = vld [vmem:[#allocation7 + $0xb0] sm:$0xf]
        %v3601 = vld [vmem:[#allocation7 + $0xb4] sm:$0xf]
        %v3602 = vld [vmem:[#allocation7 + $0xb8] sm:$0xf]
        %v3603 = vld [vmem:[#allocation7 + $0xbc] sm:$0xf]
        %v3604 = vpack.c.b16 %v3555, %v3554
        %v3605 = vpack.c.b16 %v3506, %v3505
        %v3606 = vpack.c.b16 %v3509, %v3508
        %v3607 = vpack.c.b16 %v3505, %v3554
        %v3608 = vpack.c.b16 %v3508, %v3507
        %v3609 = vpack.c.b16 %v3511, %v3510
        %v3610 = vpack.c.b16 %v3507, %v3506
        %v3611 = vpack.c.b16 %v3510, %v3509
        %v3612 = vpack.c.b16 %v3513, %v3512
        %v3613 = vpack.c.b16 %v3512, %v3511
        %v3614 = vpack.c.b16 %v3515, %v3514
        %v3615 = vpack.c.b16 %v3514, %v3513
        %v3616 = vpack.c.b16 %v3517, %v3516
        %v3617 = vpack.c.b16 %v3516, %v3515
        %v3618 = vpack.c.b16 %v3519, %v3518
        %v3619 = vpack.c.b16 %v3518, %v3517
        %v3620 = vpack.c.b16 %v3521, %v3520
        %v3621 = vpack.c.b16 %v3520, %v3519
        %v3622 = vpack.c.b16 %v3523, %v3522
        %v3623 = vpack.c.b16 %v3522, %v3521
        %v3624 = vpack.c.b16 %v3525, %v3524
        %v3625 = vpack.c.b16 %v3524, %v3523
        %v3626 = vpack.c.b16 %v3527, %v3526
        %v3627 = vpack.c.b16 %v3526, %v3525
        %v3628 = vpack.c.b16 %v3529, %v3528
        %v3629 = vpack.c.b16 %v3528, %v3527
        %v3630 = vpack.c.b16 %v3531, %v3530
        %v3631 = vpack.c.b16 %v3530, %v3529
        %v3632 = vpack.c.b16 %v3533, %v3532
        %v3633 = vpack.c.b16 %v3532, %v3531
        %v3634 = vpack.c.b16 %v3535, %v3534
        %v3635 = vpack.c.b16 %v3534, %v3533
        %v3636 = vpack.c.b16 %v3537, %v3536
        %v3637 = vpack.c.b16 %v3536, %v3535
        %v3638 = vpack.c.b16 %v3539, %v3538
        %v3639 = vpack.c.b16 %v3538, %v3537
        %v3640 = vpack.c.b16 %v3541, %v3540
        %v3641 = vpack.c.b16 %v3540, %v3539
        %v3642 = vpack.c.b16 %v3543, %v3542
        %v3643 = vpack.c.b16 %v3542, %v3541
        %v3644 = vpack.c.b16 %v3545, %v3544
        %v3645 = vpack.c.b16 %v3544, %v3543
        %v3646 = vpack.c.b16 %v3547, %v3546
        %v3647 = vpack.c.b16 %v3546, %v3545
        %v3648 = vpack.c.b16 %v3549, %v3548
        %v3649 = vpack.c.b16 %v3548, %v3547
        %v3650 = vpack.c.b16 %v3551, %v3550
        %v3651 = vpack.c.b16 %v3550, %v3549
        %v3652 = vpack.c.b16 %v3554, %v3552
        %v3653 = vpack.c.b16 %v3552, %v3551
        %v3654 = vpack.c.b16 %v3554, %v3555
        %v3754 = vunpack.c.l.b16 %v3556
        %v3755 = vunpack.c.l.b16 %v3557
        %v3756 = vunpack.c.l.b16 %v3558
        %v3757 = vunpack.c.l.b16 %v3559
        %v3758 = vunpack.c.l.b16 %v3560
        %v3759 = vunpack.c.l.b16 %v3561
        %v3760 = vunpack.c.l.b16 %v3562
        %v3761 = vunpack.c.l.b16 %v3563
        %v3762 = vunpack.c.l.b16 %v3564
        %v3763 = vunpack.c.l.b16 %v3565
        %v3764 = vunpack.c.l.b16 %v3566
        %v3765 = vunpack.c.l.b16 %v3567
        %v3766 = vunpack.c.l.b16 %v3568
        %v3767 = vunpack.c.l.b16 %v3569
        %v3768 = vunpack.c.l.b16 %v3570
        %v3769 = vunpack.c.l.b16 %v3571
        %v3770 = vunpack.c.l.b16 %v3572
        %v3771 = vunpack.c.l.b16 %v3573
        %v3772 = vunpack.c.l.b16 %v3574
        %v3773 = vunpack.c.l.b16 %v3575
        %v3774 = vunpack.c.l.b16 %v3576
        %v3775 = vunpack.c.l.b16 %v3577
        %v3776 = vunpack.c.l.b16 %v3578
        %v3777 = vunpack.c.l.b16 %v3579
        %v3778 = vunpack.c.l.b16 %v3580
        %v3779 = vunpack.c.l.b16 %v3581
        %v3780 = vunpack.c.l.b16 %v3582
        %v3781 = vunpack.c.l.b16 %v3583
        %v3782 = vunpack.c.l.b16 %v3584
        %v3783 = vunpack.c.l.b16 %v3585
        %v3784 = vunpack.c.l.b16 %v3586
        %v3785 = vunpack.c.l.b16 %v3587
        %v3786 = vunpack.c.l.b16 %v3588
        %v3787 = vunpack.c.l.b16 %v3589
        %v3788 = vunpack.c.l.b16 %v3590
        %v3789 = vunpack.c.l.b16 %v3591
        %v3790 = vunpack.c.l.b16 %v3592
        %v3791 = vunpack.c.l.b16 %v3593
        %v3792 = vunpack.c.l.b16 %v3594
        %v3793 = vunpack.c.l.b16 %v3595
        %v3794 = vunpack.c.l.b16 %v3596
        %v3795 = vunpack.c.l.b16 %v3597
        %v3796 = vunpack.c.l.b16 %v3598
        %v3797 = vunpack.c.l.b16 %v3599
        %v3798 = vunpack.c.l.b16 %v3600
        %v3799 = vunpack.c.l.b16 %v3601
        %v3800 = vunpack.c.l.b16 %v3602
        %v3801 = vunpack.c.l.b16 %v3603
        %v3802 = vpack.c.b16 %v3755, %v3754
        %v3803 = vpack.c.b16 %v3757, %v3756
        %v3804 = vpack.c.b16 %v3759, %v3758
        %v3805 = vpack.c.b16 %v3761, %v3760
        %v3806 = vpack.c.b16 %v3763, %v3762
        %v3807 = vpack.c.b16 %v3765, %v3764
        %v3808 = vpack.c.b16 %v3767, %v3766
        %v3809 = vpack.c.b16 %v3769, %v3768
        %v3810 = vpack.c.b16 %v3771, %v3770
        %v3811 = vpack.c.b16 %v3773, %v3772
        %v3812 = vpack.c.b16 %v3775, %v3774
        %v3813 = vpack.c.b16 %v3777, %v3776
        %v3814 = vpack.c.b16 %v3779, %v3778
        %v3815 = vpack.c.b16 %v3781, %v3780
        %v3816 = vpack.c.b16 %v3783, %v3782
        %v3817 = vpack.c.b16 %v3785, %v3784
        %v3818 = vpack.c.b16 %v3787, %v3786
        %v3819 = vpack.c.b16 %v3789, %v3788
        %v3820 = vpack.c.b16 %v3791, %v3790
        %v3821 = vpack.c.b16 %v3793, %v3792
        %v3822 = vpack.c.b16 %v3795, %v3794
        %v3823 = vpack.c.b16 %v3797, %v3796
        %v3824 = vpack.c.b16 %v3799, %v3798
        %v3825 = vpack.c.b16 %v3801, %v3800
        %3850 = vmatpush.bf16.msra.mxu0 %v3809
        %3851 = vmatpush.bf16.msra.mxu0 %v3808
        %3852 = vmatpush.bf16.msra.mxu0 %v3807
        %3853 = vmatpush.bf16.msra.mxu0 %v3806
        %3854 = vmatpush.bf16.msra.mxu0 %v3805
        %3855 = vmatpush.bf16.msra.mxu0 %v3804
        %3856 = vmatpush.bf16.msra.mxu0 %v3803
        %3857 = vmatpush.bf16.msra.mxu0 %v3802
        %3858 = vmatmul.bf16.gmra.mxu0 %v3604
        %v3859 = vpop.f32.mrf.mxu0
        %v3860 = vadd.f32 0.0, %v3859
        %v3861 = vpop.f32.mrf.mxu0
        %v3862 = vadd.f32 0.0, %v3861
        %3863 = vmatmul.bf16.gmra.mxu0 %v3607
        %v3864 = vpop.f32.mrf.mxu0
        %v3865 = vadd.f32 0.0, %v3864
        %v3866 = vpop.f32.mrf.mxu0
        %v3867 = vadd.f32 0.0, %v3866
        %3868 = vmatmul.bf16.gmra.mxu0 %v3610
        %v3869 = vpop.f32.mrf.mxu0
        %v3870 = vadd.f32 0.0, %v3869
        %v3871 = vpop.f32.mrf.mxu0
        %v3872 = vadd.f32 0.0, %v3871
        %3873 = vmatmul.bf16.gmra.mxu0 %v3606
        %v3874 = vpop.f32.mrf.mxu0
        %v3875 = vadd.f32 0.0, %v3874
        %v3876 = vpop.f32.mrf.mxu0
        %v3877 = vadd.f32 0.0, %v3876
        %3878 = vmatmul.bf16.gmra.mxu0 %v3609
        %v3879 = vpop.f32.mrf.mxu0
        %v3880 = vadd.f32 0.0, %v3879
        %v3881 = vpop.f32.mrf.mxu0
        %v3882 = vadd.f32 0.0, %v3881
        %3883 = vmatmul.bf16.gmra.mxu0 %v3612
        %v3884 = vpop.f32.mrf.mxu0
        %v3885 = vadd.f32 0.0, %v3884
        %v3886 = vpop.f32.mrf.mxu0
        %v3887 = vadd.f32 0.0, %v3886
        %3888 = vmatmul.bf16.gmra.mxu0 %v3614
        %v3889 = vpop.f32.mrf.mxu0
        %v3890 = vadd.f32 0.0, %v3889
        %v3891 = vpop.f32.mrf.mxu0
        %v3892 = vadd.f32 0.0, %v3891
        %3893 = vmatmul.bf16.gmra.mxu0 %v3616
        %v3894 = vpop.f32.mrf.mxu0
        %v3895 = vadd.f32 0.0, %v3894
        %v3896 = vpop.f32.mrf.mxu0
        %v3897 = vadd.f32 0.0, %v3896
        %3898 = vmatmul.bf16.gmra.mxu0 %v3618
        %v3899 = vpop.f32.mrf.mxu0
        %v3900 = vadd.f32 0.0, %v3899
        %v3901 = vpop.f32.mrf.mxu0
        %v3902 = vadd.f32 0.0, %v3901
        %3903 = vmatmul.bf16.gmra.mxu0 %v3620
        %v3904 = vpop.f32.mrf.mxu0
        %v3905 = vadd.f32 0.0, %v3904
        %v3906 = vpop.f32.mrf.mxu0
        %v3907 = vadd.f32 0.0, %v3906
        %3908 = vmatmul.bf16.gmra.mxu0 %v3622
        %v3909 = vpop.f32.mrf.mxu0
        %v3910 = vadd.f32 0.0, %v3909
        %v3911 = vpop.f32.mrf.mxu0
        %v3912 = vadd.f32 0.0, %v3911
        %3913 = vmatmul.bf16.gmra.mxu0 %v3624
        %v3914 = vpop.f32.mrf.mxu0
        %v3915 = vadd.f32 0.0, %v3914
        %v3916 = vpop.f32.mrf.mxu0
        %v3917 = vadd.f32 0.0, %v3916
        %3918 = vmatmul.bf16.gmra.mxu0 %v3626
        %v3919 = vpop.f32.mrf.mxu0
        %v3920 = vadd.f32 0.0, %v3919
        %v3921 = vpop.f32.mrf.mxu0
        %v3922 = vadd.f32 0.0, %v3921
        %3923 = vmatmul.bf16.gmra.mxu0 %v3628
        %v3924 = vpop.f32.mrf.mxu0
        %v3925 = vadd.f32 0.0, %v3924
        %v3926 = vpop.f32.mrf.mxu0
        %v3927 = vadd.f32 0.0, %v3926
        %3928 = vmatmul.bf16.gmra.mxu0 %v3630
        %v3929 = vpop.f32.mrf.mxu0
        %v3930 = vadd.f32 0.0, %v3929
        %v3931 = vpop.f32.mrf.mxu0
        %v3932 = vadd.f32 0.0, %v3931
        %3933 = vmatmul.bf16.gmra.mxu0 %v3632
        %v3934 = vpop.f32.mrf.mxu0
        %v3935 = vadd.f32 0.0, %v3934
        %v3936 = vpop.f32.mrf.mxu0
        %v3937 = vadd.f32 0.0, %v3936
        %3938 = vmatmul.bf16.gmra.mxu0 %v3634
        %v3939 = vpop.f32.mrf.mxu0
        %v3940 = vadd.f32 0.0, %v3939
        %v3941 = vpop.f32.mrf.mxu0
        %v3942 = vadd.f32 0.0, %v3941
        %3943 = vmatmul.bf16.gmra.mxu0 %v3636
        %v3944 = vpop.f32.mrf.mxu0
        %v3945 = vadd.f32 0.0, %v3944
        %v3946 = vpop.f32.mrf.mxu0
        %v3947 = vadd.f32 0.0, %v3946
        %3948 = vmatmul.bf16.gmra.mxu0 %v3638
        %v3949 = vpop.f32.mrf.mxu0
        %v3950 = vadd.f32 0.0, %v3949
        %v3951 = vpop.f32.mrf.mxu0
        %v3952 = vadd.f32 0.0, %v3951
        %3953 = vmatmul.bf16.gmra.mxu0 %v3640
        %v3954 = vpop.f32.mrf.mxu0
        %v3955 = vadd.f32 0.0, %v3954
        %v3956 = vpop.f32.mrf.mxu0
        %v3957 = vadd.f32 0.0, %v3956
        %3958 = vmatmul.bf16.gmra.mxu0 %v3642
        %v3959 = vpop.f32.mrf.mxu0
        %v3960 = vadd.f32 0.0, %v3959
        %v3961 = vpop.f32.mrf.mxu0
        %v3962 = vadd.f32 0.0, %v3961
        %3963 = vmatmul.bf16.gmra.mxu0 %v3644
        %v3964 = vpop.f32.mrf.mxu0
        %v3965 = vadd.f32 0.0, %v3964
        %v3966 = vpop.f32.mrf.mxu0
        %v3967 = vadd.f32 0.0, %v3966
        %3968 = vmatmul.bf16.gmra.mxu0 %v3646
        %v3969 = vpop.f32.mrf.mxu0
        %v3970 = vadd.f32 0.0, %v3969
        %v3971 = vpop.f32.mrf.mxu0
        %v3972 = vadd.f32 0.0, %v3971
        %3973 = vmatmul.bf16.gmra.mxu0 %v3648
        %v3974 = vpop.f32.mrf.mxu0
        %v3975 = vadd.f32 0.0, %v3974
        %v3976 = vpop.f32.mrf.mxu0
        %v3977 = vadd.f32 0.0, %v3976
        %3978 = vdwg.mxu0
        %3979 = vmatpush.bf16.msra.mxu0 %v3817
        %3980 = vmatpush.bf16.msra.mxu0 %v3816
        %3981 = vmatpush.bf16.msra.mxu0 %v3815
        %3982 = vmatpush.bf16.msra.mxu0 %v3814
        %3983 = vmatpush.bf16.msra.mxu0 %v3813
        %3984 = vmatpush.bf16.msra.mxu0 %v3812
        %3985 = vmatpush.bf16.msra.mxu0 %v3811
        %3986 = vmatpush.bf16.msra.mxu0 %v3810
        %3987 = vmatmul.bf16.gmra.mxu0 %v3605
        %v3988 = vpop.f32.mrf.mxu0
        %v3989 = vadd.f32 %v3860, %v3988
        %v3990 = vpop.f32.mrf.mxu0
        %v3991 = vadd.f32 %v3862, %v3990
        %3992 = vmatmul.bf16.gmra.mxu0 %v3608
        %v3993 = vpop.f32.mrf.mxu0
        %v3994 = vadd.f32 %v3865, %v3993
        %v3995 = vpop.f32.mrf.mxu0
        %v3996 = vadd.f32 %v3867, %v3995
        %3997 = vmatmul.bf16.gmra.mxu0 %v3611
        %v3998 = vpop.f32.mrf.mxu0
        %v3999 = vadd.f32 %v3870, %v3998
        %v4000 = vpop.f32.mrf.mxu0
        %v4001 = vadd.f32 %v3872, %v4000
        %4002 = vmatmul.bf16.gmra.mxu0 %v3613
        %v4003 = vpop.f32.mrf.mxu0
        %v4004 = vadd.f32 %v3875, %v4003
        %v4005 = vpop.f32.mrf.mxu0
        %v4006 = vadd.f32 %v3877, %v4005
        %4007 = vmatmul.bf16.gmra.mxu0 %v3615
        %v4008 = vpop.f32.mrf.mxu0
        %v4009 = vadd.f32 %v3880, %v4008
        %v4010 = vpop.f32.mrf.mxu0
        %v4011 = vadd.f32 %v3882, %v4010
        %4012 = vmatmul.bf16.gmra.mxu0 %v3617
        %v4013 = vpop.f32.mrf.mxu0
        %v4014 = vadd.f32 %v3885, %v4013
        %v4015 = vpop.f32.mrf.mxu0
        %v4016 = vadd.f32 %v3887, %v4015
        %4017 = vmatmul.bf16.gmra.mxu0 %v3619
        %v4018 = vpop.f32.mrf.mxu0
        %v4019 = vadd.f32 %v3890, %v4018
        %v4020 = vpop.f32.mrf.mxu0
        %v4021 = vadd.f32 %v3892, %v4020
        %4022 = vmatmul.bf16.gmra.mxu0 %v3621
        %v4023 = vpop.f32.mrf.mxu0
        %v4024 = vadd.f32 %v3895, %v4023
        %v4025 = vpop.f32.mrf.mxu0
        %v4026 = vadd.f32 %v3897, %v4025
        %4027 = vmatmul.bf16.gmra.mxu0 %v3623
        %v4028 = vpop.f32.mrf.mxu0
        %v4029 = vadd.f32 %v3900, %v4028
        %v4030 = vpop.f32.mrf.mxu0
        %v4031 = vadd.f32 %v3902, %v4030
        %4032 = vmatmul.bf16.gmra.mxu0 %v3625
        %v4033 = vpop.f32.mrf.mxu0
        %v4034 = vadd.f32 %v3905, %v4033
        %v4035 = vpop.f32.mrf.mxu0
        %v4036 = vadd.f32 %v3907, %v4035
        %4037 = vmatmul.bf16.gmra.mxu0 %v3627
        %v4038 = vpop.f32.mrf.mxu0
        %v4039 = vadd.f32 %v3910, %v4038
        %v4040 = vpop.f32.mrf.mxu0
        %v4041 = vadd.f32 %v3912, %v4040
        %4042 = vmatmul.bf16.gmra.mxu0 %v3629
        %v4043 = vpop.f32.mrf.mxu0
        %v4044 = vadd.f32 %v3915, %v4043
        %v4045 = vpop.f32.mrf.mxu0
        %v4046 = vadd.f32 %v3917, %v4045
        %4047 = vmatmul.bf16.gmra.mxu0 %v3631
        %v4048 = vpop.f32.mrf.mxu0
        %v4049 = vadd.f32 %v3920, %v4048
        %v4050 = vpop.f32.mrf.mxu0
        %v4051 = vadd.f32 %v3922, %v4050
        %4052 = vmatmul.bf16.gmra.mxu0 %v3633
        %v4053 = vpop.f32.mrf.mxu0
        %v4054 = vadd.f32 %v3925, %v4053
        %v4055 = vpop.f32.mrf.mxu0
        %v4056 = vadd.f32 %v3927, %v4055
        %4057 = vmatmul.bf16.gmra.mxu0 %v3635
        %v4058 = vpop.f32.mrf.mxu0
        %v4059 = vadd.f32 %v3930, %v4058
        %v4060 = vpop.f32.mrf.mxu0
        %v4061 = vadd.f32 %v3932, %v4060
        %4062 = vmatmul.bf16.gmra.mxu0 %v3637
        %v4063 = vpop.f32.mrf.mxu0
        %v4064 = vadd.f32 %v3935, %v4063
        %v4065 = vpop.f32.mrf.mxu0
        %v4066 = vadd.f32 %v3937, %v4065
        %4067 = vmatmul.bf16.gmra.mxu0 %v3639
        %v4068 = vpop.f32.mrf.mxu0
        %v4069 = vadd.f32 %v3940, %v4068
        %v4070 = vpop.f32.mrf.mxu0
        %v4071 = vadd.f32 %v3942, %v4070
        %4072 = vmatmul.bf16.gmra.mxu0 %v3641
        %v4073 = vpop.f32.mrf.mxu0
        %v4074 = vadd.f32 %v3945, %v4073
        %v4075 = vpop.f32.mrf.mxu0
        %v4076 = vadd.f32 %v3947, %v4075
        %4077 = vmatmul.bf16.gmra.mxu0 %v3643
        %v4078 = vpop.f32.mrf.mxu0
        %v4079 = vadd.f32 %v3950, %v4078
        %v4080 = vpop.f32.mrf.mxu0
        %v4081 = vadd.f32 %v3952, %v4080
        %4082 = vmatmul.bf16.gmra.mxu0 %v3645
        %v4083 = vpop.f32.mrf.mxu0
        %v4084 = vadd.f32 %v3955, %v4083
        %v4085 = vpop.f32.mrf.mxu0
        %v4086 = vadd.f32 %v3957, %v4085
        %4087 = vmatmul.bf16.gmra.mxu0 %v3647
        %v4088 = vpop.f32.mrf.mxu0
        %v4089 = vadd.f32 %v3960, %v4088
        %v4090 = vpop.f32.mrf.mxu0
        %v4091 = vadd.f32 %v3962, %v4090
        %4092 = vmatmul.bf16.gmra.mxu0 %v3649
        %v4093 = vpop.f32.mrf.mxu0
        %v4094 = vadd.f32 %v3965, %v4093
        %v4095 = vpop.f32.mrf.mxu0
        %v4096 = vadd.f32 %v3967, %v4095
        %4097 = vmatmul.bf16.gmra.mxu0 %v3651
        %v4098 = vpop.f32.mrf.mxu0
        %v4099 = vadd.f32 %v3970, %v4098
        %v4100 = vpop.f32.mrf.mxu0
        %v4101 = vadd.f32 %v3972, %v4100
        %4102 = vmatmul.bf16.gmra.mxu0 %v3653
        %v4103 = vpop.f32.mrf.mxu0
        %v4104 = vadd.f32 %v3975, %v4103
        %v4105 = vpop.f32.mrf.mxu0
        %v4106 = vadd.f32 %v3977, %v4105
        %4107 = vdwg.mxu0
        %4108 = vmatpush.bf16.msra.mxu0 %v3825
        %4109 = vmatpush.bf16.msra.mxu0 %v3824
        %4110 = vmatpush.bf16.msra.mxu0 %v3823
        %4111 = vmatpush.bf16.msra.mxu0 %v3822
        %4112 = vmatpush.bf16.msra.mxu0 %v3821
        %4113 = vmatpush.bf16.msra.mxu0 %v3820
        %4114 = vmatpush.bf16.msra.mxu0 %v3819
        %4115 = vmatpush.bf16.msra.mxu0 %v3818
        %4116 = vmatmul.bf16.gmra.mxu0 %v3606
        %v4117 = vpop.f32.mrf.mxu0
        %v4118 = vadd.f32 %v3989, %v4117
        %v4119 = vpop.f32.mrf.mxu0
        %v4120 = vadd.f32 %v3991, %v4119
        %4121 = vmatmul.bf16.gmra.mxu0 %v3609
        %v4122 = vpop.f32.mrf.mxu0
        %v4123 = vadd.f32 %v3994, %v4122
        %v4124 = vpop.f32.mrf.mxu0
        %v4125 = vadd.f32 %v3996, %v4124
        %4126 = vmatmul.bf16.gmra.mxu0 %v3612
        %v4127 = vpop.f32.mrf.mxu0
        %v4128 = vadd.f32 %v3999, %v4127
        %v4129 = vpop.f32.mrf.mxu0
        %v4130 = vadd.f32 %v4001, %v4129
        %4131 = vmatmul.bf16.gmra.mxu0 %v3614
        %v4132 = vpop.f32.mrf.mxu0
        %v4133 = vadd.f32 %v4004, %v4132
        %v4134 = vpop.f32.mrf.mxu0
        %v4135 = vadd.f32 %v4006, %v4134
        %4136 = vmatmul.bf16.gmra.mxu0 %v3616
        %v4137 = vpop.f32.mrf.mxu0
        %v4138 = vadd.f32 %v4009, %v4137
        %v4139 = vpop.f32.mrf.mxu0
        %v4140 = vadd.f32 %v4011, %v4139
        %4141 = vmatmul.bf16.gmra.mxu0 %v3618
        %v4142 = vpop.f32.mrf.mxu0
        %v4143 = vadd.f32 %v4014, %v4142
        %v4144 = vpop.f32.mrf.mxu0
        %v4145 = vadd.f32 %v4016, %v4144
        %4146 = vmatmul.bf16.gmra.mxu0 %v3620
        %v4147 = vpop.f32.mrf.mxu0
        %v4148 = vadd.f32 %v4019, %v4147
        %v4149 = vpop.f32.mrf.mxu0
        %v4150 = vadd.f32 %v4021, %v4149
        %4151 = vmatmul.bf16.gmra.mxu0 %v3622
        %v4152 = vpop.f32.mrf.mxu0
        %v4153 = vadd.f32 %v4024, %v4152
        %v4154 = vpop.f32.mrf.mxu0
        %v4155 = vadd.f32 %v4026, %v4154
        %4156 = vmatmul.bf16.gmra.mxu0 %v3624
        %v4157 = vpop.f32.mrf.mxu0
        %v4158 = vadd.f32 %v4029, %v4157
        %v4159 = vpop.f32.mrf.mxu0
        %v4160 = vadd.f32 %v4031, %v4159
        %4161 = vmatmul.bf16.gmra.mxu0 %v3626
        %v4162 = vpop.f32.mrf.mxu0
        %v4163 = vadd.f32 %v4034, %v4162
        %v4164 = vpop.f32.mrf.mxu0
        %v4165 = vadd.f32 %v4036, %v4164
        %4166 = vmatmul.bf16.gmra.mxu0 %v3628
        %v4167 = vpop.f32.mrf.mxu0
        %v4168 = vadd.f32 %v4039, %v4167
        %v4169 = vpop.f32.mrf.mxu0
        %v4170 = vadd.f32 %v4041, %v4169
        %4171 = vmatmul.bf16.gmra.mxu0 %v3630
        %v4172 = vpop.f32.mrf.mxu0
        %v4173 = vadd.f32 %v4044, %v4172
        %v4174 = vpop.f32.mrf.mxu0
        %v4175 = vadd.f32 %v4046, %v4174
        %4176 = vmatmul.bf16.gmra.mxu0 %v3632
        %v4177 = vpop.f32.mrf.mxu0
        %v4178 = vadd.f32 %v4049, %v4177
        %v4179 = vpop.f32.mrf.mxu0
        %v4180 = vadd.f32 %v4051, %v4179
        %4181 = vmatmul.bf16.gmra.mxu0 %v3634
        %v4182 = vpop.f32.mrf.mxu0
        %v4183 = vadd.f32 %v4054, %v4182
        %v4184 = vpop.f32.mrf.mxu0
        %v4185 = vadd.f32 %v4056, %v4184
        %4186 = vmatmul.bf16.gmra.mxu0 %v3636
        %v4187 = vpop.f32.mrf.mxu0
        %v4188 = vadd.f32 %v4059, %v4187
        %v4189 = vpop.f32.mrf.mxu0
        %v4190 = vadd.f32 %v4061, %v4189
        %4191 = vmatmul.bf16.gmra.mxu0 %v3638
        %v4192 = vpop.f32.mrf.mxu0
        %v4193 = vadd.f32 %v4064, %v4192
        %v4194 = vpop.f32.mrf.mxu0
        %v4195 = vadd.f32 %v4066, %v4194
        %4196 = vmatmul.bf16.gmra.mxu0 %v3640
        %v4197 = vpop.f32.mrf.mxu0
        %v4198 = vadd.f32 %v4069, %v4197
        %v4199 = vpop.f32.mrf.mxu0
        %v4200 = vadd.f32 %v4071, %v4199
        %4201 = vmatmul.bf16.gmra.mxu0 %v3642
        %v4202 = vpop.f32.mrf.mxu0
        %v4203 = vadd.f32 %v4074, %v4202
        %v4204 = vpop.f32.mrf.mxu0
        %v4205 = vadd.f32 %v4076, %v4204
        %4206 = vmatmul.bf16.gmra.mxu0 %v3644
        %v4207 = vpop.f32.mrf.mxu0
        %v4208 = vadd.f32 %v4079, %v4207
        %v4209 = vpop.f32.mrf.mxu0
        %v4210 = vadd.f32 %v4081, %v4209
        %4211 = vmatmul.bf16.gmra.mxu0 %v3646
        %v4212 = vpop.f32.mrf.mxu0
        %v4213 = vadd.f32 %v4084, %v4212
        %v4214 = vpop.f32.mrf.mxu0
        %v4215 = vadd.f32 %v4086, %v4214
        %4216 = vmatmul.bf16.gmra.mxu0 %v3648
        %v4217 = vpop.f32.mrf.mxu0
        %v4218 = vadd.f32 %v4089, %v4217
        %v4219 = vpop.f32.mrf.mxu0
        %v4220 = vadd.f32 %v4091, %v4219
        %4221 = vmatmul.bf16.gmra.mxu0 %v3650
        %v4222 = vpop.f32.mrf.mxu0
        %v4223 = vadd.f32 %v4094, %v4222
        %v4224 = vpop.f32.mrf.mxu0
        %v4225 = vadd.f32 %v4096, %v4224
        %4226 = vmatmul.bf16.gmra.mxu0 %v3652
        %v4227 = vpop.f32.mrf.mxu0
        %v4228 = vadd.f32 %v4099, %v4227
        %v4229 = vpop.f32.mrf.mxu0
        %v4230 = vadd.f32 %v4101, %v4229
        %4231 = vmatmul.bf16.gmra.mxu0 %v3654
        %v4232 = vpop.f32.mrf.mxu0
        %v4233 = vadd.f32 %v4104, %v4232
        %v4234 = vpop.f32.mrf.mxu0
        %v4235 = vadd.f32 %v4106, %v4234
        %4236 = vdwg.mxu0
        %v4237 = vrot.slane %v4118, 7
        %v4238 = vrot.slane %v4120, 7
        %v4239 = vrot.slane %v4123, 7
        %v4240 = vrot.slane %v4125, 7
        %v4241 = vrot.slane %v4128, 7
        %v4242 = vrot.slane %v4130, 7
        %v4243 = vrot.slane %v4133, 7
        %v4244 = vrot.slane %v4135, 7
        %v4245 = vrot.slane %v4138, 7
        %v4246 = vrot.slane %v4140, 7
        %v4247 = vrot.slane %v4143, 7
        %v4248 = vrot.slane %v4145, 7
        %v4249 = vrot.slane %v4148, 7
        %v4250 = vrot.slane %v4150, 7
        %v4251 = vrot.slane %v4153, 7
        %v4252 = vrot.slane %v4155, 7
        %v4253 = vrot.slane %v4158, 7
        %v4254 = vrot.slane %v4160, 7
        %v4255 = vrot.slane %v4163, 7
        %v4256 = vrot.slane %v4165, 7
        %v4257 = vrot.slane %v4168, 7
        %v4258 = vrot.slane %v4170, 7
        %v4259 = vrot.slane %v4173, 7
        %v4260 = vrot.slane %v4175, 7
        %v4261 = vrot.slane %v4178, 7
        %v4262 = vrot.slane %v4180, 7
        %v4263 = vrot.slane %v4183, 7
        %v4264 = vrot.slane %v4185, 7
        %v4265 = vrot.slane %v4188, 7
        %v4266 = vrot.slane %v4190, 7
        %v4267 = vrot.slane %v4193, 7
        %v4268 = vrot.slane %v4195, 7
        %v4269 = vrot.slane %v4198, 7
        %v4270 = vrot.slane %v4200, 7
        %v4271 = vrot.slane %v4203, 7
        %v4272 = vrot.slane %v4205, 7
        %v4273 = vrot.slane %v4208, 7
        %v4274 = vrot.slane %v4210, 7
        %v4275 = vrot.slane %v4213, 7
        %v4276 = vrot.slane %v4215, 7
        %v4277 = vrot.slane %v4218, 7
        %v4278 = vrot.slane %v4220, 7
        %v4279 = vrot.slane %v4223, 7
        %v4280 = vrot.slane %v4225, 7
        %v4281 = vrot.slane %v4228, 7
        %v4282 = vrot.slane %v4230, 7
        %v4283 = vrot.slane %v4233, 7
        %v4284 = vrot.slane %v4235, 7
        %vm4285 = vcmp.lt.s32.totalorder %v1615, 1
        %v4286 = vsel %vm4285, %v4282, %v4283
        %v4287 = vsel %vm4285, %v4281, %v4282
        %v4288 = vsel %vm4285, %v4279, %v4280
        %v4289 = vsel %vm4285, %v4278, %v4279
        %v4290 = vsel %vm4285, %v4276, %v4277
        %v4291 = vsel %vm4285, %v4275, %v4276
        %v4292 = vsel %vm4285, %v4273, %v4274
        %v4293 = vsel %vm4285, %v4272, %v4273
        %v4294 = vsel %vm4285, %v4270, %v4271
        %v4295 = vsel %vm4285, %v4269, %v4270
        %v4296 = vsel %vm4285, %v4267, %v4268
        %v4297 = vsel %vm4285, %v4266, %v4267
        %v4298 = vsel %vm4285, %v4264, %v4265
        %v4299 = vsel %vm4285, %v4263, %v4264
        %v4300 = vsel %vm4285, %v4261, %v4262
        %v4301 = vsel %vm4285, %v4260, %v4261
        %v4302 = vsel %vm4285, %v4258, %v4259
        %v4303 = vsel %vm4285, %v4257, %v4258
        %v4304 = vsel %vm4285, %v4255, %v4256
        %v4305 = vsel %vm4285, %v4254, %v4255
        %v4306 = vsel %vm4285, %v4252, %v4253
        %v4307 = vsel %vm4285, %v4251, %v4252
        %v4308 = vsel %vm4285, %v4249, %v4250
        %v4309 = vsel %vm4285, %v4248, %v4249
        %v4310 = vsel %vm4285, %v4246, %v4247
        %v4311 = vsel %vm4285, %v4245, %v4246
        %v4312 = vsel %vm4285, %v4243, %v4244
        %v4313 = vsel %vm4285, %v4242, %v4243
        %v4314 = vsel %vm4285, %v4240, %v4241
        %v4315 = vsel %vm4285, %v4239, %v4240
        %v4316 = vsel %vm4285, %v4237, %v4238
        %v4317 = vsel %vm4285, %v4284, %v4237
        %s4318 = scalar_lea.vmem [#allocation7], 192
        %v4319 = vld [vmem:[%s4318] sm:$0xf]
        %v4320 = vld [vmem:[%s4318 + $0x4] sm:$0xf]
        %v4321 = vld [vmem:[%s4318 + $0x8] sm:$0xf]
        %v4322 = vld [vmem:[%s4318 + $0xc] sm:$0xf]
        %v4323 = vld [vmem:[%s4318 + $0x10] sm:$0xf]
        %v4324 = vld [vmem:[%s4318 + $0x14] sm:$0xf]
        %v4325 = vld [vmem:[%s4318 + $0x18] sm:$0xf]
        %v4326 = vld [vmem:[%s4318 + $0x1c] sm:$0xf]
        %v4327 = vld [vmem:[%s4318 + $0x20] sm:$0xf]
        %v4328 = vld [vmem:[%s4318 + $0x24] sm:$0xf]
        %v4329 = vld [vmem:[%s4318 + $0x28] sm:$0xf]
        %v4330 = vld [vmem:[%s4318 + $0x2c] sm:$0xf]
        %v4331 = vld [vmem:[%s4318 + $0x30] sm:$0xf]
        %v4332 = vld [vmem:[%s4318 + $0x34] sm:$0xf]
        %v4333 = vld [vmem:[%s4318 + $0x38] sm:$0xf]
        %v4334 = vld [vmem:[%s4318 + $0x3c] sm:$0xf]
        %v4335 = vld [vmem:[%s4318 + $0x40] sm:$0xf]
        %v4336 = vld [vmem:[%s4318 + $0x44] sm:$0xf]
        %v4337 = vld [vmem:[%s4318 + $0x48] sm:$0xf]
        %v4338 = vld [vmem:[%s4318 + $0x4c] sm:$0xf]
        %v4339 = vld [vmem:[%s4318 + $0x50] sm:$0xf]
        %v4340 = vld [vmem:[%s4318 + $0x54] sm:$0xf]
        %v4341 = vld [vmem:[%s4318 + $0x58] sm:$0xf]
        %v4342 = vld [vmem:[%s4318 + $0x5c] sm:$0xf]
        %v4343 = vld [vmem:[%s4318 + $0x60] sm:$0xf]
        %v4344 = vld [vmem:[%s4318 + $0x64] sm:$0xf]
        %v4345 = vld [vmem:[%s4318 + $0x68] sm:$0xf]
        %v4346 = vld [vmem:[%s4318 + $0x6c] sm:$0xf]
        %v4347 = vld [vmem:[%s4318 + $0x70] sm:$0xf]
        %v4348 = vld [vmem:[%s4318 + $0x74] sm:$0xf]
        %v4349 = vld [vmem:[%s4318 + $0x78] sm:$0xf]
        %v4350 = vld [vmem:[%s4318 + $0x7c] sm:$0xf]
        %v4351 = vld [vmem:[%s4318 + $0x80] sm:$0xf]
        %v4352 = vld [vmem:[%s4318 + $0x84] sm:$0xf]
        %v4353 = vld [vmem:[%s4318 + $0x88] sm:$0xf]
        %v4354 = vld [vmem:[%s4318 + $0x8c] sm:$0xf]
        %v4355 = vld [vmem:[%s4318 + $0x90] sm:$0xf]
        %v4356 = vld [vmem:[%s4318 + $0x94] sm:$0xf]
        %v4357 = vld [vmem:[%s4318 + $0x98] sm:$0xf]
        %v4358 = vld [vmem:[%s4318 + $0x9c] sm:$0xf]
        %v4359 = vld [vmem:[%s4318 + $0xa0] sm:$0xf]
        %v4360 = vld [vmem:[%s4318 + $0xa4] sm:$0xf]
        %v4361 = vld [vmem:[%s4318 + $0xa8] sm:$0xf]
        %v4362 = vld [vmem:[%s4318 + $0xac] sm:$0xf]
        %v4363 = vld [vmem:[%s4318 + $0xb0] sm:$0xf]
        %v4364 = vld [vmem:[%s4318 + $0xb4] sm:$0xf]
        %v4365 = vld [vmem:[%s4318 + $0xb8] sm:$0xf]
        %v4366 = vld [vmem:[%s4318 + $0xbc] sm:$0xf]
        %v4415 = vunpack.c.l.b16 %v4319
        %v4416 = vunpack.c.l.b16 %v4320
        %v4417 = vunpack.c.l.b16 %v4321
        %v4418 = vunpack.c.l.b16 %v4322
        %v4419 = vunpack.c.l.b16 %v4323
        %v4420 = vunpack.c.l.b16 %v4324
        %v4421 = vunpack.c.l.b16 %v4325
        %v4422 = vunpack.c.l.b16 %v4326
        %v4423 = vunpack.c.l.b16 %v4327
        %v4424 = vunpack.c.l.b16 %v4328
        %v4425 = vunpack.c.l.b16 %v4329
        %v4426 = vunpack.c.l.b16 %v4330
        %v4427 = vunpack.c.l.b16 %v4331
        %v4428 = vunpack.c.l.b16 %v4332
        %v4429 = vunpack.c.l.b16 %v4333
        %v4430 = vunpack.c.l.b16 %v4334
        %v4431 = vunpack.c.l.b16 %v4335
        %v4432 = vunpack.c.l.b16 %v4336
        %v4433 = vunpack.c.l.b16 %v4337
        %v4434 = vunpack.c.l.b16 %v4338
        %v4435 = vunpack.c.l.b16 %v4339
        %v4436 = vunpack.c.l.b16 %v4340
        %v4437 = vunpack.c.l.b16 %v4341
        %v4438 = vunpack.c.l.b16 %v4342
        %v4439 = vunpack.c.l.b16 %v4343
        %v4440 = vunpack.c.l.b16 %v4344
        %v4441 = vunpack.c.l.b16 %v4345
        %v4442 = vunpack.c.l.b16 %v4346
        %v4443 = vunpack.c.l.b16 %v4347
        %v4444 = vunpack.c.l.b16 %v4348
        %v4445 = vunpack.c.l.b16 %v4349
        %v4446 = vunpack.c.l.b16 %v4350
        %v4447 = vunpack.c.l.b16 %v4351
        %v4448 = vunpack.c.l.b16 %v4352
        %v4449 = vunpack.c.l.b16 %v4353
        %v4450 = vunpack.c.l.b16 %v4354
        %v4451 = vunpack.c.l.b16 %v4355
        %v4452 = vunpack.c.l.b16 %v4356
        %v4453 = vunpack.c.l.b16 %v4357
        %v4454 = vunpack.c.l.b16 %v4358
        %v4455 = vunpack.c.l.b16 %v4359
        %v4456 = vunpack.c.l.b16 %v4360
        %v4457 = vunpack.c.l.b16 %v4361
        %v4458 = vunpack.c.l.b16 %v4362
        %v4459 = vunpack.c.l.b16 %v4363
        %v4460 = vunpack.c.l.b16 %v4364
        %v4461 = vunpack.c.l.b16 %v4365
        %v4462 = vunpack.c.l.b16 %v4366
        %v4463 = vpack.c.b16 %v4416, %v4415
        %v4464 = vpack.c.b16 %v4418, %v4417
        %v4465 = vpack.c.b16 %v4420, %v4419
        %v4466 = vpack.c.b16 %v4422, %v4421
        %v4467 = vpack.c.b16 %v4424, %v4423
        %v4468 = vpack.c.b16 %v4426, %v4425
        %v4469 = vpack.c.b16 %v4428, %v4427
        %v4470 = vpack.c.b16 %v4430, %v4429
        %v4471 = vpack.c.b16 %v4432, %v4431
        %v4472 = vpack.c.b16 %v4434, %v4433
        %v4473 = vpack.c.b16 %v4436, %v4435
        %v4474 = vpack.c.b16 %v4438, %v4437
        %v4475 = vpack.c.b16 %v4440, %v4439
        %v4476 = vpack.c.b16 %v4442, %v4441
        %v4477 = vpack.c.b16 %v4444, %v4443
        %v4478 = vpack.c.b16 %v4446, %v4445
        %v4479 = vpack.c.b16 %v4448, %v4447
        %v4480 = vpack.c.b16 %v4450, %v4449
        %v4481 = vpack.c.b16 %v4452, %v4451
        %v4482 = vpack.c.b16 %v4454, %v4453
        %v4483 = vpack.c.b16 %v4456, %v4455
        %v4484 = vpack.c.b16 %v4458, %v4457
        %v4485 = vpack.c.b16 %v4460, %v4459
        %v4486 = vpack.c.b16 %v4462, %v4461
        %4511 = vmatpush.bf16.msra.mxu0 %v4470
        %4512 = vmatpush.bf16.msra.mxu0 %v4469
        %4513 = vmatpush.bf16.msra.mxu0 %v4468
        %4514 = vmatpush.bf16.msra.mxu0 %v4467
        %4515 = vmatpush.bf16.msra.mxu0 %v4466
        %4516 = vmatpush.bf16.msra.mxu0 %v4465
        %4517 = vmatpush.bf16.msra.mxu0 %v4464
        %4518 = vmatpush.bf16.msra.mxu0 %v4463
        %4519 = vmatmul.bf16.gmra.mxu0 %v3604
        %v4520 = vpop.f32.mrf.mxu0
        %v4521 = vadd.f32 0.0, %v4520
        %v4522 = vpop.f32.mrf.mxu0
        %v4523 = vadd.f32 0.0, %v4522
        %4524 = vmatmul.bf16.gmra.mxu0 %v3607
        %v4525 = vpop.f32.mrf.mxu0
        %v4526 = vpop.f32.mrf.mxu0
        %v4527 = vadd.f32 0.0, %v4526
        %4528 = vmatmul.bf16.gmra.mxu0 %v3610
        %v4529 = vpop.f32.mrf.mxu0
        %v4530 = vadd.f32 0.0, %v4529
        %v4531 = vpop.f32.mrf.mxu0
        %4532 = vmatmul.bf16.gmra.mxu0 %v3606
        %v4533 = vpop.f32.mrf.mxu0
        %v4534 = vadd.f32 0.0, %v4533
        %v4535 = vpop.f32.mrf.mxu0
        %v4536 = vadd.f32 0.0, %v4535
        %4537 = vmatmul.bf16.gmra.mxu0 %v3609
        %v4538 = vpop.f32.mrf.mxu0
        %v4539 = vpop.f32.mrf.mxu0
        %v4540 = vadd.f32 0.0, %v4539
        %4541 = vmatmul.bf16.gmra.mxu0 %v3612
        %v4542 = vpop.f32.mrf.mxu0
        %v4543 = vadd.f32 0.0, %v4542
        %v4544 = vpop.f32.mrf.mxu0
        %4545 = vmatmul.bf16.gmra.mxu0 %v3614
        %v4546 = vpop.f32.mrf.mxu0
        %v4547 = vadd.f32 0.0, %v4546
        %v4548 = vpop.f32.mrf.mxu0
        %v4549 = vadd.f32 0.0, %v4548
        %4550 = vmatmul.bf16.gmra.mxu0 %v3616
        %v4551 = vpop.f32.mrf.mxu0
        %v4552 = vpop.f32.mrf.mxu0
        %v4553 = vadd.f32 0.0, %v4552
        %4554 = vmatmul.bf16.gmra.mxu0 %v3618
        %v4555 = vpop.f32.mrf.mxu0
        %v4556 = vadd.f32 0.0, %v4555
        %v4557 = vpop.f32.mrf.mxu0
        %4558 = vmatmul.bf16.gmra.mxu0 %v3620
        %v4559 = vpop.f32.mrf.mxu0
        %v4560 = vadd.f32 0.0, %v4559
        %v4561 = vpop.f32.mrf.mxu0
        %v4562 = vadd.f32 0.0, %v4561
        %4563 = vmatmul.bf16.gmra.mxu0 %v3622
        %v4564 = vpop.f32.mrf.mxu0
        %v4565 = vpop.f32.mrf.mxu0
        %v4566 = vadd.f32 0.0, %v4565
        %4567 = vmatmul.bf16.gmra.mxu0 %v3624
        %v4568 = vpop.f32.mrf.mxu0
        %v4569 = vadd.f32 0.0, %v4568
        %v4570 = vpop.f32.mrf.mxu0
        %4571 = vmatmul.bf16.gmra.mxu0 %v3626
        %v4572 = vpop.f32.mrf.mxu0
        %v4573 = vadd.f32 0.0, %v4572
        %v4574 = vpop.f32.mrf.mxu0
        %v4575 = vadd.f32 0.0, %v4574
        %4576 = vmatmul.bf16.gmra.mxu0 %v3628
        %v4577 = vpop.f32.mrf.mxu0
        %v4578 = vpop.f32.mrf.mxu0
        %v4579 = vadd.f32 0.0, %v4578
        %4580 = vmatmul.bf16.gmra.mxu0 %v3630
        %v4581 = vpop.f32.mrf.mxu0
        %v4582 = vadd.f32 0.0, %v4581
        %v4583 = vpop.f32.mrf.mxu0
        %4584 = vmatmul.bf16.gmra.mxu0 %v3632
        %v4585 = vpop.f32.mrf.mxu0
        %v4586 = vadd.f32 0.0, %v4585
        %v4587 = vpop.f32.mrf.mxu0
        %v4588 = vadd.f32 0.0, %v4587
        %4589 = vmatmul.bf16.gmra.mxu0 %v3634
        %v4590 = vpop.f32.mrf.mxu0
        %v4591 = vpop.f32.mrf.mxu0
        %v4592 = vadd.f32 0.0, %v4591
        %4593 = vmatmul.bf16.gmra.mxu0 %v3636
        %v4594 = vpop.f32.mrf.mxu0
        %v4595 = vadd.f32 0.0, %v4594
        %v4596 = vpop.f32.mrf.mxu0
        %4597 = vmatmul.bf16.gmra.mxu0 %v3638
        %v4598 = vpop.f32.mrf.mxu0
        %v4599 = vadd.f32 0.0, %v4598
        %v4600 = vpop.f32.mrf.mxu0
        %v4601 = vadd.f32 0.0, %v4600
        %4602 = vmatmul.bf16.gmra.mxu0 %v3640
        %v4603 = vpop.f32.mrf.mxu0
        %v4604 = vpop.f32.mrf.mxu0
        %v4605 = vadd.f32 0.0, %v4604
        %4606 = vmatmul.bf16.gmra.mxu0 %v3642
        %v4607 = vpop.f32.mrf.mxu0
        %v4608 = vadd.f32 0.0, %v4607
        %v4609 = vpop.f32.mrf.mxu0
        %4610 = vmatmul.bf16.gmra.mxu0 %v3644
        %v4611 = vpop.f32.mrf.mxu0
        %v4612 = vadd.f32 0.0, %v4611
        %v4613 = vpop.f32.mrf.mxu0
        %v4614 = vadd.f32 0.0, %v4613
        %4615 = vmatmul.bf16.gmra.mxu0 %v3646
        %v4616 = vpop.f32.mrf.mxu0
        %v4617 = vpop.f32.mrf.mxu0
        %v4618 = vadd.f32 0.0, %v4617
        %4619 = vmatmul.bf16.gmra.mxu0 %v3648
        %v4620 = vpop.f32.mrf.mxu0
        %v4621 = vadd.f32 0.0, %v4620
        %v4622 = vpop.f32.mrf.mxu0
        %4623 = vdwg.mxu0
        %4624 = vmatpush.bf16.msra.mxu0 %v4478
        %4625 = vmatpush.bf16.msra.mxu0 %v4477
        %4626 = vmatpush.bf16.msra.mxu0 %v4476
        %4627 = vmatpush.bf16.msra.mxu0 %v4475
        %4628 = vmatpush.bf16.msra.mxu0 %v4474
        %4629 = vmatpush.bf16.msra.mxu0 %v4473
        %4630 = vmatpush.bf16.msra.mxu0 %v4472
        %4631 = vmatpush.bf16.msra.mxu0 %v4471
        %4632 = vmatmul.bf16.gmra.mxu0 %v3605
        %v4633 = vpop.f32.mrf.mxu0
        %v4634 = vadd.f32 %v4521, %v4633
        %v4635 = vpop.f32.mrf.mxu0
        %v4636 = vadd.f32 %v4523, %v4635
        %4637 = vmatmul.bf16.gmra.mxu0 %v3608
        %v4638 = vpop.f32.mrf.mxu0
        %v4639 = vpop.f32.mrf.mxu0
        %v4640 = vadd.f32 %v4527, %v4639
        %4641 = vmatmul.bf16.gmra.mxu0 %v3611
        %v4642 = vpop.f32.mrf.mxu0
        %v4643 = vadd.f32 %v4530, %v4642
        %v4644 = vpop.f32.mrf.mxu0
        %4645 = vmatmul.bf16.gmra.mxu0 %v3613
        %v4646 = vpop.f32.mrf.mxu0
        %v4647 = vadd.f32 %v4534, %v4646
        %v4648 = vpop.f32.mrf.mxu0
        %v4649 = vadd.f32 %v4536, %v4648
        %4650 = vmatmul.bf16.gmra.mxu0 %v3615
        %v4651 = vpop.f32.mrf.mxu0
        %v4652 = vpop.f32.mrf.mxu0
        %v4653 = vadd.f32 %v4540, %v4652
        %4654 = vmatmul.bf16.gmra.mxu0 %v3617
        %v4655 = vpop.f32.mrf.mxu0
        %v4656 = vadd.f32 %v4543, %v4655
        %v4657 = vpop.f32.mrf.mxu0
        %4658 = vmatmul.bf16.gmra.mxu0 %v3619
        %v4659 = vpop.f32.mrf.mxu0
        %v4660 = vadd.f32 %v4547, %v4659
        %v4661 = vpop.f32.mrf.mxu0
        %v4662 = vadd.f32 %v4549, %v4661
        %4663 = vmatmul.bf16.gmra.mxu0 %v3621
        %v4664 = vpop.f32.mrf.mxu0
        %v4665 = vpop.f32.mrf.mxu0
        %v4666 = vadd.f32 %v4553, %v4665
        %4667 = vmatmul.bf16.gmra.mxu0 %v3623
        %v4668 = vpop.f32.mrf.mxu0
        %v4669 = vadd.f32 %v4556, %v4668
        %v4670 = vpop.f32.mrf.mxu0
        %4671 = vmatmul.bf16.gmra.mxu0 %v3625
        %v4672 = vpop.f32.mrf.mxu0
        %v4673 = vadd.f32 %v4560, %v4672
        %v4674 = vpop.f32.mrf.mxu0
        %v4675 = vadd.f32 %v4562, %v4674
        %4676 = vmatmul.bf16.gmra.mxu0 %v3627
        %v4677 = vpop.f32.mrf.mxu0
        %v4678 = vpop.f32.mrf.mxu0
        %v4679 = vadd.f32 %v4566, %v4678
        %4680 = vmatmul.bf16.gmra.mxu0 %v3629
        %v4681 = vpop.f32.mrf.mxu0
        %v4682 = vadd.f32 %v4569, %v4681
        %v4683 = vpop.f32.mrf.mxu0
        %4684 = vmatmul.bf16.gmra.mxu0 %v3631
        %v4685 = vpop.f32.mrf.mxu0
        %v4686 = vadd.f32 %v4573, %v4685
        %v4687 = vpop.f32.mrf.mxu0
        %v4688 = vadd.f32 %v4575, %v4687
        %4689 = vmatmul.bf16.gmra.mxu0 %v3633
        %v4690 = vpop.f32.mrf.mxu0
        %v4691 = vpop.f32.mrf.mxu0
        %v4692 = vadd.f32 %v4579, %v4691
        %4693 = vmatmul.bf16.gmra.mxu0 %v3635
        %v4694 = vpop.f32.mrf.mxu0
        %v4695 = vadd.f32 %v4582, %v4694
        %v4696 = vpop.f32.mrf.mxu0
        %4697 = vmatmul.bf16.gmra.mxu0 %v3637
        %v4698 = vpop.f32.mrf.mxu0
        %v4699 = vadd.f32 %v4586, %v4698
        %v4700 = vpop.f32.mrf.mxu0
        %v4701 = vadd.f32 %v4588, %v4700
        %4702 = vmatmul.bf16.gmra.mxu0 %v3639
        %v4703 = vpop.f32.mrf.mxu0
        %v4704 = vpop.f32.mrf.mxu0
        %v4705 = vadd.f32 %v4592, %v4704
        %4706 = vmatmul.bf16.gmra.mxu0 %v3641
        %v4707 = vpop.f32.mrf.mxu0
        %v4708 = vadd.f32 %v4595, %v4707
        %v4709 = vpop.f32.mrf.mxu0
        %4710 = vmatmul.bf16.gmra.mxu0 %v3643
        %v4711 = vpop.f32.mrf.mxu0
        %v4712 = vadd.f32 %v4599, %v4711
        %v4713 = vpop.f32.mrf.mxu0
        %v4714 = vadd.f32 %v4601, %v4713
        %4715 = vmatmul.bf16.gmra.mxu0 %v3645
        %v4716 = vpop.f32.mrf.mxu0
        %v4717 = vpop.f32.mrf.mxu0
        %v4718 = vadd.f32 %v4605, %v4717
        %4719 = vmatmul.bf16.gmra.mxu0 %v3647
        %v4720 = vpop.f32.mrf.mxu0
        %v4721 = vadd.f32 %v4608, %v4720
        %v4722 = vpop.f32.mrf.mxu0
        %4723 = vmatmul.bf16.gmra.mxu0 %v3649
        %v4724 = vpop.f32.mrf.mxu0
        %v4725 = vadd.f32 %v4612, %v4724
        %v4726 = vpop.f32.mrf.mxu0
        %v4727 = vadd.f32 %v4614, %v4726
        %4728 = vmatmul.bf16.gmra.mxu0 %v3651
        %v4729 = vpop.f32.mrf.mxu0
        %v4730 = vpop.f32.mrf.mxu0
        %v4731 = vadd.f32 %v4618, %v4730
        %4732 = vmatmul.bf16.gmra.mxu0 %v3653
        %v4733 = vpop.f32.mrf.mxu0
        %v4734 = vadd.f32 %v4621, %v4733
        %v4735 = vpop.f32.mrf.mxu0
        %4736 = vdwg.mxu0
        %4737 = vmatpush.bf16.msra.mxu0 %v4486
        %4738 = vmatpush.bf16.msra.mxu0 %v4485
        %4739 = vmatpush.bf16.msra.mxu0 %v4484
        %4740 = vmatpush.bf16.msra.mxu0 %v4483
        %4741 = vmatpush.bf16.msra.mxu0 %v4482
        %4742 = vmatpush.bf16.msra.mxu0 %v4481
        %4743 = vmatpush.bf16.msra.mxu0 %v4480
        %4744 = vmatpush.bf16.msra.mxu0 %v4479
        %4745 = vmatmul.bf16.gmra.mxu0 %v3606
        %v4746 = vpop.f32.mrf.mxu0
        %v4747 = vadd.f32 %v4634, %v4746
        %v4748 = vpop.f32.mrf.mxu0
        %v4749 = vadd.f32 %v4636, %v4748
        %4750 = vmatmul.bf16.gmra.mxu0 %v3609
        %v4751 = vpop.f32.mrf.mxu0
        %v4752 = vpop.f32.mrf.mxu0
        %v4753 = vadd.f32 %v4640, %v4752
        %4754 = vmatmul.bf16.gmra.mxu0 %v3612
        %v4755 = vpop.f32.mrf.mxu0
        %v4756 = vadd.f32 %v4643, %v4755
        %v4757 = vpop.f32.mrf.mxu0
        %4758 = vmatmul.bf16.gmra.mxu0 %v3614
        %v4759 = vpop.f32.mrf.mxu0
        %v4760 = vadd.f32 %v4647, %v4759
        %v4761 = vpop.f32.mrf.mxu0
        %v4762 = vadd.f32 %v4649, %v4761
        %4763 = vmatmul.bf16.gmra.mxu0 %v3616
        %v4764 = vpop.f32.mrf.mxu0
        %v4765 = vpop.f32.mrf.mxu0
        %v4766 = vadd.f32 %v4653, %v4765
        %4767 = vmatmul.bf16.gmra.mxu0 %v3618
        %v4768 = vpop.f32.mrf.mxu0
        %v4769 = vadd.f32 %v4656, %v4768
        %v4770 = vpop.f32.mrf.mxu0
        %4771 = vmatmul.bf16.gmra.mxu0 %v3620
        %v4772 = vpop.f32.mrf.mxu0
        %v4773 = vadd.f32 %v4660, %v4772
        %v4774 = vpop.f32.mrf.mxu0
        %v4775 = vadd.f32 %v4662, %v4774
        %4776 = vmatmul.bf16.gmra.mxu0 %v3622
        %v4777 = vpop.f32.mrf.mxu0
        %v4778 = vpop.f32.mrf.mxu0
        %v4779 = vadd.f32 %v4666, %v4778
        %4780 = vmatmul.bf16.gmra.mxu0 %v3624
        %v4781 = vpop.f32.mrf.mxu0
        %v4782 = vadd.f32 %v4669, %v4781
        %v4783 = vpop.f32.mrf.mxu0
        %4784 = vmatmul.bf16.gmra.mxu0 %v3626
        %v4785 = vpop.f32.mrf.mxu0
        %v4786 = vadd.f32 %v4673, %v4785
        %v4787 = vpop.f32.mrf.mxu0
        %v4788 = vadd.f32 %v4675, %v4787
        %4789 = vmatmul.bf16.gmra.mxu0 %v3628
        %v4790 = vpop.f32.mrf.mxu0
        %v4791 = vpop.f32.mrf.mxu0
        %v4792 = vadd.f32 %v4679, %v4791
        %4793 = vmatmul.bf16.gmra.mxu0 %v3630
        %v4794 = vpop.f32.mrf.mxu0
        %v4795 = vadd.f32 %v4682, %v4794
        %v4796 = vpop.f32.mrf.mxu0
        %4797 = vmatmul.bf16.gmra.mxu0 %v3632
        %v4798 = vpop.f32.mrf.mxu0
        %v4799 = vadd.f32 %v4686, %v4798
        %v4800 = vpop.f32.mrf.mxu0
        %v4801 = vadd.f32 %v4688, %v4800
        %4802 = vmatmul.bf16.gmra.mxu0 %v3634
        %v4803 = vpop.f32.mrf.mxu0
        %v4804 = vpop.f32.mrf.mxu0
        %v4805 = vadd.f32 %v4692, %v4804
        %4806 = vmatmul.bf16.gmra.mxu0 %v3636
        %v4807 = vpop.f32.mrf.mxu0
        %v4808 = vadd.f32 %v4695, %v4807
        %v4809 = vpop.f32.mrf.mxu0
        %4810 = vmatmul.bf16.gmra.mxu0 %v3638
        %v4811 = vpop.f32.mrf.mxu0
        %v4812 = vadd.f32 %v4699, %v4811
        %v4813 = vpop.f32.mrf.mxu0
        %v4814 = vadd.f32 %v4701, %v4813
        %4815 = vmatmul.bf16.gmra.mxu0 %v3640
        %v4816 = vpop.f32.mrf.mxu0
        %v4817 = vpop.f32.mrf.mxu0
        %v4818 = vadd.f32 %v4705, %v4817
        %4819 = vmatmul.bf16.gmra.mxu0 %v3642
        %v4820 = vpop.f32.mrf.mxu0
        %v4821 = vadd.f32 %v4708, %v4820
        %v4822 = vpop.f32.mrf.mxu0
        %4823 = vmatmul.bf16.gmra.mxu0 %v3644
        %v4824 = vpop.f32.mrf.mxu0
        %v4825 = vadd.f32 %v4712, %v4824
        %v4826 = vpop.f32.mrf.mxu0
        %v4827 = vadd.f32 %v4714, %v4826
        %4828 = vmatmul.bf16.gmra.mxu0 %v3646
        %v4829 = vpop.f32.mrf.mxu0
        %v4830 = vpop.f32.mrf.mxu0
        %v4831 = vadd.f32 %v4718, %v4830
        %4832 = vmatmul.bf16.gmra.mxu0 %v3648
        %v4833 = vpop.f32.mrf.mxu0
        %v4834 = vadd.f32 %v4721, %v4833
        %v4835 = vpop.f32.mrf.mxu0
        %4836 = vmatmul.bf16.gmra.mxu0 %v3650
        %v4837 = vpop.f32.mrf.mxu0
        %v4838 = vadd.f32 %v4725, %v4837
        %v4839 = vpop.f32.mrf.mxu0
        %v4840 = vadd.f32 %v4727, %v4839
        %4841 = vmatmul.bf16.gmra.mxu0 %v3652
        %v4842 = vpop.f32.mrf.mxu0
        %v4843 = vpop.f32.mrf.mxu0
        %v4844 = vadd.f32 %v4731, %v4843
        %4845 = vmatmul.bf16.gmra.mxu0 %v3654
        %v4846 = vpop.f32.mrf.mxu0
        %v4847 = vadd.f32 %v4734, %v4846
        %v4848 = vpop.f32.mrf.mxu0
        %4849 = vdwg.mxu0
        %v4850 = vadd.f32 %v4317, %v4747
        %v4851 = vadd.f32 %v4316, %v4749
        %v4852 = vadd.f32 %v4315, %v4753
        %v4853 = vadd.f32 %v4314, %v4756
        %v4854 = vadd.f32 %v4313, %v4760
        %v4855 = vadd.f32 %v4312, %v4762
        %v4856 = vadd.f32 %v4311, %v4766
        %v4857 = vadd.f32 %v4310, %v4769
        %v4858 = vadd.f32 %v4309, %v4773
        %v4859 = vadd.f32 %v4308, %v4775
        %v4860 = vadd.f32 %v4307, %v4779
        %v4861 = vadd.f32 %v4306, %v4782
        %v4862 = vadd.f32 %v4305, %v4786
        %v4863 = vadd.f32 %v4304, %v4788
        %v4864 = vadd.f32 %v4303, %v4792
        %v4865 = vadd.f32 %v4302, %v4795
        %v4866 = vadd.f32 %v4301, %v4799
        %v4867 = vadd.f32 %v4300, %v4801
        %v4868 = vadd.f32 %v4299, %v4805
        %v4869 = vadd.f32 %v4298, %v4808
        %v4870 = vadd.f32 %v4297, %v4812
        %v4871 = vadd.f32 %v4296, %v4814
        %v4872 = vadd.f32 %v4295, %v4818
        %v4873 = vadd.f32 %v4294, %v4821
        %v4874 = vadd.f32 %v4293, %v4825
        %v4875 = vadd.f32 %v4292, %v4827
        %v4876 = vadd.f32 %v4291, %v4831
        %v4877 = vadd.f32 %v4290, %v4834
        %v4878 = vadd.f32 %v4289, %v4838
        %v4879 = vadd.f32 %v4288, %v4840
        %v4880 = vadd.f32 %v4287, %v4844
        %v4881 = vadd.f32 %v4286, %v4847
        %s4882 = scalar_lea.vmem [#allocation7], 384
        %v4883 = vld [vmem:[%s4882] sm:$0xf]
        %v4884 = vld [vmem:[%s4882 + $0x4] sm:$0xf]
        %v4885 = vld [vmem:[%s4882 + $0x8] sm:$0xf]
        %v4886 = vld [vmem:[%s4882 + $0xc] sm:$0xf]
        %v4887 = vld [vmem:[%s4882 + $0x10] sm:$0xf]
        %v4888 = vld [vmem:[%s4882 + $0x14] sm:$0xf]
        %v4889 = vld [vmem:[%s4882 + $0x18] sm:$0xf]
        %v4890 = vld [vmem:[%s4882 + $0x1c] sm:$0xf]
        %v4891 = vld [vmem:[%s4882 + $0x20] sm:$0xf]
        %v4892 = vld [vmem:[%s4882 + $0x24] sm:$0xf]
        %v4893 = vld [vmem:[%s4882 + $0x28] sm:$0xf]
        %v4894 = vld [vmem:[%s4882 + $0x2c] sm:$0xf]
        %v4895 = vld [vmem:[%s4882 + $0x30] sm:$0xf]
        %v4896 = vld [vmem:[%s4882 + $0x34] sm:$0xf]
        %v4897 = vld [vmem:[%s4882 + $0x38] sm:$0xf]
        %v4898 = vld [vmem:[%s4882 + $0x3c] sm:$0xf]
        %v4899 = vld [vmem:[%s4882 + $0x40] sm:$0xf]
        %v4900 = vld [vmem:[%s4882 + $0x44] sm:$0xf]
        %v4901 = vld [vmem:[%s4882 + $0x48] sm:$0xf]
        %v4902 = vld [vmem:[%s4882 + $0x4c] sm:$0xf]
        %v4903 = vld [vmem:[%s4882 + $0x50] sm:$0xf]
        %v4904 = vld [vmem:[%s4882 + $0x54] sm:$0xf]
        %v4905 = vld [vmem:[%s4882 + $0x58] sm:$0xf]
        %v4906 = vld [vmem:[%s4882 + $0x5c] sm:$0xf]
        %v4907 = vld [vmem:[%s4882 + $0x60] sm:$0xf]
        %v4908 = vld [vmem:[%s4882 + $0x64] sm:$0xf]
        %v4909 = vld [vmem:[%s4882 + $0x68] sm:$0xf]
        %v4910 = vld [vmem:[%s4882 + $0x6c] sm:$0xf]
        %v4911 = vld [vmem:[%s4882 + $0x70] sm:$0xf]
        %v4912 = vld [vmem:[%s4882 + $0x74] sm:$0xf]
        %v4913 = vld [vmem:[%s4882 + $0x78] sm:$0xf]
        %v4914 = vld [vmem:[%s4882 + $0x7c] sm:$0xf]
        %v4915 = vld [vmem:[%s4882 + $0x80] sm:$0xf]
        %v4916 = vld [vmem:[%s4882 + $0x84] sm:$0xf]
        %v4917 = vld [vmem:[%s4882 + $0x88] sm:$0xf]
        %v4918 = vld [vmem:[%s4882 + $0x8c] sm:$0xf]
        %v4919 = vld [vmem:[%s4882 + $0x90] sm:$0xf]
        %v4920 = vld [vmem:[%s4882 + $0x94] sm:$0xf]
        %v4921 = vld [vmem:[%s4882 + $0x98] sm:$0xf]
        %v4922 = vld [vmem:[%s4882 + $0x9c] sm:$0xf]
        %v4923 = vld [vmem:[%s4882 + $0xa0] sm:$0xf]
        %v4924 = vld [vmem:[%s4882 + $0xa4] sm:$0xf]
        %v4925 = vld [vmem:[%s4882 + $0xa8] sm:$0xf]
        %v4926 = vld [vmem:[%s4882 + $0xac] sm:$0xf]
        %v4927 = vld [vmem:[%s4882 + $0xb0] sm:$0xf]
        %v4928 = vld [vmem:[%s4882 + $0xb4] sm:$0xf]
        %v4929 = vld [vmem:[%s4882 + $0xb8] sm:$0xf]
        %v4930 = vld [vmem:[%s4882 + $0xbc] sm:$0xf]
        %v4979 = vunpack.c.l.b16 %v4883
        %v4980 = vunpack.c.l.b16 %v4884
        %v4981 = vunpack.c.l.b16 %v4885
        %v4982 = vunpack.c.l.b16 %v4886
        %v4983 = vunpack.c.l.b16 %v4887
        %v4984 = vunpack.c.l.b16 %v4888
        %v4985 = vunpack.c.l.b16 %v4889
        %v4986 = vunpack.c.l.b16 %v4890
        %v4987 = vunpack.c.l.b16 %v4891
        %v4988 = vunpack.c.l.b16 %v4892
        %v4989 = vunpack.c.l.b16 %v4893
        %v4990 = vunpack.c.l.b16 %v4894
        %v4991 = vunpack.c.l.b16 %v4895
        %v4992 = vunpack.c.l.b16 %v4896
        %v4993 = vunpack.c.l.b16 %v4897
        %v4994 = vunpack.c.l.b16 %v4898
        %v4995 = vunpack.c.l.b16 %v4899
        %v4996 = vunpack.c.l.b16 %v4900
        %v4997 = vunpack.c.l.b16 %v4901
        %v4998 = vunpack.c.l.b16 %v4902
        %v4999 = vunpack.c.l.b16 %v4903
        %v5000 = vunpack.c.l.b16 %v4904
        %v5001 = vunpack.c.l.b16 %v4905
        %v5002 = vunpack.c.l.b16 %v4906
        %v5003 = vunpack.c.l.b16 %v4907
        %v5004 = vunpack.c.l.b16 %v4908
        %v5005 = vunpack.c.l.b16 %v4909
        %v5006 = vunpack.c.l.b16 %v4910
        %v5007 = vunpack.c.l.b16 %v4911
        %v5008 = vunpack.c.l.b16 %v4912
        %v5009 = vunpack.c.l.b16 %v4913
        %v5010 = vunpack.c.l.b16 %v4914
        %v5011 = vunpack.c.l.b16 %v4915
        %v5012 = vunpack.c.l.b16 %v4916
        %v5013 = vunpack.c.l.b16 %v4917
        %v5014 = vunpack.c.l.b16 %v4918
        %v5015 = vunpack.c.l.b16 %v4919
        %v5016 = vunpack.c.l.b16 %v4920
        %v5017 = vunpack.c.l.b16 %v4921
        %v5018 = vunpack.c.l.b16 %v4922
        %v5019 = vunpack.c.l.b16 %v4923
        %v5020 = vunpack.c.l.b16 %v4924
        %v5021 = vunpack.c.l.b16 %v4925
        %v5022 = vunpack.c.l.b16 %v4926
        %v5023 = vunpack.c.l.b16 %v4927
        %v5024 = vunpack.c.l.b16 %v4928
        %v5025 = vunpack.c.l.b16 %v4929
        %v5026 = vunpack.c.l.b16 %v4930
        %v5027 = vpack.c.b16 %v4980, %v4979
        %v5028 = vpack.c.b16 %v4982, %v4981
        %v5029 = vpack.c.b16 %v4984, %v4983
        %v5030 = vpack.c.b16 %v4986, %v4985
        %v5031 = vpack.c.b16 %v4988, %v4987
        %v5032 = vpack.c.b16 %v4990, %v4989
        %v5033 = vpack.c.b16 %v4992, %v4991
        %v5034 = vpack.c.b16 %v4994, %v4993
        %v5035 = vpack.c.b16 %v4996, %v4995
        %v5036 = vpack.c.b16 %v4998, %v4997
        %v5037 = vpack.c.b16 %v5000, %v4999
        %v5038 = vpack.c.b16 %v5002, %v5001
        %v5039 = vpack.c.b16 %v5004, %v5003
        %v5040 = vpack.c.b16 %v5006, %v5005
        %v5041 = vpack.c.b16 %v5008, %v5007
        %v5042 = vpack.c.b16 %v5010, %v5009
        %v5043 = vpack.c.b16 %v5012, %v5011
        %v5044 = vpack.c.b16 %v5014, %v5013
        %v5045 = vpack.c.b16 %v5016, %v5015
        %v5046 = vpack.c.b16 %v5018, %v5017
        %v5047 = vpack.c.b16 %v5020, %v5019
        %v5048 = vpack.c.b16 %v5022, %v5021
        %v5049 = vpack.c.b16 %v5024, %v5023
        %v5050 = vpack.c.b16 %v5026, %v5025
        %5075 = vmatpush.bf16.msra.mxu0 %v5034
        %5076 = vmatpush.bf16.msra.mxu0 %v5033
        %5077 = vmatpush.bf16.msra.mxu0 %v5032
        %5078 = vmatpush.bf16.msra.mxu0 %v5031
        %5079 = vmatpush.bf16.msra.mxu0 %v5030
        %5080 = vmatpush.bf16.msra.mxu0 %v5029
        %5081 = vmatpush.bf16.msra.mxu0 %v5028
        %5082 = vmatpush.bf16.msra.mxu0 %v5027
        %5083 = vmatmul.bf16.gmra.mxu0 %v3604
        %v5084 = vpop.f32.mrf.mxu0
        %v5085 = vadd.f32 0.0, %v5084
        %v5086 = vpop.f32.mrf.mxu0
        %v5087 = vadd.f32 0.0, %v5086
        %5088 = vmatmul.bf16.gmra.mxu0 %v3607
        %v5089 = vpop.f32.mrf.mxu0
        %v5090 = vadd.f32 0.0, %v5089
        %v5091 = vpop.f32.mrf.mxu0
        %v5092 = vadd.f32 0.0, %v5091
        %5093 = vmatmul.bf16.gmra.mxu0 %v3610
        %v5094 = vpop.f32.mrf.mxu0
        %v5095 = vadd.f32 0.0, %v5094
        %v5096 = vpop.f32.mrf.mxu0
        %v5097 = vadd.f32 0.0, %v5096
        %5098 = vmatmul.bf16.gmra.mxu0 %v3606
        %v5099 = vpop.f32.mrf.mxu0
        %v5100 = vadd.f32 0.0, %v5099
        %v5101 = vpop.f32.mrf.mxu0
        %v5102 = vadd.f32 0.0, %v5101
        %5103 = vmatmul.bf16.gmra.mxu0 %v3609
        %v5104 = vpop.f32.mrf.mxu0
        %v5105 = vadd.f32 0.0, %v5104
        %v5106 = vpop.f32.mrf.mxu0
        %v5107 = vadd.f32 0.0, %v5106
        %5108 = vmatmul.bf16.gmra.mxu0 %v3612
        %v5109 = vpop.f32.mrf.mxu0
        %v5110 = vadd.f32 0.0, %v5109
        %v5111 = vpop.f32.mrf.mxu0
        %v5112 = vadd.f32 0.0, %v5111
        %5113 = vmatmul.bf16.gmra.mxu0 %v3614
        %v5114 = vpop.f32.mrf.mxu0
        %v5115 = vadd.f32 0.0, %v5114
        %v5116 = vpop.f32.mrf.mxu0
        %v5117 = vadd.f32 0.0, %v5116
        %5118 = vmatmul.bf16.gmra.mxu0 %v3616
        %v5119 = vpop.f32.mrf.mxu0
        %v5120 = vadd.f32 0.0, %v5119
        %v5121 = vpop.f32.mrf.mxu0
        %v5122 = vadd.f32 0.0, %v5121
        %5123 = vmatmul.bf16.gmra.mxu0 %v3618
        %v5124 = vpop.f32.mrf.mxu0
        %v5125 = vadd.f32 0.0, %v5124
        %v5126 = vpop.f32.mrf.mxu0
        %v5127 = vadd.f32 0.0, %v5126
        %5128 = vmatmul.bf16.gmra.mxu0 %v3620
        %v5129 = vpop.f32.mrf.mxu0
        %v5130 = vadd.f32 0.0, %v5129
        %v5131 = vpop.f32.mrf.mxu0
        %v5132 = vadd.f32 0.0, %v5131
        %5133 = vmatmul.bf16.gmra.mxu0 %v3622
        %v5134 = vpop.f32.mrf.mxu0
        %v5135 = vadd.f32 0.0, %v5134
        %v5136 = vpop.f32.mrf.mxu0
        %v5137 = vadd.f32 0.0, %v5136
        %5138 = vmatmul.bf16.gmra.mxu0 %v3624
        %v5139 = vpop.f32.mrf.mxu0
        %v5140 = vadd.f32 0.0, %v5139
        %v5141 = vpop.f32.mrf.mxu0
        %v5142 = vadd.f32 0.0, %v5141
        %5143 = vmatmul.bf16.gmra.mxu0 %v3626
        %v5144 = vpop.f32.mrf.mxu0
        %v5145 = vadd.f32 0.0, %v5144
        %v5146 = vpop.f32.mrf.mxu0
        %v5147 = vadd.f32 0.0, %v5146
        %5148 = vmatmul.bf16.gmra.mxu0 %v3628
        %v5149 = vpop.f32.mrf.mxu0
        %v5150 = vadd.f32 0.0, %v5149
        %v5151 = vpop.f32.mrf.mxu0
        %v5152 = vadd.f32 0.0, %v5151
        %5153 = vmatmul.bf16.gmra.mxu0 %v3630
        %v5154 = vpop.f32.mrf.mxu0
        %v5155 = vadd.f32 0.0, %v5154
        %v5156 = vpop.f32.mrf.mxu0
        %v5157 = vadd.f32 0.0, %v5156
        %5158 = vmatmul.bf16.gmra.mxu0 %v3632
        %v5159 = vpop.f32.mrf.mxu0
        %v5160 = vadd.f32 0.0, %v5159
        %v5161 = vpop.f32.mrf.mxu0
        %v5162 = vadd.f32 0.0, %v5161
        %5163 = vmatmul.bf16.gmra.mxu0 %v3634
        %v5164 = vpop.f32.mrf.mxu0
        %v5165 = vadd.f32 0.0, %v5164
        %v5166 = vpop.f32.mrf.mxu0
        %v5167 = vadd.f32 0.0, %v5166
        %5168 = vmatmul.bf16.gmra.mxu0 %v3636
        %v5169 = vpop.f32.mrf.mxu0
        %v5170 = vadd.f32 0.0, %v5169
        %v5171 = vpop.f32.mrf.mxu0
        %v5172 = vadd.f32 0.0, %v5171
        %5173 = vmatmul.bf16.gmra.mxu0 %v3638
        %v5174 = vpop.f32.mrf.mxu0
        %v5175 = vadd.f32 0.0, %v5174
        %v5176 = vpop.f32.mrf.mxu0
        %v5177 = vadd.f32 0.0, %v5176
        %5178 = vmatmul.bf16.gmra.mxu0 %v3640
        %v5179 = vpop.f32.mrf.mxu0
        %v5180 = vadd.f32 0.0, %v5179
        %v5181 = vpop.f32.mrf.mxu0
        %v5182 = vadd.f32 0.0, %v5181
        %5183 = vmatmul.bf16.gmra.mxu0 %v3642
        %v5184 = vpop.f32.mrf.mxu0
        %v5185 = vadd.f32 0.0, %v5184
        %v5186 = vpop.f32.mrf.mxu0
        %v5187 = vadd.f32 0.0, %v5186
        %5188 = vmatmul.bf16.gmra.mxu0 %v3644
        %v5189 = vpop.f32.mrf.mxu0
        %v5190 = vadd.f32 0.0, %v5189
        %v5191 = vpop.f32.mrf.mxu0
        %v5192 = vadd.f32 0.0, %v5191
        %5193 = vmatmul.bf16.gmra.mxu0 %v3646
        %v5194 = vpop.f32.mrf.mxu0
        %v5195 = vadd.f32 0.0, %v5194
        %v5196 = vpop.f32.mrf.mxu0
        %v5197 = vadd.f32 0.0, %v5196
        %5198 = vmatmul.bf16.gmra.mxu0 %v3648
        %v5199 = vpop.f32.mrf.mxu0
        %v5200 = vadd.f32 0.0, %v5199
        %v5201 = vpop.f32.mrf.mxu0
        %v5202 = vadd.f32 0.0, %v5201
        %5203 = vdwg.mxu0
        %5204 = vmatpush.bf16.msra.mxu0 %v5042
        %5205 = vmatpush.bf16.msra.mxu0 %v5041
        %5206 = vmatpush.bf16.msra.mxu0 %v5040
        %5207 = vmatpush.bf16.msra.mxu0 %v5039
        %5208 = vmatpush.bf16.msra.mxu0 %v5038
        %5209 = vmatpush.bf16.msra.mxu0 %v5037
        %5210 = vmatpush.bf16.msra.mxu0 %v5036
        %5211 = vmatpush.bf16.msra.mxu0 %v5035
        %5212 = vmatmul.bf16.gmra.mxu0 %v3605
        %v5213 = vpop.f32.mrf.mxu0
        %v5214 = vadd.f32 %v5085, %v5213
        %v5215 = vpop.f32.mrf.mxu0
        %v5216 = vadd.f32 %v5087, %v5215
        %5217 = vmatmul.bf16.gmra.mxu0 %v3608
        %v5218 = vpop.f32.mrf.mxu0
        %v5219 = vadd.f32 %v5090, %v5218
        %v5220 = vpop.f32.mrf.mxu0
        %v5221 = vadd.f32 %v5092, %v5220
        %5222 = vmatmul.bf16.gmra.mxu0 %v3611
        %v5223 = vpop.f32.mrf.mxu0
        %v5224 = vadd.f32 %v5095, %v5223
        %v5225 = vpop.f32.mrf.mxu0
        %v5226 = vadd.f32 %v5097, %v5225
        %5227 = vmatmul.bf16.gmra.mxu0 %v3613
        %v5228 = vpop.f32.mrf.mxu0
        %v5229 = vadd.f32 %v5100, %v5228
        %v5230 = vpop.f32.mrf.mxu0
        %v5231 = vadd.f32 %v5102, %v5230
        %5232 = vmatmul.bf16.gmra.mxu0 %v3615
        %v5233 = vpop.f32.mrf.mxu0
        %v5234 = vadd.f32 %v5105, %v5233
        %v5235 = vpop.f32.mrf.mxu0
        %v5236 = vadd.f32 %v5107, %v5235
        %5237 = vmatmul.bf16.gmra.mxu0 %v3617
        %v5238 = vpop.f32.mrf.mxu0
        %v5239 = vadd.f32 %v5110, %v5238
        %v5240 = vpop.f32.mrf.mxu0
        %v5241 = vadd.f32 %v5112, %v5240
        %5242 = vmatmul.bf16.gmra.mxu0 %v3619
        %v5243 = vpop.f32.mrf.mxu0
        %v5244 = vadd.f32 %v5115, %v5243
        %v5245 = vpop.f32.mrf.mxu0
        %v5246 = vadd.f32 %v5117, %v5245
        %5247 = vmatmul.bf16.gmra.mxu0 %v3621
        %v5248 = vpop.f32.mrf.mxu0
        %v5249 = vadd.f32 %v5120, %v5248
        %v5250 = vpop.f32.mrf.mxu0
        %v5251 = vadd.f32 %v5122, %v5250
        %5252 = vmatmul.bf16.gmra.mxu0 %v3623
        %v5253 = vpop.f32.mrf.mxu0
        %v5254 = vadd.f32 %v5125, %v5253
        %v5255 = vpop.f32.mrf.mxu0
        %v5256 = vadd.f32 %v5127, %v5255
        %5257 = vmatmul.bf16.gmra.mxu0 %v3625
        %v5258 = vpop.f32.mrf.mxu0
        %v5259 = vadd.f32 %v5130, %v5258
        %v5260 = vpop.f32.mrf.mxu0
        %v5261 = vadd.f32 %v5132, %v5260
        %5262 = vmatmul.bf16.gmra.mxu0 %v3627
        %v5263 = vpop.f32.mrf.mxu0
        %v5264 = vadd.f32 %v5135, %v5263
        %v5265 = vpop.f32.mrf.mxu0
        %v5266 = vadd.f32 %v5137, %v5265
        %5267 = vmatmul.bf16.gmra.mxu0 %v3629
        %v5268 = vpop.f32.mrf.mxu0
        %v5269 = vadd.f32 %v5140, %v5268
        %v5270 = vpop.f32.mrf.mxu0
        %v5271 = vadd.f32 %v5142, %v5270
        %5272 = vmatmul.bf16.gmra.mxu0 %v3631
        %v5273 = vpop.f32.mrf.mxu0
        %v5274 = vadd.f32 %v5145, %v5273
        %v5275 = vpop.f32.mrf.mxu0
        %v5276 = vadd.f32 %v5147, %v5275
        %5277 = vmatmul.bf16.gmra.mxu0 %v3633
        %v5278 = vpop.f32.mrf.mxu0
        %v5279 = vadd.f32 %v5150, %v5278
        %v5280 = vpop.f32.mrf.mxu0
        %v5281 = vadd.f32 %v5152, %v5280
        %5282 = vmatmul.bf16.gmra.mxu0 %v3635
        %v5283 = vpop.f32.mrf.mxu0
        %v5284 = vadd.f32 %v5155, %v5283
        %v5285 = vpop.f32.mrf.mxu0
        %v5286 = vadd.f32 %v5157, %v5285
        %5287 = vmatmul.bf16.gmra.mxu0 %v3637
        %v5288 = vpop.f32.mrf.mxu0
        %v5289 = vadd.f32 %v5160, %v5288
        %v5290 = vpop.f32.mrf.mxu0
        %v5291 = vadd.f32 %v5162, %v5290
        %5292 = vmatmul.bf16.gmra.mxu0 %v3639
        %v5293 = vpop.f32.mrf.mxu0
        %v5294 = vadd.f32 %v5165, %v5293
        %v5295 = vpop.f32.mrf.mxu0
        %v5296 = vadd.f32 %v5167, %v5295
        %5297 = vmatmul.bf16.gmra.mxu0 %v3641
        %v5298 = vpop.f32.mrf.mxu0
        %v5299 = vadd.f32 %v5170, %v5298
        %v5300 = vpop.f32.mrf.mxu0
        %v5301 = vadd.f32 %v5172, %v5300
        %5302 = vmatmul.bf16.gmra.mxu0 %v3643
        %v5303 = vpop.f32.mrf.mxu0
        %v5304 = vadd.f32 %v5175, %v5303
        %v5305 = vpop.f32.mrf.mxu0
        %v5306 = vadd.f32 %v5177, %v5305
        %5307 = vmatmul.bf16.gmra.mxu0 %v3645
        %v5308 = vpop.f32.mrf.mxu0
        %v5309 = vadd.f32 %v5180, %v5308
        %v5310 = vpop.f32.mrf.mxu0
        %v5311 = vadd.f32 %v5182, %v5310
        %5312 = vmatmul.bf16.gmra.mxu0 %v3647
        %v5313 = vpop.f32.mrf.mxu0
        %v5314 = vadd.f32 %v5185, %v5313
        %v5315 = vpop.f32.mrf.mxu0
        %v5316 = vadd.f32 %v5187, %v5315
        %5317 = vmatmul.bf16.gmra.mxu0 %v3649
        %v5318 = vpop.f32.mrf.mxu0
        %v5319 = vadd.f32 %v5190, %v5318
        %v5320 = vpop.f32.mrf.mxu0
        %v5321 = vadd.f32 %v5192, %v5320
        %5322 = vmatmul.bf16.gmra.mxu0 %v3651
        %v5323 = vpop.f32.mrf.mxu0
        %v5324 = vadd.f32 %v5195, %v5323
        %v5325 = vpop.f32.mrf.mxu0
        %v5326 = vadd.f32 %v5197, %v5325
        %5327 = vmatmul.bf16.gmra.mxu0 %v3653
        %v5328 = vpop.f32.mrf.mxu0
        %v5329 = vadd.f32 %v5200, %v5328
        %v5330 = vpop.f32.mrf.mxu0
        %v5331 = vadd.f32 %v5202, %v5330
        %5332 = vdwg.mxu0
        %5333 = vmatpush.bf16.msra.mxu0 %v5050
        %5334 = vmatpush.bf16.msra.mxu0 %v5049
        %5335 = vmatpush.bf16.msra.mxu0 %v5048
        %5336 = vmatpush.bf16.msra.mxu0 %v5047
        %5337 = vmatpush.bf16.msra.mxu0 %v5046
        %5338 = vmatpush.bf16.msra.mxu0 %v5045
        %5339 = vmatpush.bf16.msra.mxu0 %v5044
        %5340 = vmatpush.bf16.msra.mxu0 %v5043
        %5341 = vmatmul.bf16.gmra.mxu0 %v3606
        %v5342 = vpop.f32.mrf.mxu0
        %v5343 = vadd.f32 %v5214, %v5342
        %v5344 = vpop.f32.mrf.mxu0
        %v5345 = vadd.f32 %v5216, %v5344
        %5346 = vmatmul.bf16.gmra.mxu0 %v3609
        %v5347 = vpop.f32.mrf.mxu0
        %v5348 = vadd.f32 %v5219, %v5347
        %v5349 = vpop.f32.mrf.mxu0
        %v5350 = vadd.f32 %v5221, %v5349
        %5351 = vmatmul.bf16.gmra.mxu0 %v3612
        %v5352 = vpop.f32.mrf.mxu0
        %v5353 = vadd.f32 %v5224, %v5352
        %v5354 = vpop.f32.mrf.mxu0
        %v5355 = vadd.f32 %v5226, %v5354
        %5356 = vmatmul.bf16.gmra.mxu0 %v3614
        %v5357 = vpop.f32.mrf.mxu0
        %v5358 = vadd.f32 %v5229, %v5357
        %v5359 = vpop.f32.mrf.mxu0
        %v5360 = vadd.f32 %v5231, %v5359
        %5361 = vmatmul.bf16.gmra.mxu0 %v3616
        %v5362 = vpop.f32.mrf.mxu0
        %v5363 = vadd.f32 %v5234, %v5362
        %v5364 = vpop.f32.mrf.mxu0
        %v5365 = vadd.f32 %v5236, %v5364
        %5366 = vmatmul.bf16.gmra.mxu0 %v3618
        %v5367 = vpop.f32.mrf.mxu0
        %v5368 = vadd.f32 %v5239, %v5367
        %v5369 = vpop.f32.mrf.mxu0
        %v5370 = vadd.f32 %v5241, %v5369
        %5371 = vmatmul.bf16.gmra.mxu0 %v3620
        %v5372 = vpop.f32.mrf.mxu0
        %v5373 = vadd.f32 %v5244, %v5372
        %v5374 = vpop.f32.mrf.mxu0
        %v5375 = vadd.f32 %v5246, %v5374
        %5376 = vmatmul.bf16.gmra.mxu0 %v3622
        %v5377 = vpop.f32.mrf.mxu0
        %v5378 = vadd.f32 %v5249, %v5377
        %v5379 = vpop.f32.mrf.mxu0
        %v5380 = vadd.f32 %v5251, %v5379
        %5381 = vmatmul.bf16.gmra.mxu0 %v3624
        %v5382 = vpop.f32.mrf.mxu0
        %v5383 = vadd.f32 %v5254, %v5382
        %v5384 = vpop.f32.mrf.mxu0
        %v5385 = vadd.f32 %v5256, %v5384
        %5386 = vmatmul.bf16.gmra.mxu0 %v3626
        %v5387 = vpop.f32.mrf.mxu0
        %v5388 = vadd.f32 %v5259, %v5387
        %v5389 = vpop.f32.mrf.mxu0
        %v5390 = vadd.f32 %v5261, %v5389
        %5391 = vmatmul.bf16.gmra.mxu0 %v3628
        %v5392 = vpop.f32.mrf.mxu0
        %v5393 = vadd.f32 %v5264, %v5392
        %v5394 = vpop.f32.mrf.mxu0
        %v5395 = vadd.f32 %v5266, %v5394
        %5396 = vmatmul.bf16.gmra.mxu0 %v3630
        %v5397 = vpop.f32.mrf.mxu0
        %v5398 = vadd.f32 %v5269, %v5397
        %v5399 = vpop.f32.mrf.mxu0
        %v5400 = vadd.f32 %v5271, %v5399
        %5401 = vmatmul.bf16.gmra.mxu0 %v3632
        %v5402 = vpop.f32.mrf.mxu0
        %v5403 = vadd.f32 %v5274, %v5402
        %v5404 = vpop.f32.mrf.mxu0
        %v5405 = vadd.f32 %v5276, %v5404
        %5406 = vmatmul.bf16.gmra.mxu0 %v3634
        %v5407 = vpop.f32.mrf.mxu0
        %v5408 = vadd.f32 %v5279, %v5407
        %v5409 = vpop.f32.mrf.mxu0
        %v5410 = vadd.f32 %v5281, %v5409
        %5411 = vmatmul.bf16.gmra.mxu0 %v3636
        %v5412 = vpop.f32.mrf.mxu0
        %v5413 = vadd.f32 %v5284, %v5412
        %v5414 = vpop.f32.mrf.mxu0
        %v5415 = vadd.f32 %v5286, %v5414
        %5416 = vmatmul.bf16.gmra.mxu0 %v3638
        %v5417 = vpop.f32.mrf.mxu0
        %v5418 = vadd.f32 %v5289, %v5417
        %v5419 = vpop.f32.mrf.mxu0
        %v5420 = vadd.f32 %v5291, %v5419
        %5421 = vmatmul.bf16.gmra.mxu0 %v3640
        %v5422 = vpop.f32.mrf.mxu0
        %v5423 = vadd.f32 %v5294, %v5422
        %v5424 = vpop.f32.mrf.mxu0
        %v5425 = vadd.f32 %v5296, %v5424
        %5426 = vmatmul.bf16.gmra.mxu0 %v3642
        %v5427 = vpop.f32.mrf.mxu0
        %v5428 = vadd.f32 %v5299, %v5427
        %v5429 = vpop.f32.mrf.mxu0
        %v5430 = vadd.f32 %v5301, %v5429
        %5431 = vmatmul.bf16.gmra.mxu0 %v3644
        %v5432 = vpop.f32.mrf.mxu0
        %v5433 = vadd.f32 %v5304, %v5432
        %v5434 = vpop.f32.mrf.mxu0
        %v5435 = vadd.f32 %v5306, %v5434
        %5436 = vmatmul.bf16.gmra.mxu0 %v3646
        %v5437 = vpop.f32.mrf.mxu0
        %v5438 = vadd.f32 %v5309, %v5437
        %v5439 = vpop.f32.mrf.mxu0
        %v5440 = vadd.f32 %v5311, %v5439
        %5441 = vmatmul.bf16.gmra.mxu0 %v3648
        %v5442 = vpop.f32.mrf.mxu0
        %v5443 = vadd.f32 %v5314, %v5442
        %v5444 = vpop.f32.mrf.mxu0
        %v5445 = vadd.f32 %v5316, %v5444
        %5446 = vmatmul.bf16.gmra.mxu0 %v3650
        %v5447 = vpop.f32.mrf.mxu0
        %v5448 = vadd.f32 %v5319, %v5447
        %v5449 = vpop.f32.mrf.mxu0
        %v5450 = vadd.f32 %v5321, %v5449
        %5451 = vmatmul.bf16.gmra.mxu0 %v3652
        %v5452 = vpop.f32.mrf.mxu0
        %v5453 = vadd.f32 %v5324, %v5452
        %v5454 = vpop.f32.mrf.mxu0
        %v5455 = vadd.f32 %v5326, %v5454
        %5456 = vmatmul.bf16.gmra.mxu0 %v3654
        %v5457 = vpop.f32.mrf.mxu0
        %v5458 = vadd.f32 %v5329, %v5457
        %v5459 = vpop.f32.mrf.mxu0
        %v5460 = vadd.f32 %v5331, %v5459
        %5461 = vdwg.mxu0
        %v5462 = vrot.slane %v5343, 1
        %v5463 = vrot.slane %v5345, 1
        %v5464 = vrot.slane %v5348, 1
        %v5465 = vrot.slane %v5350, 1
        %v5466 = vrot.slane %v5353, 1
        %v5467 = vrot.slane %v5355, 1
        %v5468 = vrot.slane %v5358, 1
        %v5469 = vrot.slane %v5360, 1
        %v5470 = vrot.slane %v5363, 1
        %v5471 = vrot.slane %v5365, 1
        %v5472 = vrot.slane %v5368, 1
        %v5473 = vrot.slane %v5370, 1
        %v5474 = vrot.slane %v5373, 1
        %v5475 = vrot.slane %v5375, 1
        %v5476 = vrot.slane %v5378, 1
        %v5477 = vrot.slane %v5380, 1
        %v5478 = vrot.slane %v5383, 1
        %v5479 = vrot.slane %v5385, 1
        %v5480 = vrot.slane %v5388, 1
        %v5481 = vrot.slane %v5390, 1
        %v5482 = vrot.slane %v5393, 1
        %v5483 = vrot.slane %v5395, 1
        %v5484 = vrot.slane %v5398, 1
        %v5485 = vrot.slane %v5400, 1
        %v5486 = vrot.slane %v5403, 1
        %v5487 = vrot.slane %v5405, 1
        %v5488 = vrot.slane %v5408, 1
        %v5489 = vrot.slane %v5410, 1
        %v5490 = vrot.slane %v5413, 1
        %v5491 = vrot.slane %v5415, 1
        %v5492 = vrot.slane %v5418, 1
        %v5493 = vrot.slane %v5420, 1
        %v5494 = vrot.slane %v5423, 1
        %v5495 = vrot.slane %v5425, 1
        %v5496 = vrot.slane %v5428, 1
        %v5497 = vrot.slane %v5430, 1
        %v5498 = vrot.slane %v5433, 1
        %v5499 = vrot.slane %v5435, 1
        %v5500 = vrot.slane %v5438, 1
        %v5501 = vrot.slane %v5440, 1
        %v5502 = vrot.slane %v5443, 1
        %v5503 = vrot.slane %v5445, 1
        %v5504 = vrot.slane %v5448, 1
        %v5505 = vrot.slane %v5450, 1
        %v5506 = vrot.slane %v5453, 1
        %v5507 = vrot.slane %v5455, 1
        %v5508 = vrot.slane %v5458, 1
        %v5509 = vrot.slane %v5460, 1
        %v5510 = vsel %vm1616, %v5508, %v5509
        %v5511 = vsel %vm1616, %v5507, %v5508
        %v5512 = vsel %vm1616, %v5505, %v5506
        %v5513 = vsel %vm1616, %v5504, %v5505
        %v5514 = vsel %vm1616, %v5502, %v5503
        %v5515 = vsel %vm1616, %v5501, %v5502
        %v5516 = vsel %vm1616, %v5499, %v5500
        %v5517 = vsel %vm1616, %v5498, %v5499
        %v5518 = vsel %vm1616, %v5496, %v5497
        %v5519 = vsel %vm1616, %v5495, %v5496
        %v5520 = vsel %vm1616, %v5493, %v5494
        %v5521 = vsel %vm1616, %v5492, %v5493
        %v5522 = vsel %vm1616, %v5490, %v5491
        %v5523 = vsel %vm1616, %v5489, %v5490
        %v5524 = vsel %vm1616, %v5487, %v5488
        %v5525 = vsel %vm1616, %v5486, %v5487
        %v5526 = vsel %vm1616, %v5484, %v5485
        %v5527 = vsel %vm1616, %v5483, %v5484
        %v5528 = vsel %vm1616, %v5481, %v5482
        %v5529 = vsel %vm1616, %v5480, %v5481
        %v5530 = vsel %vm1616, %v5478, %v5479
        %v5531 = vsel %vm1616, %v5477, %v5478
        %v5532 = vsel %vm1616, %v5475, %v5476
        %v5533 = vsel %vm1616, %v5474, %v5475
        %v5534 = vsel %vm1616, %v5472, %v5473
        %v5535 = vsel %vm1616, %v5471, %v5472
        %v5536 = vsel %vm1616, %v5469, %v5470
        %v5537 = vsel %vm1616, %v5468, %v5469
        %v5538 = vsel %vm1616, %v5466, %v5467
        %v5539 = vsel %vm1616, %v5465, %v5466
        %v5540 = vsel %vm1616, %v5463, %v5464
        %v5541 = vsel %vm1616, %v5462, %v5463
        %v5542 = vadd.f32 %v4850, %v5541
        %v5543 = vadd.f32 %v4851, %v5540
        %v5544 = vadd.f32 %v4852, %v5539
        %v5545 = vadd.f32 %v4853, %v5538
        %v5546 = vadd.f32 %v4854, %v5537
        %v5547 = vadd.f32 %v4855, %v5536
        %v5548 = vadd.f32 %v4856, %v5535
        %v5549 = vadd.f32 %v4857, %v5534
        %v5550 = vadd.f32 %v4858, %v5533
        %v5551 = vadd.f32 %v4859, %v5532
        %v5552 = vadd.f32 %v4860, %v5531
        %v5553 = vadd.f32 %v4861, %v5530
        %v5554 = vadd.f32 %v4862, %v5529
        %v5555 = vadd.f32 %v4863, %v5528
        %v5556 = vadd.f32 %v4864, %v5527
        %v5557 = vadd.f32 %v4865, %v5526
        %v5558 = vadd.f32 %v4866, %v5525
        %v5559 = vadd.f32 %v4867, %v5524
        %v5560 = vadd.f32 %v4868, %v5523
        %v5561 = vadd.f32 %v4869, %v5522
        %v5562 = vadd.f32 %v4870, %v5521
        %v5563 = vadd.f32 %v4871, %v5520
        %v5564 = vadd.f32 %v4872, %v5519
        %v5565 = vadd.f32 %v4873, %v5518
        %v5566 = vadd.f32 %v4874, %v5517
        %v5567 = vadd.f32 %v4875, %v5516
        %v5568 = vadd.f32 %v4876, %v5515
        %v5569 = vadd.f32 %v4877, %v5514
        %v5570 = vadd.f32 %v4878, %v5513
        %v5571 = vadd.f32 %v4879, %v5512
        %v5572 = vadd.f32 %v4880, %v5511
        %v5573 = vadd.f32 %v4881, %v5510
        %v5574 = vunpack.c.l.bf16 %v409
        %v5575 = vunpack.c.l.bf16 %v410
        %v5576 = vunpack.c.l.bf16 %v411
        %v5577 = vunpack.c.l.bf16 %v412
        %v5578 = vunpack.c.l.bf16 %v413
        %v5579 = vunpack.c.l.bf16 %v414
        %v5580 = vunpack.c.l.bf16 %v415
        %v5581 = vunpack.c.l.bf16 %v416
        %v5582 = vunpack.c.l.bf16 %v417
        %v5583 = vunpack.c.l.bf16 %v418
        %v5584 = vunpack.c.l.bf16 %v419
        %v5585 = vunpack.c.l.bf16 %v420
        %v5586 = vunpack.c.l.bf16 %v421
        %v5587 = vunpack.c.l.bf16 %v422
        %v5588 = vunpack.c.l.bf16 %v423
        %v5589 = vunpack.c.l.bf16 %v424
        %v5590 = vunpack.c.l.bf16 %v425
        %v5591 = vunpack.c.l.bf16 %v426
        %v5592 = vunpack.c.l.bf16 %v427
        %v5593 = vunpack.c.l.bf16 %v428
        %v5594 = vunpack.c.l.bf16 %v429
        %v5595 = vunpack.c.l.bf16 %v430
        %v5596 = vunpack.c.l.bf16 %v431
        %v5597 = vunpack.c.l.bf16 %v432
        %v5598 = vunpack.c.l.bf16 %v433
        %v5599 = vunpack.c.l.bf16 %v434
        %v5600 = vunpack.c.l.bf16 %v435
        %v5601 = vunpack.c.l.bf16 %v436
        %v5602 = vunpack.c.l.bf16 %v437
        %v5603 = vunpack.c.l.bf16 %v438
        %v5604 = vunpack.c.l.bf16 %v439
        %v5605 = vunpack.c.l.bf16 %v440
        %v5606 = vunpack.c.l.bf16 %v441
        %v5607 = vunpack.c.l.bf16 %v442
        %v5608 = vunpack.c.l.bf16 %v443
        %v5609 = vunpack.c.l.bf16 %v444
        %v5610 = vunpack.c.l.bf16 %v445
        %v5611 = vunpack.c.l.bf16 %v446
        %v5612 = vunpack.c.l.bf16 %v447
        %v5613 = vunpack.c.l.bf16 %v448
        %v5614 = vunpack.c.l.bf16 %v449
        %v5615 = vunpack.c.l.bf16 %v450
        %v5616 = vunpack.c.l.bf16 %v451
        %v5617 = vunpack.c.l.bf16 %v452
        %v5618 = vunpack.c.l.bf16 %v453
        %v5619 = vunpack.c.l.bf16 %v454
        %v5620 = vunpack.c.l.bf16 %v455
        %v5621 = vunpack.c.l.bf16 %v456
        %v5622 = vrot.slane %v5574, 1
        %v5623 = vrot.slane %v5575, 1
        %v5624 = vrot.slane %v5576, 1
        %v5625 = vrot.slane %v5577, 1
        %v5626 = vrot.slane %v5578, 1
        %v5627 = vrot.slane %v5579, 1
        %v5628 = vrot.slane %v5580, 1
        %v5629 = vrot.slane %v5581, 1
        %v5630 = vrot.slane %v5582, 1
        %v5631 = vrot.slane %v5583, 1
        %v5632 = vrot.slane %v5584, 1
        %v5633 = vrot.slane %v5585, 1
        %v5634 = vrot.slane %v5586, 1
        %v5635 = vrot.slane %v5587, 1
        %v5636 = vrot.slane %v5588, 1
        %v5637 = vrot.slane %v5589, 1
        %v5638 = vrot.slane %v5590, 1
        %v5639 = vrot.slane %v5591, 1
        %v5640 = vrot.slane %v5592, 1
        %v5641 = vrot.slane %v5593, 1
        %v5642 = vrot.slane %v5594, 1
        %v5643 = vrot.slane %v5595, 1
        %v5644 = vrot.slane %v5596, 1
        %v5645 = vrot.slane %v5597, 1
        %v5646 = vrot.slane %v5598, 1
        %v5647 = vrot.slane %v5599, 1
        %v5648 = vrot.slane %v5600, 1
        %v5649 = vrot.slane %v5601, 1
        %v5650 = vrot.slane %v5602, 1
        %v5651 = vrot.slane %v5603, 1
        %v5652 = vrot.slane %v5604, 1
        %v5653 = vrot.slane %v5605, 1
        %v5654 = vrot.slane %v5606, 1
        %v5655 = vrot.slane %v5607, 1
        %v5656 = vrot.slane %v5608, 1
        %v5657 = vrot.slane %v5609, 1
        %v5658 = vrot.slane %v5610, 1
        %v5659 = vrot.slane %v5611, 1
        %v5660 = vrot.slane %v5612, 1
        %v5661 = vrot.slane %v5613, 1
        %v5662 = vrot.slane %v5614, 1
        %v5663 = vrot.slane %v5615, 1
        %v5664 = vrot.slane %v5616, 1
        %v5665 = vrot.slane %v5617, 1
        %v5666 = vrot.slane %v5618, 1
        %v5667 = vrot.slane %v5619, 1
        %v5668 = vrot.slane %v5620, 1
        %v5669 = vrot.slane %v5621, 1
        %v5670 = vsel %vm1616, %v5668, %v5669
        %v5671 = vsel %vm1616, %v5667, %v5668
        %v5672 = vsel %vm1616, %v5665, %v5666
        %v5673 = vsel %vm1616, %v5664, %v5665
        %v5674 = vsel %vm1616, %v5662, %v5663
        %v5675 = vsel %vm1616, %v5661, %v5662
        %v5676 = vsel %vm1616, %v5659, %v5660
        %v5677 = vsel %vm1616, %v5658, %v5659
        %v5678 = vsel %vm1616, %v5656, %v5657
        %v5679 = vsel %vm1616, %v5655, %v5656
        %v5680 = vsel %vm1616, %v5653, %v5654
        %v5681 = vsel %vm1616, %v5652, %v5653
        %v5682 = vsel %vm1616, %v5650, %v5651
        %v5683 = vsel %vm1616, %v5649, %v5650
        %v5684 = vsel %vm1616, %v5647, %v5648
        %v5685 = vsel %vm1616, %v5646, %v5647
        %v5686 = vsel %vm1616, %v5644, %v5645
        %v5687 = vsel %vm1616, %v5643, %v5644
        %v5688 = vsel %vm1616, %v5641, %v5642
        %v5689 = vsel %vm1616, %v5640, %v5641
        %v5690 = vsel %vm1616, %v5638, %v5639
        %v5691 = vsel %vm1616, %v5637, %v5638
        %v5692 = vsel %vm1616, %v5635, %v5636
        %v5693 = vsel %vm1616, %v5634, %v5635
        %v5694 = vsel %vm1616, %v5632, %v5633
        %v5695 = vsel %vm1616, %v5631, %v5632
        %v5696 = vsel %vm1616, %v5629, %v5630
        %v5697 = vsel %vm1616, %v5628, %v5629
        %v5698 = vsel %vm1616, %v5626, %v5627
        %v5699 = vsel %vm1616, %v5625, %v5626
        %v5700 = vsel %vm1616, %v5623, %v5624
        %v5701 = vsel %vm1616, %v5622, %v5623
        %v5702 = vld [vmem:[%s5] sm:$0x1]
        %v5704 = vperm.slane %v5702, 0
        %v5706 = vmul.f32 %v5542, %v5704
        %v5707 = vmul.f32 %v5543, %v5704
        %v5708 = vmul.f32 %v5544, %v5704
        %v5709 = vmul.f32 %v5545, %v5704
        %v5710 = vmul.f32 %v5546, %v5704
        %v5711 = vmul.f32 %v5547, %v5704
        %v5712 = vmul.f32 %v5548, %v5704
        %v5713 = vmul.f32 %v5549, %v5704
        %v5714 = vmul.f32 %v5550, %v5704
        %v5715 = vmul.f32 %v5551, %v5704
        %v5716 = vmul.f32 %v5552, %v5704
        %v5717 = vmul.f32 %v5553, %v5704
        %v5718 = vmul.f32 %v5554, %v5704
        %v5719 = vmul.f32 %v5555, %v5704
        %v5720 = vmul.f32 %v5556, %v5704
        %v5721 = vmul.f32 %v5557, %v5704
        %v5722 = vmul.f32 %v5558, %v5704
        %v5723 = vmul.f32 %v5559, %v5704
        %v5724 = vmul.f32 %v5560, %v5704
        %v5725 = vmul.f32 %v5561, %v5704
        %v5726 = vmul.f32 %v5562, %v5704
        %v5727 = vmul.f32 %v5563, %v5704
        %v5728 = vmul.f32 %v5564, %v5704
        %v5729 = vmul.f32 %v5565, %v5704
        %v5730 = vmul.f32 %v5566, %v5704
        %v5731 = vmul.f32 %v5567, %v5704
        %v5732 = vmul.f32 %v5568, %v5704
        %v5733 = vmul.f32 %v5569, %v5704
        %v5734 = vmul.f32 %v5570, %v5704
        %v5735 = vmul.f32 %v5571, %v5704
        %v5736 = vmul.f32 %v5572, %v5704
        %v5737 = vmul.f32 %v5573, %v5704
        %v5738 = vld [vmem:[%s6] sm:$0x1]
        %v5740 = vperm.slane %v5738, 0
        %v5742 = vadd.f32 %v5706, %v5740
        %v5743 = vadd.f32 %v5707, %v5740
        %v5744 = vadd.f32 %v5708, %v5740
        %v5745 = vadd.f32 %v5709, %v5740
        %v5746 = vadd.f32 %v5710, %v5740
        %v5747 = vadd.f32 %v5711, %v5740
        %v5748 = vadd.f32 %v5712, %v5740
        %v5749 = vadd.f32 %v5713, %v5740
        %v5750 = vadd.f32 %v5714, %v5740
        %v5751 = vadd.f32 %v5715, %v5740
        %v5752 = vadd.f32 %v5716, %v5740
        %v5753 = vadd.f32 %v5717, %v5740
        %v5754 = vadd.f32 %v5718, %v5740
        %v5755 = vadd.f32 %v5719, %v5740
        %v5756 = vadd.f32 %v5720, %v5740
        %v5757 = vadd.f32 %v5721, %v5740
        %v5758 = vadd.f32 %v5722, %v5740
        %v5759 = vadd.f32 %v5723, %v5740
        %v5760 = vadd.f32 %v5724, %v5740
        %v5761 = vadd.f32 %v5725, %v5740
        %v5762 = vadd.f32 %v5726, %v5740
        %v5763 = vadd.f32 %v5727, %v5740
        %v5764 = vadd.f32 %v5728, %v5740
        %v5765 = vadd.f32 %v5729, %v5740
        %v5766 = vadd.f32 %v5730, %v5740
        %v5767 = vadd.f32 %v5731, %v5740
        %v5768 = vadd.f32 %v5732, %v5740
        %v5769 = vadd.f32 %v5733, %v5740
        %v5770 = vadd.f32 %v5734, %v5740
        %v5771 = vadd.f32 %v5735, %v5740
        %v5772 = vadd.f32 %v5736, %v5740
        %v5773 = vadd.f32 %v5737, %v5740
        %v5774 = vadd.f32 %v5742, %v5701
        %v5775 = vadd.f32 %v5743, %v5700
        %v5776 = vadd.f32 %v5744, %v5699
        %v5777 = vadd.f32 %v5745, %v5698
        %v5778 = vadd.f32 %v5746, %v5697
        %v5779 = vadd.f32 %v5747, %v5696
        %v5780 = vadd.f32 %v5748, %v5695
        %v5781 = vadd.f32 %v5749, %v5694
        %v5782 = vadd.f32 %v5750, %v5693
        %v5783 = vadd.f32 %v5751, %v5692
        %v5784 = vadd.f32 %v5752, %v5691
        %v5785 = vadd.f32 %v5753, %v5690
        %v5786 = vadd.f32 %v5754, %v5689
        %v5787 = vadd.f32 %v5755, %v5688
        %v5788 = vadd.f32 %v5756, %v5687
        %v5789 = vadd.f32 %v5757, %v5686
        %v5790 = vadd.f32 %v5758, %v5685
        %v5791 = vadd.f32 %v5759, %v5684
        %v5792 = vadd.f32 %v5760, %v5683
        %v5793 = vadd.f32 %v5761, %v5682
        %v5794 = vadd.f32 %v5762, %v5681
        %v5795 = vadd.f32 %v5763, %v5680
        %v5796 = vadd.f32 %v5764, %v5679
        %v5797 = vadd.f32 %v5765, %v5678
        %v5798 = vadd.f32 %v5766, %v5677
        %v5799 = vadd.f32 %v5767, %v5676
        %v5800 = vadd.f32 %v5768, %v5675
        %v5801 = vadd.f32 %v5769, %v5674
        %v5802 = vadd.f32 %v5770, %v5673
        %v5803 = vadd.f32 %v5771, %v5672
        %v5804 = vadd.f32 %v5772, %v5671
        %v5805 = vadd.f32 %v5773, %v5670
        %v5806 = vmax.f32 %v5774, 0.0
        %v5807 = vmax.f32 %v5775, 0.0
        %v5808 = vmax.f32 %v5776, 0.0
        %v5809 = vmax.f32 %v5777, 0.0
        %v5810 = vmax.f32 %v5778, 0.0
        %v5811 = vmax.f32 %v5779, 0.0
        %v5812 = vmax.f32 %v5780, 0.0
        %v5813 = vmax.f32 %v5781, 0.0
        %v5814 = vmax.f32 %v5782, 0.0
        %v5815 = vmax.f32 %v5783, 0.0
        %v5816 = vmax.f32 %v5784, 0.0
        %v5817 = vmax.f32 %v5785, 0.0
        %v5818 = vmax.f32 %v5786, 0.0
        %v5819 = vmax.f32 %v5787, 0.0
        %v5820 = vmax.f32 %v5788, 0.0
        %v5821 = vmax.f32 %v5789, 0.0
        %v5822 = vmax.f32 %v5790, 0.0
        %v5823 = vmax.f32 %v5791, 0.0
        %v5824 = vmax.f32 %v5792, 0.0
        %v5825 = vmax.f32 %v5793, 0.0
        %v5826 = vmax.f32 %v5794, 0.0
        %v5827 = vmax.f32 %v5795, 0.0
        %v5828 = vmax.f32 %v5796, 0.0
        %v5829 = vmax.f32 %v5797, 0.0
        %v5830 = vmax.f32 %v5798, 0.0
        %v5831 = vmax.f32 %v5799, 0.0
        %v5832 = vmax.f32 %v5800, 0.0
        %v5833 = vmax.f32 %v5801, 0.0
        %v5834 = vmax.f32 %v5802, 0.0
        %v5835 = vmax.f32 %v5803, 0.0
        %v5836 = vmax.f32 %v5804, 0.0
        %v5837 = vmax.f32 %v5805, 0.0
        %v5838 = vpack.c.bf16 %v5806, %v5806
        %v5839 = vpack.c.bf16 %v5807, %v5807
        %v5840 = vpack.c.bf16 %v5808, %v5808
        %v5841 = vpack.c.bf16 %v5809, %v5809
        %v5842 = vpack.c.bf16 %v5810, %v5810
        %v5843 = vpack.c.bf16 %v5811, %v5811
        %v5844 = vpack.c.bf16 %v5812, %v5812
        %v5845 = vpack.c.bf16 %v5813, %v5813
        %v5846 = vpack.c.bf16 %v5814, %v5814
        %v5847 = vpack.c.bf16 %v5815, %v5815
        %v5848 = vpack.c.bf16 %v5816, %v5816
        %v5849 = vpack.c.bf16 %v5817, %v5817
        %v5850 = vpack.c.bf16 %v5818, %v5818
        %v5851 = vpack.c.bf16 %v5819, %v5819
        %v5852 = vpack.c.bf16 %v5820, %v5820
        %v5853 = vpack.c.bf16 %v5821, %v5821
        %v5854 = vpack.c.bf16 %v5822, %v5822
        %v5855 = vpack.c.bf16 %v5823, %v5823
        %v5856 = vpack.c.bf16 %v5824, %v5824
        %v5857 = vpack.c.bf16 %v5825, %v5825
        %v5858 = vpack.c.bf16 %v5826, %v5826
        %v5859 = vpack.c.bf16 %v5827, %v5827
        %v5860 = vpack.c.bf16 %v5828, %v5828
        %v5861 = vpack.c.bf16 %v5829, %v5829
        %v5862 = vpack.c.bf16 %v5830, %v5830
        %v5863 = vpack.c.bf16 %v5831, %v5831
        %v5864 = vpack.c.bf16 %v5832, %v5832
        %v5865 = vpack.c.bf16 %v5833, %v5833
        %v5866 = vpack.c.bf16 %v5834, %v5834
        %v5867 = vpack.c.bf16 %v5835, %v5835
        %v5868 = vpack.c.bf16 %v5836, %v5836
        %v5869 = vpack.c.bf16 %v5837, %v5837
        %5870 = vst [vmem:[%s358] sm:$0xf] %v5838
        %5871 = vst [vmem:[%s358 + $0x4] sm:$0xf] %v5839
        %5872 = vst [vmem:[%s358 + $0x8] sm:$0xf] %v5840
        %5873 = vst [vmem:[%s358 + $0xc] sm:$0xf] %v5841
        %5874 = vst [vmem:[%s358 + $0x10] sm:$0xf] %v5842
        %5875 = vst [vmem:[%s358 + $0x14] sm:$0xf] %v5843
        %5876 = vst [vmem:[%s358 + $0x18] sm:$0xf] %v5844
        %5877 = vst [vmem:[%s358 + $0x1c] sm:$0xf] %v5845
        %5878 = vst [vmem:[%s358 + $0x20] sm:$0xf] %v5846
        %5879 = vst [vmem:[%s358 + $0x24] sm:$0xf] %v5847
        %5880 = vst [vmem:[%s358 + $0x28] sm:$0xf] %v5848
        %5881 = vst [vmem:[%s358 + $0x2c] sm:$0xf] %v5849
        %5882 = vst [vmem:[%s358 + $0x30] sm:$0xf] %v5850
        %5883 = vst [vmem:[%s358 + $0x34] sm:$0xf] %v5851
        %5884 = vst [vmem:[%s358 + $0x38] sm:$0xf] %v5852
        %5885 = vst [vmem:[%s358 + $0x3c] sm:$0xf] %v5853
        %5886 = vst [vmem:[%s358 + $0x40] sm:$0xf] %v5854
        %5887 = vst [vmem:[%s358 + $0x44] sm:$0xf] %v5855
        %5888 = vst [vmem:[%s358 + $0x48] sm:$0xf] %v5856
        %5889 = vst [vmem:[%s358 + $0x4c] sm:$0xf] %v5857
        %5890 = vst [vmem:[%s358 + $0x50] sm:$0xf] %v5858
        %5891 = vst [vmem:[%s358 + $0x54] sm:$0xf] %v5859
        %5892 = vst [vmem:[%s358 + $0x58] sm:$0xf] %v5860
        %5893 = vst [vmem:[%s358 + $0x5c] sm:$0xf] %v5861
        %5894 = vst [vmem:[%s358 + $0x60] sm:$0xf] %v5862
        %5895 = vst [vmem:[%s358 + $0x64] sm:$0xf] %v5863
        %5896 = vst [vmem:[%s358 + $0x68] sm:$0xf] %v5864
        %5897 = vst [vmem:[%s358 + $0x6c] sm:$0xf] %v5865
        %5898 = vst [vmem:[%s358 + $0x70] sm:$0xf] %v5866
        %5899 = vst [vmem:[%s358 + $0x74] sm:$0xf] %v5867
        %5900 = vst [vmem:[%s358 + $0x78] sm:$0xf] %v5868
        %5901 = vst [vmem:[%s358 + $0x7c] sm:$0xf] %v5869
        %s5902 = sand.u32 %s207, 1
        %s5903 = scalar_lea.sflag [#allocation4], %s5902
        %s5904 = sand.u32 %s207, 1
        %s5905 = smul.addr %s5904, 128
        %s5906 = scalar_lea.vmem [#allocation8], %s5905
        // Predicated region
        $region65: #{tpu_custom_call.1} parent=51 // pred_check
          %p5907 = pneg %p217
        $region66: #{tpu_custom_call.1} parent=51 // pred_check_branch
          %5909 = sbr.rel (%p5907) target = $region68
        $region67: #{tpu_custom_call.1} parent=51 // pred_region
          %5911 = vsyncadd %s5903, 0
          %s5912 = smul.addr %s26, 32
          %s5913 = smul.addr %s5912, 4
          %s5914 = scalar_lea.hbm %s8, %s5913
          %s5915 = sshll.u32 %s5906, 4
          %s5916 = int_to_ptr.vmem [resolvable:$true] %s5915
          %s5917 = sshll.u32 %s5914, 4
          %s5918 = int_to_ptr.hbm [resolvable:$true] %s5917
          %5923 = dma.vmem_to_hbm [thread:$0]  %s5916, 2048, %s5918, %s5903, 64, 64, 4
        $region68: #{tpu_custom_call.1} parent=51 // pred_fallthru
          _
      $region52: #{tpu_custom_call.1} parent=5 // pred_fallthru
        _
      %p5924 = scmp.le.s32.totalorder 2, %s21
      // Predicated region
      $region69: #{tpu_custom_call.1} parent=5 // pred_check
        %p5925 = pneg %p5924
      $region70: #{tpu_custom_call.1} parent=5 // pred_check_branch
        %5927 = sbr.rel (%p5925) target = $region72
      $region71: #{tpu_custom_call.1} parent=5 // pred_region
        %s5928 = ssub.s32 %s21, 2
        // Predicated region
        $region73: #{tpu_custom_call.1} parent=71 // pred_check
          %p5929 = pneg %p223
        $region74: #{tpu_custom_call.1} parent=71 // pred_check_branch
          %5931 = sbr.rel (%p5929) target = $region76
        $region75: #{tpu_custom_call.1} parent=71 // pred_region
          %s5932 = sand.u32 %s208, 1
          %s5933 = scalar_lea.sflag [#allocation4], %s5932
          %s5934 = sand.u32 %s208, 1
          %s5935 = smul.addr %s5934, 128
          %s5936 = scalar_lea.vmem [#allocation8], %s5935
          %5938 = dma.done %s5933, 2048
        $region76: #{tpu_custom_call.1} parent=71 // pred_fallthru
          _
      $region72: #{tpu_custom_call.1} parent=5 // pred_fallthru
        _
    $region6: #{tpu_custom_call.1} parent=1 // loop_footer
      %s25 = sadd.s32 1, %s21
    $region7: #{tpu_custom_call.1} parent=1 // loop_footer_branch
      %20 = sbr.rel target = $region3
    $region8: #{tpu_custom_call.1} parent=1 // loop_exit
      _
    %5939 = vsyncpa [#allocation3], 1
    %s5940 = scalar_lea.sflag [#allocation3], 1
    %5941 = vsyncpa %s5940, 1
    %5942 = vsyncpa [#allocation6], 1
    %5943 = vsyncpa [#allocation4], 1
    %s5944 = scalar_lea.sflag [#allocation4], 1
    %5945 = vsyncpa %s5944, 1

</llo_original>
